<compile_context>
chip_gen: v7x
topology: tpu7x:2x2x1
jax: 0.10.0
libtpu: 0.0.40
codegen_flags: <defaults>
</compile_context>

<pallas_src>
import functools

import jax
import jax.numpy as jnp
from jax.experimental import pallas as pl
from jax.experimental.pallas import tpu as pltpu

EPS = 1e-5

_CPARAMS = pltpu.CompilerParams(
    dimension_semantics=("arbitrary",),
    vmem_limit_bytes=48 * 1024 * 1024,
)


# ----------------------------------------------------------------------------
# Pallas kernels
# ----------------------------------------------------------------------------
def _conv_bn_pool_relu_kernel(w_ref, p_ref, o_ref):
    # w_ref: (OC, K) bf16 conv weights
    # p_ref: (4, K, M) bf16 im2col patches, pool 2x2 sub-position on leading axis
    # o_ref: (OC, M) f32 = relu(avgpool2x2(batchnorm(conv(x)))), cols (n, h, w)
    w = w_ref[...]
    # lane-dense matmuls: output columns = M (big) on the 128-lane axis
    ys = [jnp.dot(w, p_ref[b], preferred_element_type=jnp.float32) for b in range(4)]
    tot = ys[0] + ys[1] + ys[2] + ys[3]
    # BatchNorm2d(affine=False), train mode: per-channel stats over all 4*M values
    mean = jnp.mean(tot, axis=1, keepdims=True) * 0.25
    var = (jnp.mean((ys[0] - mean) ** 2, axis=1, keepdims=True) +
           jnp.mean((ys[1] - mean) ** 2, axis=1, keepdims=True) +
           jnp.mean((ys[2] - mean) ** 2, axis=1, keepdims=True) +
           jnp.mean((ys[3] - mean) ** 2, axis=1, keepdims=True)) * 0.25
    # avgpool(bn(y)) == bn(avgpool(y)) since BN is a per-channel affine map
    o_ref[...] = jnp.maximum((tot * 0.25 - mean) * jax.lax.rsqrt(var + EPS), 0.0)


def _conv2_heads_kernel(p_ref, wc_ref, w1_ref, b1_ref, w2_ref, b2_ref,
                        w3_ref, b3_ref, o_ref, a2_scr, feat_scr):
    # p_ref:  (4, M2, K2) bf16 conv2 patches, pool groups on leading axis,
    #         rows within a group ordered (ph, pw, n)
    # wc_ref: (K2, 16) bf16 conv2 weights
    # w1_ref: (256, 120*H) bf16 packed first layers, b1_ref (1, 120*H) f32
    # w2_ref: (120*H, 84*H) bf16 block-diagonal, b2_ref (1, 84*H) f32
    # w3_ref: (84*H, 128) bf16 block-diagonal zero-padded, b3_ref (1, 128) f32
    # o_ref:  (N, 128) f32 single lane-dense output slab
    n = o_ref.shape[0]

    # ---- conv2 + BN2 + avgpool2 + ReLU ----
    wc = wc_ref[...]
    ys = [jnp.dot(p_ref[b], wc, preferred_element_type=jnp.float32) for b in range(4)]
    tot = ys[0] + ys[1] + ys[2] + ys[3]                      # (M2, 16)
    mean = jnp.mean(tot, axis=0, keepdims=True) * 0.25
    var = (jnp.mean((ys[0] - mean) ** 2, axis=0, keepdims=True) +
           jnp.mean((ys[1] - mean) ** 2, axis=0, keepdims=True) +
           jnp.mean((ys[2] - mean) ** 2, axis=0, keepdims=True) +
           jnp.mean((ys[3] - mean) ** 2, axis=0, keepdims=True)) * 0.25
    a2_scr[...] = jnp.maximum((tot * 0.25 - mean) * jax.lax.rsqrt(var + EPS), 0.0)

    # ---- flatten to (N, 256) features, order (h, w, c); weights pre-permuted ----
    groups = a2_scr.shape[0] // n            # 16 spatial positions
    ch = a2_scr.shape[1]                     # 16 channels
    for g in range(groups):                  # static unroll: 16 small VMEM copies
        feat_scr[:, g * ch:(g + 1) * ch] = a2_scr[g * n:(g + 1) * n, :]
    feat = feat_scr[...].astype(jnp.bfloat16)

    # ---- all MLP heads as 3 packed GEMMs (block-diagonal layers 2/3) ----
    h1 = jnp.maximum(
        jnp.dot(feat, w1_ref[...], preferred_element_type=jnp.float32) + b1_ref[...],
        0.0)
    h2 = jnp.maximum(
        jnp.dot(h1.astype(jnp.bfloat16), w2_ref[...],
                preferred_element_type=jnp.float32) + b2_ref[...],
        0.0)
    # single unmasked 128-lane output store
    o_ref[...] = jnp.dot(h2.astype(jnp.bfloat16), w3_ref[...],
                         preferred_element_type=jnp.float32) + b3_ref[...]


# ----------------------------------------------------------------------------
# pallas_call wrappers
# ----------------------------------------------------------------------------
def conv1_stage(p1, w1m):
    oc = w1m.shape[0]
    m = p1.shape[2]
    return pl.pallas_call(
        _conv_bn_pool_relu_kernel,
        grid=(1,),
        in_specs=[pl.BlockSpec(w1m.shape, lambda i: (0, 0)),
                  pl.BlockSpec(p1.shape, lambda i: (0, 0, 0))],
        out_specs=pl.BlockSpec((oc, m), lambda i: (0, 0)),
        out_shape=jax.ShapeDtypeStruct((oc, m), jnp.float32),
        compiler_params=_CPARAMS,
    )(w1m, p1)


def conv2_heads_stage(p2, wc, w1p, b1p, w2bd, b2p, w3bd, b3p, n):
    args = (p2, wc, w1p, b1p, w2bd, b2p, w3bd, b3p)
    in_specs = [pl.BlockSpec(a.shape, lambda i, nd=a.ndim: (0,) * nd) for a in args]
    m2 = p2.shape[1]
    out_cols = w3bd.shape[1]
    return pl.pallas_call(
        _conv2_heads_kernel,
        grid=(1,),
        in_specs=in_specs,
        out_specs=pl.BlockSpec((n, out_cols), lambda i: (0, 0)),
        out_shape=jax.ShapeDtypeStruct((n, out_cols), jnp.float32),
        scratch_shapes=[pltpu.VMEM((m2, wc.shape[1]), jnp.float32),   # pooled conv2
                        pltpu.VMEM((n, w1p.shape[0]), jnp.float32)],  # flat features
        compiler_params=_CPARAMS,
    )(*args)


# ----------------------------------------------------------------------------
# Plain-JAX glue (im2col / parameter packing)
# ----------------------------------------------------------------------------
def _im2col_cols(x_nhwc, k):
    # returns list of (N, OH, OW) slices in (c, kh, kw) order (PyTorch flatten order)
    n, h, w, c = x_nhwc.shape
    oh, ow = h - k + 1, w - k + 1
    cols = []
    for ci in range(c):
        for kh in range(k):
            for kw in range(k):
                cols.append(x_nhwc[:, kh:kh + oh, kw:kw + ow, ci])
    return cols, oh, ow


def conv_pool_patches_T(x_nhwc, k):
    # Patches for the (OC, K) @ (K, M) conv matmul (K on sublanes, M on lanes),
    # grouped by 2x2 pool sub-position: (4, K, N*PH*PW); cols ordered (n, ph, pw).
    n = x_nhwc.shape[0]
    cols, oh, ow = _im2col_cols(x_nhwc, k)
    ph, pw = oh // 2, ow // 2
    kdim = len(cols)
    p = jnp.stack(cols, axis=0)                    # (K, N, OH, OW)
    p = p.reshape(kdim, n, ph, 2, pw, 2)           # (K, N, PH, sh, PW, sw)
    p = p.transpose(3, 5, 0, 1, 2, 4)              # (sh, sw, K, N, PH, PW)
    return p.reshape(4, kdim, n * ph * pw)


def conv_pool_patches_rows(x_nhwc, k):
    # Patches for the (M, K) @ (K, OC) conv matmul, grouped by pool sub-position:
    # (4, PH*PW*N, K); rows within a group ordered (ph, pw, n).
    n = x_nhwc.shape[0]
    cols, oh, ow = _im2col_cols(x_nhwc, k)
    ph, pw = oh // 2, ow // 2
    kdim = len(cols)
    p = jnp.stack(cols, axis=-1)                   # (N, OH, OW, K)
    p = p.reshape(n, ph, 2, pw, 2, kdim)           # (N, PH, sh, PW, sw, K)
    p = p.transpose(2, 4, 1, 3, 0, 5)              # (sh, sw, PH, PW, N, K)
    return p.reshape(4, ph * pw * n, kdim)


def permute_first_linear(w):
    # torch flatten of (N,16,4,4) is (c,h,w); our features are (h,w,c) ordered.
    out = w.shape[0]
    return w.reshape(out, 16, 4, 4).transpose(0, 2, 3, 1).reshape(out, 256)


def pack_head_params(p):
    # head order: [linear1-3 (out_res), seq1 (weight_expert), experts 0..E-1 (coeff)]
    heads_l1 = [p["linear1"], p["seq1"][0]] + [e[0] for e in p["seq2"]]
    heads_l2 = [p["linear2"], p["seq1"][1]] + [e[1] for e in p["seq2"]]
    heads_l3 = [p["linear3"], p["seq1"][2]] + [e[2] for e in p["seq2"]]

    # layer 1: every head consumes the same 256-d feature -> one wide matmul
    w1p = jnp.concatenate([permute_first_linear(w).T for w, _ in heads_l1], axis=1)
    b1p = jnp.concatenate([b for _, b in heads_l1])[None, :]
    # layers 2/3: per-head 120->84 and 84->out -> block-diagonal packed matmuls
    w2bd = jax.scipy.linalg.block_diag(*[w.T for w, _ in heads_l2])
    b2p = jnp.concatenate([b for _, b in heads_l2])[None, :]
    w3bd = jax.scipy.linalg.block_diag(*[w.T for w, _ in heads_l3])
    b3p = jnp.concatenate([b for _, b in heads_l3])[None, :]

    out_total = w3bd.shape[1]                         # num_class + E + E*num_basis
    out_pad = max(128, pl.cdiv(out_total, 128) * 128) # lane-dense output slab width
    w3bd = jnp.pad(w3bd, ((0, 0), (0, out_pad - out_total)))
    b3p = jnp.pad(b3p, ((0, 0), (0, out_pad - out_total)))

    return (w1p.astype(jnp.bfloat16), b1p.astype(jnp.float32),
            w2bd.astype(jnp.bfloat16), b2p.astype(jnp.float32),
            w3bd.astype(jnp.bfloat16), b3p.astype(jnp.float32), out_total)


def init_params(key, num_class, num_experts, num_basis, in_channel=1):
    keys = iter(jax.random.split(key, 64))

    def conv(oc, ic, k):
        bound = 1.0 / jnp.sqrt(ic * k * k)
        return jax.random.uniform(next(keys), (oc, ic, k, k), jnp.float32, -bound, bound)

    def lin(fi, fo):
        bound = 1.0 / jnp.sqrt(fi)
        w = jax.random.uniform(next(keys), (fo, fi), jnp.float32, -bound, bound)
        b = jax.random.uniform(next(keys), (fo,), jnp.float32, -bound, bound)
        return w, b

    p = {"conv1": conv(6, in_channel, 5), "conv2": conv(16, 6, 5)}
    p["linear1"] = lin(256, 120)
    p["linear2"] = lin(120, 84)
    p["linear3"] = lin(84, num_class)
    p["seq1"] = [lin(256, 120), lin(120, 84), lin(84, num_experts)]
    p["seq2"] = [[lin(256, 120), lin(120, 84), lin(84, num_basis)]
                 for _ in range(num_experts)]
    return p


# ----------------------------------------------------------------------------
# Forward pass
# ----------------------------------------------------------------------------
@functools.partial(jax.jit, static_argnums=(2, 3, 4))
def lenet5_ours_forward(x_nchw, params, num_class, num_experts, num_basis):
    n = x_nchw.shape[0]
    x = jnp.transpose(x_nchw, (0, 2, 3, 1)).astype(jnp.float32)  # NCHW -> NHWC

    # --- stage 1: conv1 + bn1 + avgpool2 + relu (Pallas kernel, lane-dense) ---
    p1 = conv_pool_patches_T(x, 5).astype(jnp.bfloat16)          # (4, 25, n*144)
    w1m = params["conv1"].reshape(6, -1).astype(jnp.bfloat16)    # (6, 25)
    a1 = conv1_stage(p1, w1m)                                    # (6, n*144) f32

    # --- glue: conv2 im2col (XLA) --- TODO(synk): move into the fused kernel.
    a1_img = jnp.transpose(a1.reshape(6, n, 12, 12), (1, 2, 3, 0))   # (n,12,12,6)
    p2 = conv_pool_patches_rows(a1_img, 5).astype(jnp.bfloat16)      # (4, n*16, 150)
    w2m = params["conv2"].reshape(16, -1).T.astype(jnp.bfloat16)     # (150, 16)

    w1p, b1p, w2bd, b2p, w3bd, b3p, out_total = pack_head_params(params)

    # --- stage 2: conv2 + bn2 + pool2 + relu + ALL heads, one fused kernel ---
    slab = conv2_heads_stage(p2, w2m, w1p, b1p, w2bd, b2p, w3bd, b3p, n)  # (n, 128)

    out_res = slab[:, :num_class]
    weight_expert = slab[:, num_class:num_class + num_experts]
    coeff = slab[:, num_class + num_experts:out_total].reshape(
        n, num_experts, num_basis)                               # stack(dim=1)
    return out_res, coeff, weight_expert


if __name__ == "__main__":
    num_class, num_experts, num_basis = 10, 3, 4
    key = jax.random.PRNGKey(0)
    kx, kp = jax.random.split(key)
    # batch=2, MNIST-style 1x28x28 (required so that flatten is 4*4*16 = 256)
    x = jax.random.normal(kx, (2, 1, 28, 28), jnp.float32)
    params = init_params(kp, num_class, num_experts, num_basis, in_channel=1)

    out_res, coeff, weight_expert = lenet5_ours_forward(
        x, params, num_class, num_experts, num_basis)
    jax.block_until_ready((out_res, coeff, weight_expert))

    assert out_res.shape == (2, num_class)
    assert coeff.shape == (2, num_experts, num_basis)
    assert weight_expert.shape == (2, num_experts)
    assert bool(jnp.all(jnp.isfinite(out_res)))
    assert bool(jnp.all(jnp.isfinite(coeff)))
    assert bool(jnp.all(jnp.isfinite(weight_expert)))
    print("KERNEL_OK")
</pallas_src>

<mosaic_0001>
module attributes {stable_mosaic.version = 11 : i64} {
  func.func @_conv_bn_pool_relu_kernel(%arg0: i32, %arg1: memref<6x25xbf16, #tpu.memory_space<vmem>>, %arg2: memref<4x25x288xbf16, #tpu.memory_space<vmem>>, %arg3: memref<6x288xf32, #tpu.memory_space<vmem>>) attributes {dimension_semantics = [#tpu.dimension_semantics<arbitrary>], iteration_bounds = array<i64: 1>, scalar_prefetch = 0 : i64, scratch_operands = 0 : i64, tpu.core_type = #tpu.core_type<tc>, window_params = [{pipeline_mode = #tpu.pipeline_mode<synchronous>, transform_indices = @transform_0, window_bounds = array<i64: 6, 25>}, {pipeline_mode = #tpu.pipeline_mode<synchronous>, transform_indices = @transform_1, window_bounds = array<i64: 4, 25, 288>}, {pipeline_mode = #tpu.pipeline_mode<synchronous>, transform_indices = @transform_2, window_bounds = array<i64: 6, 288>}]} {
    %c0 = arith.constant 0 : index
    %c0_0 = arith.constant 0 : index
    %0 = vector.load %arg1[%c0, %c0_0] : memref<6x25xbf16, #tpu.memory_space<vmem>>, vector<6x25xbf16>
    %c0_1 = arith.constant 0 : index
    %c0_2 = arith.constant 0 : index
    %c0_3 = arith.constant 0 : index
    %1 = vector.load %arg2[%c0_1, %c0_2, %c0_3] : memref<4x25x288xbf16, #tpu.memory_space<vmem>>, vector<1x25x288xbf16>
    %2 = vector.shape_cast %1 : vector<1x25x288xbf16> to vector<25x288xbf16>
    %cst = arith.constant dense<0.000000e+00> : vector<6x288xf32>
    %3 = tpu.matmul %0, %2, %cst {dimension_numbers = #tpu.dot_dimension_numbers<[1], [0], [0], [1], [0, 0, 1, 1], [], []>} : vector<6x25xbf16>, vector<25x288xbf16>, vector<6x288xf32> -> vector<6x288xf32>
    %c1 = arith.constant 1 : index
    %c0_4 = arith.constant 0 : index
    %c0_5 = arith.constant 0 : index
    %4 = vector.load %arg2[%c1, %c0_4, %c0_5] : memref<4x25x288xbf16, #tpu.memory_space<vmem>>, vector<1x25x288xbf16>
    %5 = vector.shape_cast %4 : vector<1x25x288xbf16> to vector<25x288xbf16>
    %cst_6 = arith.constant dense<0.000000e+00> : vector<6x288xf32>
    %6 = tpu.matmul %0, %5, %cst_6 {dimension_numbers = #tpu.dot_dimension_numbers<[1], [0], [0], [1], [0, 0, 1, 1], [], []>} : vector<6x25xbf16>, vector<25x288xbf16>, vector<6x288xf32> -> vector<6x288xf32>
    %c2 = arith.constant 2 : index
    %c0_7 = arith.constant 0 : index
    %c0_8 = arith.constant 0 : index
    %7 = vector.load %arg2[%c2, %c0_7, %c0_8] : memref<4x25x288xbf16, #tpu.memory_space<vmem>>, vector<1x25x288xbf16>
    %8 = vector.shape_cast %7 : vector<1x25x288xbf16> to vector<25x288xbf16>
    %cst_9 = arith.constant dense<0.000000e+00> : vector<6x288xf32>
    %9 = tpu.matmul %0, %8, %cst_9 {dimension_numbers = #tpu.dot_dimension_numbers<[1], [0], [0], [1], [0, 0, 1, 1], [], []>} : vector<6x25xbf16>, vector<25x288xbf16>, vector<6x288xf32> -> vector<6x288xf32>
    %c3 = arith.constant 3 : index
    %c0_10 = arith.constant 0 : index
    %c0_11 = arith.constant 0 : index
    %10 = vector.load %arg2[%c3, %c0_10, %c0_11] : memref<4x25x288xbf16, #tpu.memory_space<vmem>>, vector<1x25x288xbf16>
    %11 = vector.shape_cast %10 : vector<1x25x288xbf16> to vector<25x288xbf16>
    %cst_12 = arith.constant dense<0.000000e+00> : vector<6x288xf32>
    %12 = tpu.matmul %0, %11, %cst_12 {dimension_numbers = #tpu.dot_dimension_numbers<[1], [0], [0], [1], [0, 0, 1, 1], [], []>} : vector<6x25xbf16>, vector<25x288xbf16>, vector<6x288xf32> -> vector<6x288xf32>
    %13 = arith.addf %3, %6 : vector<6x288xf32>
    %14 = arith.addf %13, %9 : vector<6x288xf32>
    %15 = arith.addf %14, %12 : vector<6x288xf32>
    %cst_13 = arith.constant dense<0.000000e+00> : vector<6xf32>
    %16 = vector.multi_reduction <add>, %15, %cst_13 [1] : vector<6x288xf32> to vector<6xf32>
    %17 = vector.shape_cast %16 : vector<6xf32> to vector<6x1xf32>
    %cst_14 = arith.constant 2.880000e+02 : f32
    %18 = vector.broadcast %cst_14 : f32 to vector<6x1xf32>
    %19 = arith.divf %17, %18 : vector<6x1xf32>
    %cst_15 = arith.constant 2.500000e-01 : f32
    %20 = vector.broadcast %cst_15 : f32 to vector<6x1xf32>
    %21 = arith.mulf %19, %20 : vector<6x1xf32>
    %22 = vector.broadcast %21 : vector<6x1xf32> to vector<6x288xf32>
    %23 = arith.subf %3, %22 : vector<6x288xf32>
    %24 = arith.mulf %23, %23 : vector<6x288xf32>
    %cst_16 = arith.constant dense<0.000000e+00> : vector<6xf32>
    %25 = vector.multi_reduction <add>, %24, %cst_16 [1] : vector<6x288xf32> to vector<6xf32>
    %26 = vector.shape_cast %25 : vector<6xf32> to vector<6x1xf32>
    %cst_17 = arith.constant 2.880000e+02 : f32
    %27 = vector.broadcast %cst_17 : f32 to vector<6x1xf32>
    %28 = arith.divf %26, %27 : vector<6x1xf32>
    %29 = vector.broadcast %21 : vector<6x1xf32> to vector<6x288xf32>
    %30 = arith.subf %6, %29 : vector<6x288xf32>
    %31 = arith.mulf %30, %30 : vector<6x288xf32>
    %cst_18 = arith.constant dense<0.000000e+00> : vector<6xf32>
    %32 = vector.multi_reduction <add>, %31, %cst_18 [1] : vector<6x288xf32> to vector<6xf32>
    %33 = vector.shape_cast %32 : vector<6xf32> to vector<6x1xf32>
    %cst_19 = arith.constant 2.880000e+02 : f32
    %34 = vector.broadcast %cst_19 : f32 to vector<6x1xf32>
    %35 = arith.divf %33, %34 : vector<6x1xf32>
    %36 = arith.addf %28, %35 : vector<6x1xf32>
    %37 = vector.broadcast %21 : vector<6x1xf32> to vector<6x288xf32>
    %38 = arith.subf %9, %37 : vector<6x288xf32>
    %39 = arith.mulf %38, %38 : vector<6x288xf32>
    %cst_20 = arith.constant dense<0.000000e+00> : vector<6xf32>
    %40 = vector.multi_reduction <add>, %39, %cst_20 [1] : vector<6x288xf32> to vector<6xf32>
    %41 = vector.shape_cast %40 : vector<6xf32> to vector<6x1xf32>
    %cst_21 = arith.constant 2.880000e+02 : f32
    %42 = vector.broadcast %cst_21 : f32 to vector<6x1xf32>
    %43 = arith.divf %41, %42 : vector<6x1xf32>
    %44 = arith.addf %36, %43 : vector<6x1xf32>
    %45 = vector.broadcast %21 : vector<6x1xf32> to vector<6x288xf32>
    %46 = arith.subf %12, %45 : vector<6x288xf32>
    %47 = arith.mulf %46, %46 : vector<6x288xf32>
    %cst_22 = arith.constant dense<0.000000e+00> : vector<6xf32>
    %48 = vector.multi_reduction <add>, %47, %cst_22 [1] : vector<6x288xf32> to vector<6xf32>
    %49 = vector.shape_cast %48 : vector<6xf32> to vector<6x1xf32>
    %cst_23 = arith.constant 2.880000e+02 : f32
    %50 = vector.broadcast %cst_23 : f32 to vector<6x1xf32>
    %51 = arith.divf %49, %50 : vector<6x1xf32>
    %52 = arith.addf %44, %51 : vector<6x1xf32>
    %cst_24 = arith.constant 2.500000e-01 : f32
    %53 = vector.broadcast %cst_24 : f32 to vector<6x1xf32>
    %54 = arith.mulf %52, %53 : vector<6x1xf32>
    %cst_25 = arith.constant 2.500000e-01 : f32
    %55 = vector.broadcast %cst_25 : f32 to vector<6x288xf32>
    %56 = arith.mulf %15, %55 : vector<6x288xf32>
    %57 = vector.broadcast %21 : vector<6x1xf32> to vector<6x288xf32>
    %58 = arith.subf %56, %57 : vector<6x288xf32>
    %cst_26 = arith.constant 9.99999974E-6 : f32
    %59 = vector.broadcast %cst_26 : f32 to vector<6x1xf32>
    %60 = arith.addf %54, %59 : vector<6x1xf32>
    %61 = math.rsqrt %60 : vector<6x1xf32>
    %62 = vector.broadcast %61 : vector<6x1xf32> to vector<6x288xf32>
    %63 = arith.mulf %58, %62 : vector<6x288xf32>
    %cst_27 = arith.constant 0.000000e+00 : f32
    %64 = vector.broadcast %cst_27 : f32 to vector<6x288xf32>
    %65 = arith.maximumf %63, %64 : vector<6x288xf32>
    %c0_28 = arith.constant 0 : index
    %c0_29 = arith.constant 0 : index
    %66 = vector.load %arg3[%c0_28, %c0_29] : memref<6x288xf32, #tpu.memory_space<vmem>>, vector<6x288xf32>
    tpu.vector_store %arg3[%c0_28, %c0_29], %65 {strides = array<i32>} : memref<6x288xf32, #tpu.memory_space<vmem>>, vector<6x288xf32>,
    return
  }
  func.func @transform_0(%arg0: i32) -> (i32, i32) {
    %c0_i32 = arith.constant 0 : i32
    %c0_i32_0 = arith.constant 0 : i32
    %c0_i32_1 = arith.constant 0 : i32
    return %c0_i32, %c0_i32_0 : i32, i32
  }
  func.func @transform_1(%arg0: i32) -> (i32, i32, i32) {
    %c0_i32 = arith.constant 0 : i32
    %c0_i32_0 = arith.constant 0 : i32
    %c0_i32_1 = arith.constant 0 : i32
    %c0_i32_2 = arith.constant 0 : i32
    return %c0_i32, %c0_i32_0, %c0_i32_1 : i32, i32, i32
  }
  func.func @transform_2(%arg0: i32) -> (i32, i32) {
    %c0_i32 = arith.constant 0 : i32
    %c0_i32_0 = arith.constant 0 : i32
    %c0_i32_1 = arith.constant 0 : i32
    return %c0_i32, %c0_i32_0 : i32, i32
  }
}

module attributes {stable_mosaic.version = 11 : i64} {
  func.func @_conv2_heads_kernel(%arg0: i32, %arg1: memref<4x32x150xbf16, #tpu.memory_space<vmem>>, %arg2: memref<150x16xbf16, #tpu.memory_space<vmem>>, %arg3: memref<256x600xbf16, #tpu.memory_space<vmem>>, %arg4: memref<1x600xf32, #tpu.memory_space<vmem>>, %arg5: memref<600x420xbf16, #tpu.memory_space<vmem>>, %arg6: memref<1x420xf32, #tpu.memory_space<vmem>>, %arg7: memref<420x128xbf16, #tpu.memory_space<vmem>>, %arg8: memref<1x128xf32, #tpu.memory_space<vmem>>, %arg9: memref<2x128xf32, #tpu.memory_space<vmem>>, %arg10: memref<32x16xf32, #tpu.memory_space<vmem>>, %arg11: memref<2x256xf32, #tpu.memory_space<vmem>>) attributes {dimension_semantics = [#tpu.dimension_semantics<arbitrary>], iteration_bounds = array<i64: 1>, scalar_prefetch = 0 : i64, scratch_operands = 2 : i64, tpu.core_type = #tpu.core_type<tc>, window_params = [{pipeline_mode = #tpu.pipeline_mode<synchronous>, transform_indices = @transform_0, window_bounds = array<i64: 4, 32, 150>}, {pipeline_mode = #tpu.pipeline_mode<synchronous>, transform_indices = @transform_1, window_bounds = array<i64: 150, 16>}, {pipeline_mode = #tpu.pipeline_mode<synchronous>, transform_indices = @transform_2, window_bounds = array<i64: 256, 600>}, {pipeline_mode = #tpu.pipeline_mode<synchronous>, transform_indices = @transform_3, window_bounds = array<i64: 1, 600>}, {pipeline_mode = #tpu.pipeline_mode<synchronous>, transform_indices = @transform_4, window_bounds = array<i64: 600, 420>}, {pipeline_mode = #tpu.pipeline_mode<synchronous>, transform_indices = @transform_5, window_bounds = array<i64: 1, 420>}, {pipeline_mode = #tpu.pipeline_mode<synchronous>, transform_indices = @transform_6, window_bounds = array<i64: 420, 128>}, {pipeline_mode = #tpu.pipeline_mode<synchronous>, transform_indices = @transform_7, window_bounds = array<i64: 1, 128>}, {pipeline_mode = #tpu.pipeline_mode<synchronous>, transform_indices = @transform_8, window_bounds = array<i64: 2, 128>}]} {
    %c0 = arith.constant 0 : index
    %c0_0 = arith.constant 0 : index
    %0 = vector.load %arg2[%c0, %c0_0] : memref<150x16xbf16, #tpu.memory_space<vmem>>, vector<150x16xbf16>
    %c0_1 = arith.constant 0 : index
    %c0_2 = arith.constant 0 : index
    %c0_3 = arith.constant 0 : index
    %1 = vector.load %arg1[%c0_1, %c0_2, %c0_3] : memref<4x32x150xbf16, #tpu.memory_space<vmem>>, vector<1x32x150xbf16>
    %2 = vector.shape_cast %1 : vector<1x32x150xbf16> to vector<32x150xbf16>
    %cst = arith.constant dense<0.000000e+00> : vector<32x16xf32>
    %3 = tpu.matmul %2, %0, %cst {dimension_numbers = #tpu.dot_dimension_numbers<[1], [0], [0], [1], [0, 0, 1, 1], [], []>} : vector<32x150xbf16>, vector<150x16xbf16>, vector<32x16xf32> -> vector<32x16xf32>
    %c1 = arith.constant 1 : index
    %c0_4 = arith.constant 0 : index
    %c0_5 = arith.constant 0 : index
    %4 = vector.load %arg1[%c1, %c0_4, %c0_5] : memref<4x32x150xbf16, #tpu.memory_space<vmem>>, vector<1x32x150xbf16>
    %5 = vector.shape_cast %4 : vector<1x32x150xbf16> to vector<32x150xbf16>
    %cst_6 = arith.constant dense<0.000000e+00> : vector<32x16xf32>
    %6 = tpu.matmul %5, %0, %cst_6 {dimension_numbers = #tpu.dot_dimension_numbers<[1], [0], [0], [1], [0, 0, 1, 1], [], []>} : vector<32x150xbf16>, vector<150x16xbf16>, vector<32x16xf32> -> vector<32x16xf32>
    %c2 = arith.constant 2 : index
    %c0_7 = arith.constant 0 : index
    %c0_8 = arith.constant 0 : index
    %7 = vector.load %arg1[%c2, %c0_7, %c0_8] : memref<4x32x150xbf16, #tpu.memory_space<vmem>>, vector<1x32x150xbf16>
    %8 = vector.shape_cast %7 : vector<1x32x150xbf16> to vector<32x150xbf16>
    %cst_9 = arith.constant dense<0.000000e+00> : vector<32x16xf32>
    %9 = tpu.matmul %8, %0, %cst_9 {dimension_numbers = #tpu.dot_dimension_numbers<[1], [0], [0], [1], [0, 0, 1, 1], [], []>} : vector<32x150xbf16>, vector<150x16xbf16>, vector<32x16xf32> -> vector<32x16xf32>
    %c3 = arith.constant 3 : index
    %c0_10 = arith.constant 0 : index
    %c0_11 = arith.constant 0 : index
    %10 = vector.load %arg1[%c3, %c0_10, %c0_11] : memref<4x32x150xbf16, #tpu.memory_space<vmem>>, vector<1x32x150xbf16>
    %11 = vector.shape_cast %10 : vector<1x32x150xbf16> to vector<32x150xbf16>
    %cst_12 = arith.constant dense<0.000000e+00> : vector<32x16xf32>
    %12 = tpu.matmul %11, %0, %cst_12 {dimension_numbers = #tpu.dot_dimension_numbers<[1], [0], [0], [1], [0, 0, 1, 1], [], []>} : vector<32x150xbf16>, vector<150x16xbf16>, vector<32x16xf32> -> vector<32x16xf32>
    %13 = arith.addf %3, %6 : vector<32x16xf32>
    %14 = arith.addf %13, %9 : vector<32x16xf32>
    %15 = arith.addf %14, %12 : vector<32x16xf32>
    %cst_13 = arith.constant dense<0.000000e+00> : vector<16xf32>
    %16 = vector.multi_reduction <add>, %15, %cst_13 [0] : vector<32x16xf32> to vector<16xf32>
    %17 = vector.shape_cast %16 : vector<16xf32> to vector<1x16xf32>
    %cst_14 = arith.constant 3.200000e+01 : f32
    %18 = vector.broadcast %cst_14 : f32 to vector<1x16xf32>
    %19 = arith.divf %17, %18 : vector<1x16xf32>
    %cst_15 = arith.constant 2.500000e-01 : f32
    %20 = vector.broadcast %cst_15 : f32 to vector<1x16xf32>
    %21 = arith.mulf %19, %20 : vector<1x16xf32>
    %22 = vector.broadcast %21 : vector<1x16xf32> to vector<32x16xf32>
    %23 = arith.subf %3, %22 : vector<32x16xf32>
    %24 = arith.mulf %23, %23 : vector<32x16xf32>
    %cst_16 = arith.constant dense<0.000000e+00> : vector<16xf32>
    %25 = vector.multi_reduction <add>, %24, %cst_16 [0] : vector<32x16xf32> to vector<16xf32>
    %26 = vector.shape_cast %25 : vector<16xf32> to vector<1x16xf32>
    %cst_17 = arith.constant 3.200000e+01 : f32
    %27 = vector.broadcast %cst_17 : f32 to vector<1x16xf32>
    %28 = arith.divf %26, %27 : vector<1x16xf32>
    %29 = vector.broadcast %21 : vector<1x16xf32> to vector<32x16xf32>
    %30 = arith.subf %6, %29 : vector<32x16xf32>
    %31 = arith.mulf %30, %30 : vector<32x16xf32>
    %cst_18 = arith.constant dense<0.000000e+00> : vector<16xf32>
    %32 = vector.multi_reduction <add>, %31, %cst_18 [0] : vector<32x16xf32> to vector<16xf32>
    %33 = vector.shape_cast %32 : vector<16xf32> to vector<1x16xf32>
    %cst_19 = arith.constant 3.200000e+01 : f32
    %34 = vector.broadcast %cst_19 : f32 to vector<1x16xf32>
    %35 = arith.divf %33, %34 : vector<1x16xf32>
    %36 = arith.addf %28, %35 : vector<1x16xf32>
    %37 = vector.broadcast %21 : vector<1x16xf32> to vector<32x16xf32>
    %38 = arith.subf %9, %37 : vector<32x16xf32>
    %39 = arith.mulf %38, %38 : vector<32x16xf32>
    %cst_20 = arith.constant dense<0.000000e+00> : vector<16xf32>
    %40 = vector.multi_reduction <add>, %39, %cst_20 [0] : vector<32x16xf32> to vector<16xf32>
    %41 = vector.shape_cast %40 : vector<16xf32> to vector<1x16xf32>
    %cst_21 = arith.constant 3.200000e+01 : f32
    %42 = vector.broadcast %cst_21 : f32 to vector<1x16xf32>
    %43 = arith.divf %41, %42 : vector<1x16xf32>
    %44 = arith.addf %36, %43 : vector<1x16xf32>
    %45 = vector.broadcast %21 : vector<1x16xf32> to vector<32x16xf32>
    %46 = arith.subf %12, %45 : vector<32x16xf32>
    %47 = arith.mulf %46, %46 : vector<32x16xf32>
    %cst_22 = arith.constant dense<0.000000e+00> : vector<16xf32>
    %48 = vector.multi_reduction <add>, %47, %cst_22 [0] : vector<32x16xf32> to vector<16xf32>
    %49 = vector.shape_cast %48 : vector<16xf32> to vector<1x16xf32>
    %cst_23 = arith.constant 3.200000e+01 : f32
    %50 = vector.broadcast %cst_23 : f32 to vector<1x16xf32>
    %51 = arith.divf %49, %50 : vector<1x16xf32>
    %52 = arith.addf %44, %51 : vector<1x16xf32>
    %cst_24 = arith.constant 2.500000e-01 : f32
    %53 = vector.broadcast %cst_24 : f32 to vector<1x16xf32>
    %54 = arith.mulf %52, %53 : vector<1x16xf32>
    %cst_25 = arith.constant 2.500000e-01 : f32
    %55 = vector.broadcast %cst_25 : f32 to vector<32x16xf32>
    %56 = arith.mulf %15, %55 : vector<32x16xf32>
    %57 = vector.broadcast %21 : vector<1x16xf32> to vector<32x16xf32>
    %58 = arith.subf %56, %57 : vector<32x16xf32>
    %cst_26 = arith.constant 9.99999974E-6 : f32
    %59 = vector.broadcast %cst_26 : f32 to vector<1x16xf32>
    %60 = arith.addf %54, %59 : vector<1x16xf32>
    %61 = math.rsqrt %60 : vector<1x16xf32>
    %62 = vector.broadcast %61 : vector<1x16xf32> to vector<32x16xf32>
    %63 = arith.mulf %58, %62 : vector<32x16xf32>
    %cst_27 = arith.constant 0.000000e+00 : f32
    %64 = vector.broadcast %cst_27 : f32 to vector<32x16xf32>
    %65 = arith.maximumf %63, %64 : vector<32x16xf32>
    %c0_28 = arith.constant 0 : index
    %c0_29 = arith.constant 0 : index
    %66 = vector.load %arg10[%c0_28, %c0_29] : memref<32x16xf32, #tpu.memory_space<vmem>>, vector<32x16xf32>
    tpu.vector_store %arg10[%c0_28, %c0_29], %65 {strides = array<i32>} : memref<32x16xf32, #tpu.memory_space<vmem>>, vector<32x16xf32>,
    %c0_30 = arith.constant 0 : index
    %c0_31 = arith.constant 0 : index
    %67 = vector.load %arg10[%c0_30, %c0_31] : memref<32x16xf32, #tpu.memory_space<vmem>>, vector<2x16xf32>
    %c0_32 = arith.constant 0 : index
    %c0_33 = arith.constant 0 : index
    %68 = vector.load %arg11[%c0_32, %c0_33] : memref<2x256xf32, #tpu.memory_space<vmem>>, vector<2x16xf32>
    tpu.vector_store %arg11[%c0_32, %c0_33], %67 {strides = array<i32>} : memref<2x256xf32, #tpu.memory_space<vmem>>, vector<2x16xf32>,
    %c2_34 = arith.constant 2 : index
    %c0_35 = arith.constant 0 : index
    %69 = vector.load %arg10[%c2_34, %c0_35] : memref<32x16xf32, #tpu.memory_space<vmem>>, vector<2x16xf32>
    %c0_36 = arith.constant 0 : index
    %c16 = arith.constant 16 : index
    %70 = vector.load %arg11[%c0_36, %c16] : memref<2x256xf32, #tpu.memory_space<vmem>>, vector<2x16xf32>
    tpu.vector_store %arg11[%c0_36, %c16], %69 {strides = array<i32>} : memref<2x256xf32, #tpu.memory_space<vmem>>, vector<2x16xf32>,
    %c4 = arith.constant 4 : index
    %c0_37 = arith.constant 0 : index
    %71 = vector.load %arg10[%c4, %c0_37] : memref<32x16xf32, #tpu.memory_space<vmem>>, vector<2x16xf32>
    %c0_38 = arith.constant 0 : index
    %c32 = arith.constant 32 : index
    %72 = vector.load %arg11[%c0_38, %c32] : memref<2x256xf32, #tpu.memory_space<vmem>>, vector<2x16xf32>
    tpu.vector_store %arg11[%c0_38, %c32], %71 {strides = array<i32>} : memref<2x256xf32, #tpu.memory_space<vmem>>, vector<2x16xf32>,
    %c6 = arith.constant 6 : index
    %c0_39 = arith.constant 0 : index
    %73 = vector.load %arg10[%c6, %c0_39] : memref<32x16xf32, #tpu.memory_space<vmem>>, vector<2x16xf32>
    %c0_40 = arith.constant 0 : index
    %c48 = arith.constant 48 : index
    %74 = vector.load %arg11[%c0_40, %c48] : memref<2x256xf32, #tpu.memory_space<vmem>>, vector<2x16xf32>
    tpu.vector_store %arg11[%c0_40, %c48], %73 {strides = array<i32>} : memref<2x256xf32, #tpu.memory_space<vmem>>, vector<2x16xf32>,
    %c8 = arith.constant 8 : index
    %c0_41 = arith.constant 0 : index
    %75 = vector.load %arg10[%c8, %c0_41] : memref<32x16xf32, #tpu.memory_space<vmem>>, vector<2x16xf32>
    %c0_42 = arith.constant 0 : index
    %c64 = arith.constant 64 : index
    %76 = vector.load %arg11[%c0_42, %c64] : memref<2x256xf32, #tpu.memory_space<vmem>>, vector<2x16xf32>
    tpu.vector_store %arg11[%c0_42, %c64], %75 {strides = array<i32>} : memref<2x256xf32, #tpu.memory_space<vmem>>, vector<2x16xf32>,
    %c10 = arith.constant 10 : index
    %c0_43 = arith.constant 0 : index
    %77 = vector.load %arg10[%c10, %c0_43] : memref<32x16xf32, #tpu.memory_space<vmem>>, vector<2x16xf32>
    %c0_44 = arith.constant 0 : index
    %c80 = arith.constant 80 : index
    %78 = vector.load %arg11[%c0_44, %c80] : memref<2x256xf32, #tpu.memory_space<vmem>>, vector<2x16xf32>
    tpu.vector_store %arg11[%c0_44, %c80], %77 {strides = array<i32>} : memref<2x256xf32, #tpu.memory_space<vmem>>, vector<2x16xf32>,
    %c12 = arith.constant 12 : index
    %c0_45 = arith.constant 0 : index
    %79 = vector.load %arg10[%c12, %c0_45] : memref<32x16xf32, #tpu.memory_space<vmem>>, vector<2x16xf32>
    %c0_46 = arith.constant 0 : index
    %c96 = arith.constant 96 : index
    %80 = vector.load %arg11[%c0_46, %c96] : memref<2x256xf32, #tpu.memory_space<vmem>>, vector<2x16xf32>
    tpu.vector_store %arg11[%c0_46, %c96], %79 {strides = array<i32>} : memref<2x256xf32, #tpu.memory_space<vmem>>, vector<2x16xf32>,
    %c14 = arith.constant 14 : index
    %c0_47 = arith.constant 0 : index
    %81 = vector.load %arg10[%c14, %c0_47] : memref<32x16xf32, #tpu.memory_space<vmem>>, vector<2x16xf32>
    %c0_48 = arith.constant 0 : index
    %c112 = arith.constant 112 : index
    %82 = vector.load %arg11[%c0_48, %c112] : memref<2x256xf32, #tpu.memory_space<vmem>>, vector<2x16xf32>
    tpu.vector_store %arg11[%c0_48, %c112], %81 {strides = array<i32>} : memref<2x256xf32, #tpu.memory_space<vmem>>, vector<2x16xf32>,
    %c16_49 = arith.constant 16 : index
    %c0_50 = arith.constant 0 : index
    %83 = vector.load %arg10[%c16_49, %c0_50] : memref<32x16xf32, #tpu.memory_space<vmem>>, vector<2x16xf32>
    %c0_51 = arith.constant 0 : index
    %c128 = arith.constant 128 : index
    %84 = vector.load %arg11[%c0_51, %c128] : memref<2x256xf32, #tpu.memory_space<vmem>>, vector<2x16xf32>
    tpu.vector_store %arg11[%c0_51, %c128], %83 {strides = array<i32>} : memref<2x256xf32, #tpu.memory_space<vmem>>, vector<2x16xf32>,
    %c18 = arith.constant 18 : index
    %c0_52 = arith.constant 0 : index
    %85 = vector.load %arg10[%c18, %c0_52] : memref<32x16xf32, #tpu.memory_space<vmem>>, vector<2x16xf32>
    %c0_53 = arith.constant 0 : index
    %c144 = arith.constant 144 : index
    %86 = vector.load %arg11[%c0_53, %c144] : memref<2x256xf32, #tpu.memory_space<vmem>>, vector<2x16xf32>
    tpu.vector_store %arg11[%c0_53, %c144], %85 {strides = array<i32>} : memref<2x256xf32, #tpu.memory_space<vmem>>, vector<2x16xf32>,
    %c20 = arith.constant 20 : index
    %c0_54 = arith.constant 0 : index
    %87 = vector.load %arg10[%c20, %c0_54] : memref<32x16xf32, #tpu.memory_space<vmem>>, vector<2x16xf32>
    %c0_55 = arith.constant 0 : index
    %c160 = arith.constant 160 : index
    %88 = vector.load %arg11[%c0_55, %c160] : memref<2x256xf32, #tpu.memory_space<vmem>>, vector<2x16xf32>
    tpu.vector_store %arg11[%c0_55, %c160], %87 {strides = array<i32>} : memref<2x256xf32, #tpu.memory_space<vmem>>, vector<2x16xf32>,
    %c22 = arith.constant 22 : index
    %c0_56 = arith.constant 0 : index
    %89 = vector.load %arg10[%c22, %c0_56] : memref<32x16xf32, #tpu.memory_space<vmem>>, vector<2x16xf32>
    %c0_57 = arith.constant 0 : index
    %c176 = arith.constant 176 : index
    %90 = vector.load %arg11[%c0_57, %c176] : memref<2x256xf32, #tpu.memory_space<vmem>>, vector<2x16xf32>
    tpu.vector_store %arg11[%c0_57, %c176], %89 {strides = array<i32>} : memref<2x256xf32, #tpu.memory_space<vmem>>, vector<2x16xf32>,
    %c24 = arith.constant 24 : index
    %c0_58 = arith.constant 0 : index
    %91 = vector.load %arg10[%c24, %c0_58] : memref<32x16xf32, #tpu.memory_space<vmem>>, vector<2x16xf32>
    %c0_59 = arith.constant 0 : index
    %c192 = arith.constant 192 : index
    %92 = vector.load %arg11[%c0_59, %c192] : memref<2x256xf32, #tpu.memory_space<vmem>>, vector<2x16xf32>
    tpu.vector_store %arg11[%c0_59, %c192], %91 {strides = array<i32>} : memref<2x256xf32, #tpu.memory_space<vmem>>, vector<2x16xf32>,
    %c26 = arith.constant 26 : index
    %c0_60 = arith.constant 0 : index
    %93 = vector.load %arg10[%c26, %c0_60] : memref<32x16xf32, #tpu.memory_space<vmem>>, vector<2x16xf32>
    %c0_61 = arith.constant 0 : index
    %c208 = arith.constant 208 : index
    %94 = vector.load %arg11[%c0_61, %c208] : memref<2x256xf32, #tpu.memory_space<vmem>>, vector<2x16xf32>
    tpu.vector_store %arg11[%c0_61, %c208], %93 {strides = array<i32>} : memref<2x256xf32, #tpu.memory_space<vmem>>, vector<2x16xf32>,
    %c28 = arith.constant 28 : index
    %c0_62 = arith.constant 0 : index
    %95 = vector.load %arg10[%c28, %c0_62] : memref<32x16xf32, #tpu.memory_space<vmem>>, vector<2x16xf32>
    %c0_63 = arith.constant 0 : index
    %c224 = arith.constant 224 : index
    %96 = vector.load %arg11[%c0_63, %c224] : memref<2x256xf32, #tpu.memory_space<vmem>>, vector<2x16xf32>
    tpu.vector_store %arg11[%c0_63, %c224], %95 {strides = array<i32>} : memref<2x256xf32, #tpu.memory_space<vmem>>, vector<2x16xf32>,
    %c30 = arith.constant 30 : index
    %c0_64 = arith.constant 0 : index
    %97 = vector.load %arg10[%c30, %c0_64] : memref<32x16xf32, #tpu.memory_space<vmem>>, vector<2x16xf32>
    %c0_65 = arith.constant 0 : index
    %c240 = arith.constant 240 : index
    %98 = vector.load %arg11[%c0_65, %c240] : memref<2x256xf32, #tpu.memory_space<vmem>>, vector<2x16xf32>
    tpu.vector_store %arg11[%c0_65, %c240], %97 {strides = array<i32>} : memref<2x256xf32, #tpu.memory_space<vmem>>, vector<2x16xf32>,
    %c0_66 = arith.constant 0 : index
    %c0_67 = arith.constant 0 : index
    %99 = vector.load %arg11[%c0_66, %c0_67] : memref<2x256xf32, #tpu.memory_space<vmem>>, vector<2x256xf32>
    %100 = arith.truncf %99 : vector<2x256xf32> to vector<2x256xbf16>
    %c0_68 = arith.constant 0 : index
    %c0_69 = arith.constant 0 : index
    %101 = vector.load %arg3[%c0_68, %c0_69] : memref<256x600xbf16, #tpu.memory_space<vmem>>, vector<256x600xbf16>
    %cst_70 = arith.constant dense<0.000000e+00> : vector<2x600xf32>
    %102 = tpu.matmul %100, %101, %cst_70 {dimension_numbers = #tpu.dot_dimension_numbers<[1], [0], [0], [1], [0, 0, 1, 1], [], []>} : vector<2x256xbf16>, vector<256x600xbf16>, vector<2x600xf32> -> vector<2x600xf32>
    %c0_71 = arith.constant 0 : index
    %c0_72 = arith.constant 0 : index
    %103 = vector.load %arg4[%c0_71, %c0_72] : memref<1x600xf32, #tpu.memory_space<vmem>>, vector<1x600xf32>
    %104 = vector.broadcast %103 : vector<1x600xf32> to vector<2x600xf32>
    %105 = arith.addf %102, %104 : vector<2x600xf32>
    %cst_73 = arith.constant 0.000000e+00 : f32
    %106 = vector.broadcast %cst_73 : f32 to vector<2x600xf32>
    %107 = arith.maximumf %105, %106 : vector<2x600xf32>
    %108 = arith.truncf %107 : vector<2x600xf32> to vector<2x600xbf16>
    %c0_74 = arith.constant 0 : index
    %c0_75 = arith.constant 0 : index
    %109 = vector.load %arg5[%c0_74, %c0_75] : memref<600x420xbf16, #tpu.memory_space<vmem>>, vector<600x420xbf16>
    %cst_76 = arith.constant dense<0.000000e+00> : vector<2x420xf32>
    %110 = tpu.matmul %108, %109, %cst_76 {dimension_numbers = #tpu.dot_dimension_numbers<[1], [0], [0], [1], [0, 0, 1, 1], [], []>} : vector<2x600xbf16>, vector<600x420xbf16>, vector<2x420xf32> -> vector<2x420xf32>
    %c0_77 = arith.constant 0 : index
    %c0_78 = arith.constant 0 : index
    %111 = vector.load %arg6[%c0_77, %c0_78] : memref<1x420xf32, #tpu.memory_space<vmem>>, vector<1x420xf32>
    %112 = vector.broadcast %111 : vector<1x420xf32> to vector<2x420xf32>
    %113 = arith.addf %110, %112 : vector<2x420xf32>
    %cst_79 = arith.constant 0.000000e+00 : f32
    %114 = vector.broadcast %cst_79 : f32 to vector<2x420xf32>
    %115 = arith.maximumf %113, %114 : vector<2x420xf32>
    %116 = arith.truncf %115 : vector<2x420xf32> to vector<2x420xbf16>
    %c0_80 = arith.constant 0 : index
    %c0_81 = arith.constant 0 : index
    %117 = vector.load %arg7[%c0_80, %c0_81] : memref<420x128xbf16, #tpu.memory_space<vmem>>, vector<420x128xbf16>
    %cst_82 = arith.constant dense<0.000000e+00> : vector<2x128xf32>
    %118 = tpu.matmul %116, %117, %cst_82 {dimension_numbers = #tpu.dot_dimension_numbers<[1], [0], [0], [1], [0, 0, 1, 1], [], []>} : vector<2x420xbf16>, vector<420x128xbf16>, vector<2x128xf32> -> vector<2x128xf32>
    %c0_83 = arith.constant 0 : index
    %c0_84 = arith.constant 0 : index
    %119 = vector.load %arg8[%c0_83, %c0_84] : memref<1x128xf32, #tpu.memory_space<vmem>>, vector<1x128xf32>
    %120 = vector.broadcast %119 : vector<1x128xf32> to vector<2x128xf32>
    %121 = arith.addf %118, %120 : vector<2x128xf32>
    %c0_85 = arith.constant 0 : index
    %c0_86 = arith.constant 0 : index
    %122 = vector.load %arg9[%c0_85, %c0_86] : memref<2x128xf32, #tpu.memory_space<vmem>>, vector<2x128xf32>
    tpu.vector_store %arg9[%c0_85, %c0_86], %121 {strides = array<i32>} : memref<2x128xf32, #tpu.memory_space<vmem>>, vector<2x128xf32>,
    return
  }
  func.func @transform_0(%arg0: i32) -> (i32, i32, i32) {
    %c0_i32 = arith.constant 0 : i32
    %c0_i32_0 = arith.constant 0 : i32
    %c0_i32_1 = arith.constant 0 : i32
    %c0_i32_2 = arith.constant 0 : i32
    return %c0_i32, %c0_i32_0, %c0_i32_1 : i32, i32, i32
  }
  func.func @transform_1(%arg0: i32) -> (i32, i32) {
    %c0_i32 = arith.constant 0 : i32
    %c0_i32_0 = arith.constant 0 : i32
    %c0_i32_1 = arith.constant 0 : i32
    return %c0_i32, %c0_i32_0 : i32, i32
  }
  func.func @transform_2(%arg0: i32) -> (i32, i32) {
    %c0_i32 = arith.constant 0 : i32
    %c0_i32_0 = arith.constant 0 : i32
    %c0_i32_1 = arith.constant 0 : i32
    return %c0_i32, %c0_i32_0 : i32, i32
  }
  func.func @transform_3(%arg0: i32) -> (i32, i32) {
    %c0_i32 = arith.constant 0 : i32
    %c0_i32_0 = arith.constant 0 : i32
    %c0_i32_1 = arith.constant 0 : i32
    return %c0_i32, %c0_i32_0 : i32, i32
  }
  func.func @transform_4(%arg0: i32) -> (i32, i32) {
    %c0_i32 = arith.constant 0 : i32
    %c0_i32_0 = arith.constant 0 : i32
    %c0_i32_1 = arith.constant 0 : i32
    return %c0_i32, %c0_i32_0 : i32, i32
  }
  func.func @transform_5(%arg0: i32) -> (i32, i32) {
    %c0_i32 = arith.constant 0 : i32
    %c0_i32_0 = arith.constant 0 : i32
    %c0_i32_1 = arith.constant 0 : i32
    return %c0_i32, %c0_i32_0 : i32, i32
  }
  func.func @transform_6(%arg0: i32) -> (i32, i32) {
    %c0_i32 = arith.constant 0 : i32
    %c0_i32_0 = arith.constant 0 : i32
    %c0_i32_1 = arith.constant 0 : i32
    return %c0_i32, %c0_i32_0 : i32, i32
  }
  func.func @transform_7(%arg0: i32) -> (i32, i32) {
    %c0_i32 = arith.constant 0 : i32
    %c0_i32_0 = arith.constant 0 : i32
    %c0_i32_1 = arith.constant 0 : i32
    return %c0_i32, %c0_i32_0 : i32, i32
  }
  func.func @transform_8(%arg0: i32) -> (i32, i32) {
    %c0_i32 = arith.constant 0 : i32
    %c0_i32_0 = arith.constant 0 : i32
    %c0_i32_1 = arith.constant 0 : i32
    return %c0_i32, %c0_i32_0 : i32, i32
  }
}

</mosaic_0001>

<llo_original>
// kernel: lenet5_ours_forward.2
$region0: #{lenet5_ours_forward.2}
  #allocation0 [shape = 'u32[]', space=smem, size = 0x4, offset = 0x4, fixed_abs, tag = 'smem constant byte address 0x4 - core index']
  #allocation1 [shape = 'u32[144,128]{1,0:T(1,128)}', space=vmem, size = 0x12000, scoped, tag = 'internal scratch']
  %s0 = inlined_call_operand.vmem [shape: bf16[6,25], index: 0, kind: input, shape index: {}]
  %s1 = inlined_call_operand.vmem [shape: bf16[4,25,288], index: 1, kind: input, shape index: {}]
  %s2 = inlined_call_operand.vmem [shape: f32[6,288], index: 2, kind: output, shape index: {}]
  %s3 = sld [smem:[#allocation0]]
  $region18: #{lenet5_ours_forward.2} parent=0
    _
  %s5 = ssub.s32 1, %s3
  %s6 = scalar_select 0, %s5, %s3
  // Predicated region
  $region2: #{lenet5_ours_forward.2} parent=0 // pred_check
    _
  $region3: #{lenet5_ours_forward.2} parent=0 // pred_check_branch
    %8 = sbr.rel (0) target = $region5
  $region4: #{lenet5_ours_forward.2} parent=0 // pred_region
    _
  $region5: #{lenet5_ours_forward.2} parent=0 // pred_fallthru
    _
  // Predicated region
  $region6: #{lenet5_ours_forward.2} parent=0 // pred_check
    _
  $region7: #{lenet5_ours_forward.2} parent=0 // pred_check_branch
    %10 = sbr.rel (0) target = $region9
  $region8: #{lenet5_ours_forward.2} parent=0 // pred_region
    _
  $region9: #{lenet5_ours_forward.2} parent=0 // pred_fallthru
    _
  %v12 = vld [vmem:[%s0] sm:$0x7]
  %v13 = vld [vmem:[%s1] sm:$0xff]
  %v14 = vld [vmem:[%s1 + $0x8] sm:$0xf]
  %v15 = vld [vmem:[%s1 + $0xc] sm:$0xff]
  %v16 = vld [vmem:[%s1 + $0x14] sm:$0xf]
  %v17 = vld [vmem:[%s1 + $0x18] sm:$0xff]
  %v18 = vld [vmem:[%s1 + $0x20] sm:$0xf]
  %v19 = vld [vmem:[%s1 + $0x24] sm:$0x11]
  %v20 = vld [vmem:[%s1 + $0x2c] sm:$0x1]
  %v29 = vunpack.c.l.b16 %v13
  %v30 = vunpack.c.h.b16 %v13
  %v31 = vunpack.c.l.b16 %v14
  %v32 = vunpack.c.l.b16 %v15
  %v33 = vunpack.c.h.b16 %v15
  %v34 = vunpack.c.l.b16 %v16
  %v35 = vunpack.c.l.b16 %v17
  %v36 = vunpack.c.h.b16 %v17
  %v37 = vunpack.c.l.b16 %v18
  %v38 = vunpack.c.l.b16 %v19
  %v39 = vunpack.c.h.b16 %v19
  %v40 = vunpack.c.l.b16 %v20
  %v41 = vpack.c.b16 %v32, %v29
  %v42 = vpack.c.b16 %v33, %v30
  %v43 = vpack.c.b16 %v34, %v31
  %v44 = vpack.c.b16 %v38, %v35
  %v45 = vpack.c.b16 %v39, %v36
  %v46 = vpack.c.b16 %v40, %v37
  %vm50 = vcmask 203776
  %v52 = vsel %vm50, %v12, 0
  %vm54 = vcmask 1043456
  %vm55 = vcmask 1044480
  %v56 = vsel %vm54, 4294967295, 65535
  %v57 = vsel %vm55, %v56, 0
  %v59 = vand.u32 %v44, %v57
  %v62 = vand.u32 %v45, %v57
  %v65 = vand.u32 %v46, %v57
  %67 = vmatprep.subr.bf16.mxu0 %v42
  %68 = vmatpush1.bf16.msra.mxu0 %v41
  %69 = vmatprep.subr.bf16.mxu0 %v62
  %70 = vmatpush1.bf16.msra.mxu0 %v59
  %71 = vmatprep.subr.bf16.mxu0 0
  %72 = vmatpush1.bf16.msra.mxu0 0
  %73 = vmatprep.subr.bf16.mxu0 0
  %74 = vmatpush1.bf16.msra.mxu0 0
  %75 = vmatprep.subr.bf16.mxu0 0
  %76 = vmatpush1.bf16.msra.mxu0 0
  %77 = vmatprep.subr.bf16.mxu0 0
  %78 = vmatpush1.bf16.msra.mxu0 0
  %79 = vmatprep.subr.bf16.mxu0 0
  %80 = vmatpush1.bf16.msra.mxu0 0
  %81 = vmatprep.subr.bf16.mxu0 0
  %82 = vmatpush1.bf16.msra.mxu0 0
  %83 = vmatprep.subr.bf16.mxu0 0
  %84 = vmatpush1.bf16.msra.mxu0 0
  %85 = vmatprep.subr.bf16.mxu0 0
  %86 = vmatpush1.bf16.msra.mxu0 0
  %87 = vmatprep.subr.bf16.mxu0 0
  %88 = vmatpush1.bf16.msra.mxu0 0
  %89 = vmatprep.subr.bf16.mxu0 0
  %90 = vmatpush1.bf16.msra.mxu0 0
  %91 = vmatprep.subr.bf16.mxu0 0
  %92 = vmatpush1.bf16.msra.mxu0 0
  %93 = vmatprep.subr.bf16.mxu0 0
  %94 = vmatpush1.bf16.msra.mxu0 0
  %95 = vmatprep.subr.bf16.mxu0 0
  %96 = vmatpush1.bf16.msra.mxu0 0
  %97 = vmatprep.subr.bf16.mxu0 0
  %98 = vmatpush1.bf16.msra.mxu0 0
  %99 = vmatprep.mubr.bf16.mxu0 0
  %100 = vmatmul.mubr.bf16.gmra.mrb[0].mxu0 %v52
  %v101 = vpop.f32.mrb[0].mxu0
  %v102 = vadd.f32 0.0, %v101
  %v103 = vpop.f32.mrb[0].mxu0
  %v104 = vadd.f32 0.0, %v103
  %v105 = vpop.f32.mrb[0].mxu0
  %v106 = vpop.f32.mrb[0].mxu0
  %107 = vdwg.mxu0
  %108 = vmatprep.subr.bf16.mxu0 0
  %109 = vmatpush1.bf16.msra.mxu0 %v43
  %110 = vmatprep.subr.bf16.mxu0 0
  %111 = vmatpush1.bf16.msra.mxu0 %v65
  %112 = vmatprep.subr.bf16.mxu0 0
  %113 = vmatpush1.bf16.msra.mxu0 0
  %114 = vmatprep.subr.bf16.mxu0 0
  %115 = vmatpush1.bf16.msra.mxu0 0
  %116 = vmatprep.subr.bf16.mxu0 0
  %117 = vmatpush1.bf16.msra.mxu0 0
  %118 = vmatprep.subr.bf16.mxu0 0
  %119 = vmatpush1.bf16.msra.mxu0 0
  %120 = vmatprep.subr.bf16.mxu0 0
  %121 = vmatpush1.bf16.msra.mxu0 0
  %122 = vmatprep.subr.bf16.mxu0 0
  %123 = vmatpush1.bf16.msra.mxu0 0
  %124 = vmatprep.subr.bf16.mxu0 0
  %125 = vmatpush1.bf16.msra.mxu0 0
  %126 = vmatprep.subr.bf16.mxu0 0
  %127 = vmatpush1.bf16.msra.mxu0 0
  %128 = vmatprep.subr.bf16.mxu0 0
  %129 = vmatpush1.bf16.msra.mxu0 0
  %130 = vmatprep.subr.bf16.mxu0 0
  %131 = vmatpush1.bf16.msra.mxu0 0
  %132 = vmatprep.subr.bf16.mxu0 0
  %133 = vmatpush1.bf16.msra.mxu0 0
  %134 = vmatprep.subr.bf16.mxu0 0
  %135 = vmatpush1.bf16.msra.mxu0 0
  %136 = vmatprep.subr.bf16.mxu0 0
  %137 = vmatpush1.bf16.msra.mxu0 0
  %138 = vmatprep.subr.bf16.mxu0 0
  %139 = vmatpush1.bf16.msra.mxu0 0
  %140 = vmatprep.mubr.bf16.mxu0 0
  %141 = vmatmul.mubr.bf16.gmra.mrb[0].mxu0 %v52
  %v142 = vpop.f32.mrb[0].mxu0
  %v143 = vadd.f32 0.0, %v142
  %v144 = vpop.f32.mrb[0].mxu0
  %v145 = vpop.f32.mrb[0].mxu0
  %v146 = vpop.f32.mrb[0].mxu0
  %147 = vdwg.mxu0
  %s148 = scalar_lea.vmem %s1, 48
  %v149 = vld [vmem:[%s148] sm:$0xff]
  %v150 = vld [vmem:[%s148 + $0x8] sm:$0xf]
  %v151 = vld [vmem:[%s148 + $0xc] sm:$0xff]
  %v152 = vld [vmem:[%s148 + $0x14] sm:$0xf]
  %v153 = vld [vmem:[%s148 + $0x18] sm:$0xff]
  %v154 = vld [vmem:[%s148 + $0x20] sm:$0xf]
  %v155 = vld [vmem:[%s148 + $0x24] sm:$0x11]
  %v156 = vld [vmem:[%s148 + $0x2c] sm:$0x1]
  %v165 = vunpack.c.l.b16 %v149
  %v166 = vunpack.c.h.b16 %v149
  %v167 = vunpack.c.l.b16 %v150
  %v168 = vunpack.c.l.b16 %v151
  %v169 = vunpack.c.h.b16 %v151
  %v170 = vunpack.c.l.b16 %v152
  %v171 = vunpack.c.l.b16 %v153
  %v172 = vunpack.c.h.b16 %v153
  %v173 = vunpack.c.l.b16 %v154
  %v174 = vunpack.c.l.b16 %v155
  %v175 = vunpack.c.h.b16 %v155
  %v176 = vunpack.c.l.b16 %v156
  %v177 = vpack.c.b16 %v168, %v165
  %v178 = vpack.c.b16 %v169, %v166
  %v179 = vpack.c.b16 %v170, %v167
  %v180 = vpack.c.b16 %v174, %v171
  %v181 = vpack.c.b16 %v175, %v172
  %v182 = vpack.c.b16 %v176, %v173
  %v187 = vand.u32 %v180, %v57
  %v190 = vand.u32 %v181, %v57
  %v193 = vand.u32 %v182, %v57
  %195 = vmatprep.subr.bf16.mxu0 %v178
  %196 = vmatpush1.bf16.msra.mxu0 %v177
  %197 = vmatprep.subr.bf16.mxu0 %v190
  %198 = vmatpush1.bf16.msra.mxu0 %v187
  %199 = vmatprep.subr.bf16.mxu0 0
  %200 = vmatpush1.bf16.msra.mxu0 0
  %201 = vmatprep.subr.bf16.mxu0 0
  %202 = vmatpush1.bf16.msra.mxu0 0
  %203 = vmatprep.subr.bf16.mxu0 0
  %204 = vmatpush1.bf16.msra.mxu0 0
  %205 = vmatprep.subr.bf16.mxu0 0
  %206 = vmatpush1.bf16.msra.mxu0 0
  %207 = vmatprep.subr.bf16.mxu0 0
  %208 = vmatpush1.bf16.msra.mxu0 0
  %209 = vmatprep.subr.bf16.mxu0 0
  %210 = vmatpush1.bf16.msra.mxu0 0
  %211 = vmatprep.subr.bf16.mxu0 0
  %212 = vmatpush1.bf16.msra.mxu0 0
  %213 = vmatprep.subr.bf16.mxu0 0
  %214 = vmatpush1.bf16.msra.mxu0 0
  %215 = vmatprep.subr.bf16.mxu0 0
  %216 = vmatpush1.bf16.msra.mxu0 0
  %217 = vmatprep.subr.bf16.mxu0 0
  %218 = vmatpush1.bf16.msra.mxu0 0
  %219 = vmatprep.subr.bf16.mxu0 0
  %220 = vmatpush1.bf16.msra.mxu0 0
  %221 = vmatprep.subr.bf16.mxu0 0
  %222 = vmatpush1.bf16.msra.mxu0 0
  %223 = vmatprep.subr.bf16.mxu0 0
  %224 = vmatpush1.bf16.msra.mxu0 0
  %225 = vmatprep.subr.bf16.mxu0 0
  %226 = vmatpush1.bf16.msra.mxu0 0
  %227 = vmatprep.mubr.bf16.mxu0 0
  %228 = vmatmul.mubr.bf16.gmra.mrb[0].mxu0 %v52
  %v229 = vpop.f32.mrb[0].mxu0
  %v230 = vadd.f32 0.0, %v229
  %v231 = vpop.f32.mrb[0].mxu0
  %v232 = vadd.f32 0.0, %v231
  %v233 = vpop.f32.mrb[0].mxu0
  %v234 = vpop.f32.mrb[0].mxu0
  %235 = vdwg.mxu0
  %236 = vmatprep.subr.bf16.mxu0 0
  %237 = vmatpush1.bf16.msra.mxu0 %v179
  %238 = vmatprep.subr.bf16.mxu0 0
  %239 = vmatpush1.bf16.msra.mxu0 %v193
  %240 = vmatprep.subr.bf16.mxu0 0
  %241 = vmatpush1.bf16.msra.mxu0 0
  %242 = vmatprep.subr.bf16.mxu0 0
  %243 = vmatpush1.bf16.msra.mxu0 0
  %244 = vmatprep.subr.bf16.mxu0 0
  %245 = vmatpush1.bf16.msra.mxu0 0
  %246 = vmatprep.subr.bf16.mxu0 0
  %247 = vmatpush1.bf16.msra.mxu0 0
  %248 = vmatprep.subr.bf16.mxu0 0
  %249 = vmatpush1.bf16.msra.mxu0 0
  %250 = vmatprep.subr.bf16.mxu0 0
  %251 = vmatpush1.bf16.msra.mxu0 0
  %252 = vmatprep.subr.bf16.mxu0 0
  %253 = vmatpush1.bf16.msra.mxu0 0
  %254 = vmatprep.subr.bf16.mxu0 0
  %255 = vmatpush1.bf16.msra.mxu0 0
  %256 = vmatprep.subr.bf16.mxu0 0
  %257 = vmatpush1.bf16.msra.mxu0 0
  %258 = vmatprep.subr.bf16.mxu0 0
  %259 = vmatpush1.bf16.msra.mxu0 0
  %260 = vmatprep.subr.bf16.mxu0 0
  %261 = vmatpush1.bf16.msra.mxu0 0
  %262 = vmatprep.subr.bf16.mxu0 0
  %263 = vmatpush1.bf16.msra.mxu0 0
  %264 = vmatprep.subr.bf16.mxu0 0
  %265 = vmatpush1.bf16.msra.mxu0 0
  %266 = vmatprep.subr.bf16.mxu0 0
  %267 = vmatpush1.bf16.msra.mxu0 0
  %268 = vmatprep.mubr.bf16.mxu0 0
  %269 = vmatmul.mubr.bf16.gmra.mrb[0].mxu0 %v52
  %v270 = vpop.f32.mrb[0].mxu0
  %v271 = vadd.f32 0.0, %v270
  %v272 = vpop.f32.mrb[0].mxu0
  %v273 = vpop.f32.mrb[0].mxu0
  %v274 = vpop.f32.mrb[0].mxu0
  %275 = vdwg.mxu0
  %s276 = scalar_lea.vmem %s1, 96
  %v277 = vld [vmem:[%s276] sm:$0xff]
  %v278 = vld [vmem:[%s276 + $0x8] sm:$0xf]
  %v279 = vld [vmem:[%s276 + $0xc] sm:$0xff]
  %v280 = vld [vmem:[%s276 + $0x14] sm:$0xf]
  %v281 = vld [vmem:[%s276 + $0x18] sm:$0xff]
  %v282 = vld [vmem:[%s276 + $0x20] sm:$0xf]
  %v283 = vld [vmem:[%s276 + $0x24] sm:$0x11]
  %v284 = vld [vmem:[%s276 + $0x2c] sm:$0x1]
  %v293 = vunpack.c.l.b16 %v277
  %v294 = vunpack.c.h.b16 %v277
  %v295 = vunpack.c.l.b16 %v278
  %v296 = vunpack.c.l.b16 %v279
  %v297 = vunpack.c.h.b16 %v279
  %v298 = vunpack.c.l.b16 %v280
  %v299 = vunpack.c.l.b16 %v281
  %v300 = vunpack.c.h.b16 %v281
  %v301 = vunpack.c.l.b16 %v282
  %v302 = vunpack.c.l.b16 %v283
  %v303 = vunpack.c.h.b16 %v283
  %v304 = vunpack.c.l.b16 %v284
  %v305 = vpack.c.b16 %v296, %v293
  %v306 = vpack.c.b16 %v297, %v294
  %v307 = vpack.c.b16 %v298, %v295
  %v308 = vpack.c.b16 %v302, %v299
  %v309 = vpack.c.b16 %v303, %v300
  %v310 = vpack.c.b16 %v304, %v301
  %v315 = vand.u32 %v308, %v57
  %v318 = vand.u32 %v309, %v57
  %v321 = vand.u32 %v310, %v57
  %323 = vmatprep.subr.bf16.mxu0 %v306
  %324 = vmatpush1.bf16.msra.mxu0 %v305
  %325 = vmatprep.subr.bf16.mxu0 %v318
  %326 = vmatpush1.bf16.msra.mxu0 %v315
  %327 = vmatprep.subr.bf16.mxu0 0
  %328 = vmatpush1.bf16.msra.mxu0 0
  %329 = vmatprep.subr.bf16.mxu0 0
  %330 = vmatpush1.bf16.msra.mxu0 0
  %331 = vmatprep.subr.bf16.mxu0 0
  %332 = vmatpush1.bf16.msra.mxu0 0
  %333 = vmatprep.subr.bf16.mxu0 0
  %334 = vmatpush1.bf16.msra.mxu0 0
  %335 = vmatprep.subr.bf16.mxu0 0
  %336 = vmatpush1.bf16.msra.mxu0 0
  %337 = vmatprep.subr.bf16.mxu0 0
  %338 = vmatpush1.bf16.msra.mxu0 0
  %339 = vmatprep.subr.bf16.mxu0 0
  %340 = vmatpush1.bf16.msra.mxu0 0
  %341 = vmatprep.subr.bf16.mxu0 0
  %342 = vmatpush1.bf16.msra.mxu0 0
  %343 = vmatprep.subr.bf16.mxu0 0
  %344 = vmatpush1.bf16.msra.mxu0 0
  %345 = vmatprep.subr.bf16.mxu0 0
  %346 = vmatpush1.bf16.msra.mxu0 0
  %347 = vmatprep.subr.bf16.mxu0 0
  %348 = vmatpush1.bf16.msra.mxu0 0
  %349 = vmatprep.subr.bf16.mxu0 0
  %350 = vmatpush1.bf16.msra.mxu0 0
  %351 = vmatprep.subr.bf16.mxu0 0
  %352 = vmatpush1.bf16.msra.mxu0 0
  %353 = vmatprep.subr.bf16.mxu0 0
  %354 = vmatpush1.bf16.msra.mxu0 0
  %355 = vmatprep.mubr.bf16.mxu0 0
  %356 = vmatmul.mubr.bf16.gmra.mrb[0].mxu0 %v52
  %v357 = vpop.f32.mrb[0].mxu0
  %v358 = vadd.f32 0.0, %v357
  %v359 = vpop.f32.mrb[0].mxu0
  %v360 = vadd.f32 0.0, %v359
  %v361 = vpop.f32.mrb[0].mxu0
  %v362 = vpop.f32.mrb[0].mxu0
  %363 = vdwg.mxu0
  %364 = vmatprep.subr.bf16.mxu0 0
  %365 = vmatpush1.bf16.msra.mxu0 %v307
  %366 = vmatprep.subr.bf16.mxu0 0
  %367 = vmatpush1.bf16.msra.mxu0 %v321
  %368 = vmatprep.subr.bf16.mxu0 0
  %369 = vmatpush1.bf16.msra.mxu0 0
  %370 = vmatprep.subr.bf16.mxu0 0
  %371 = vmatpush1.bf16.msra.mxu0 0
  %372 = vmatprep.subr.bf16.mxu0 0
  %373 = vmatpush1.bf16.msra.mxu0 0
  %374 = vmatprep.subr.bf16.mxu0 0
  %375 = vmatpush1.bf16.msra.mxu0 0
  %376 = vmatprep.subr.bf16.mxu0 0
  %377 = vmatpush1.bf16.msra.mxu0 0
  %378 = vmatprep.subr.bf16.mxu0 0
  %379 = vmatpush1.bf16.msra.mxu0 0
  %380 = vmatprep.subr.bf16.mxu0 0
  %381 = vmatpush1.bf16.msra.mxu0 0
  %382 = vmatprep.subr.bf16.mxu0 0
  %383 = vmatpush1.bf16.msra.mxu0 0
  %384 = vmatprep.subr.bf16.mxu0 0
  %385 = vmatpush1.bf16.msra.mxu0 0
  %386 = vmatprep.subr.bf16.mxu0 0
  %387 = vmatpush1.bf16.msra.mxu0 0
  %388 = vmatprep.subr.bf16.mxu0 0
  %389 = vmatpush1.bf16.msra.mxu0 0
  %390 = vmatprep.subr.bf16.mxu0 0
  %391 = vmatpush1.bf16.msra.mxu0 0
  %392 = vmatprep.subr.bf16.mxu0 0
  %393 = vmatpush1.bf16.msra.mxu0 0
  %394 = vmatprep.subr.bf16.mxu0 0
  %395 = vmatpush1.bf16.msra.mxu0 0
  %396 = vmatprep.mubr.bf16.mxu0 0
  %397 = vmatmul.mubr.bf16.gmra.mrb[0].mxu0 %v52
  %v398 = vpop.f32.mrb[0].mxu0
  %v399 = vadd.f32 0.0, %v398
  %v400 = vpop.f32.mrb[0].mxu0
  %v401 = vpop.f32.mrb[0].mxu0
  %v402 = vpop.f32.mrb[0].mxu0
  %403 = vdwg.mxu0
  %s404 = scalar_lea.vmem %s1, 144
  %v405 = vld [vmem:[%s404] sm:$0xff]
  %v406 = vld [vmem:[%s404 + $0x8] sm:$0xf]
  %v407 = vld [vmem:[%s404 + $0xc] sm:$0xff]
  %v408 = vld [vmem:[%s404 + $0x14] sm:$0xf]
  %v409 = vld [vmem:[%s404 + $0x18] sm:$0xff]
  %v410 = vld [vmem:[%s404 + $0x20] sm:$0xf]
  %v411 = vld [vmem:[%s404 + $0x24] sm:$0x11]
  %v412 = vld [vmem:[%s404 + $0x2c] sm:$0x1]
  %v421 = vunpack.c.l.b16 %v405
  %v422 = vunpack.c.h.b16 %v405
  %v423 = vunpack.c.l.b16 %v406
  %v424 = vunpack.c.l.b16 %v407
  %v425 = vunpack.c.h.b16 %v407
  %v426 = vunpack.c.l.b16 %v408
  %v427 = vunpack.c.l.b16 %v409
  %v428 = vunpack.c.h.b16 %v409
  %v429 = vunpack.c.l.b16 %v410
  %v430 = vunpack.c.l.b16 %v411
  %v431 = vunpack.c.h.b16 %v411
  %v432 = vunpack.c.l.b16 %v412
  %v433 = vpack.c.b16 %v424, %v421
  %v434 = vpack.c.b16 %v425, %v422
  %v435 = vpack.c.b16 %v426, %v423
  %v436 = vpack.c.b16 %v430, %v427
  %v437 = vpack.c.b16 %v431, %v428
  %v438 = vpack.c.b16 %v432, %v429
  %v443 = vand.u32 %v436, %v57
  %v446 = vand.u32 %v437, %v57
  %v449 = vand.u32 %v438, %v57
  %451 = vmatprep.subr.bf16.mxu0 %v434
  %452 = vmatpush1.bf16.msra.mxu0 %v433
  %453 = vmatprep.subr.bf16.mxu0 %v446
  %454 = vmatpush1.bf16.msra.mxu0 %v443
  %455 = vmatprep.subr.bf16.mxu0 0
  %456 = vmatpush1.bf16.msra.mxu0 0
  %457 = vmatprep.subr.bf16.mxu0 0
  %458 = vmatpush1.bf16.msra.mxu0 0
  %459 = vmatprep.subr.bf16.mxu0 0
  %460 = vmatpush1.bf16.msra.mxu0 0
  %461 = vmatprep.subr.bf16.mxu0 0
  %462 = vmatpush1.bf16.msra.mxu0 0
  %463 = vmatprep.subr.bf16.mxu0 0
  %464 = vmatpush1.bf16.msra.mxu0 0
  %465 = vmatprep.subr.bf16.mxu0 0
  %466 = vmatpush1.bf16.msra.mxu0 0
  %467 = vmatprep.subr.bf16.mxu0 0
  %468 = vmatpush1.bf16.msra.mxu0 0
  %469 = vmatprep.subr.bf16.mxu0 0
  %470 = vmatpush1.bf16.msra.mxu0 0
  %471 = vmatprep.subr.bf16.mxu0 0
  %472 = vmatpush1.bf16.msra.mxu0 0
  %473 = vmatprep.subr.bf16.mxu0 0
  %474 = vmatpush1.bf16.msra.mxu0 0
  %475 = vmatprep.subr.bf16.mxu0 0
  %476 = vmatpush1.bf16.msra.mxu0 0
  %477 = vmatprep.subr.bf16.mxu0 0
  %478 = vmatpush1.bf16.msra.mxu0 0
  %479 = vmatprep.subr.bf16.mxu0 0
  %480 = vmatpush1.bf16.msra.mxu0 0
  %481 = vmatprep.subr.bf16.mxu0 0
  %482 = vmatpush1.bf16.msra.mxu0 0
  %483 = vmatprep.mubr.bf16.mxu0 0
  %484 = vmatmul.mubr.bf16.gmra.mrb[0].mxu0 %v52
  %v485 = vpop.f32.mrb[0].mxu0
  %v486 = vadd.f32 0.0, %v485
  %v487 = vpop.f32.mrb[0].mxu0
  %v488 = vadd.f32 0.0, %v487
  %v489 = vpop.f32.mrb[0].mxu0
  %v490 = vpop.f32.mrb[0].mxu0
  %491 = vdwg.mxu0
  %492 = vmatprep.subr.bf16.mxu0 0
  %493 = vmatpush1.bf16.msra.mxu0 %v435
  %494 = vmatprep.subr.bf16.mxu0 0
  %495 = vmatpush1.bf16.msra.mxu0 %v449
  %496 = vmatprep.subr.bf16.mxu0 0
  %497 = vmatpush1.bf16.msra.mxu0 0
  %498 = vmatprep.subr.bf16.mxu0 0
  %499 = vmatpush1.bf16.msra.mxu0 0
  %500 = vmatprep.subr.bf16.mxu0 0
  %501 = vmatpush1.bf16.msra.mxu0 0
  %502 = vmatprep.subr.bf16.mxu0 0
  %503 = vmatpush1.bf16.msra.mxu0 0
  %504 = vmatprep.subr.bf16.mxu0 0
  %505 = vmatpush1.bf16.msra.mxu0 0
  %506 = vmatprep.subr.bf16.mxu0 0
  %507 = vmatpush1.bf16.msra.mxu0 0
  %508 = vmatprep.subr.bf16.mxu0 0
  %509 = vmatpush1.bf16.msra.mxu0 0
  %510 = vmatprep.subr.bf16.mxu0 0
  %511 = vmatpush1.bf16.msra.mxu0 0
  %512 = vmatprep.subr.bf16.mxu0 0
  %513 = vmatpush1.bf16.msra.mxu0 0
  %514 = vmatprep.subr.bf16.mxu0 0
  %515 = vmatpush1.bf16.msra.mxu0 0
  %516 = vmatprep.subr.bf16.mxu0 0
  %517 = vmatpush1.bf16.msra.mxu0 0
  %518 = vmatprep.subr.bf16.mxu0 0
  %519 = vmatpush1.bf16.msra.mxu0 0
  %520 = vmatprep.subr.bf16.mxu0 0
  %521 = vmatpush1.bf16.msra.mxu0 0
  %522 = vmatprep.subr.bf16.mxu0 0
  %523 = vmatpush1.bf16.msra.mxu0 0
  %524 = vmatprep.mubr.bf16.mxu0 0
  %525 = vmatmul.mubr.bf16.gmra.mrb[0].mxu0 %v52
  %v526 = vpop.f32.mrb[0].mxu0
  %v527 = vadd.f32 0.0, %v526
  %v528 = vpop.f32.mrb[0].mxu0
  %v529 = vpop.f32.mrb[0].mxu0
  %v530 = vpop.f32.mrb[0].mxu0
  %531 = vdwg.mxu0
  %v532 = vadd.f32 %v102, %v230
  %v533 = vadd.f32 %v104, %v232
  %v534 = vadd.f32 %v143, %v271
  %v535 = vadd.f32 %v532, %v358
  %v536 = vadd.f32 %v533, %v360
  %v537 = vadd.f32 %v534, %v399
  %v538 = vadd.f32 %v535, %v486
  %v539 = vadd.f32 %v536, %v488
  %v540 = vadd.f32 %v537, %v527
  %vm541 = vcmask 1045504
  %v542 = vsel %vm541, %v538, 0.0
  %v543 = vsel %vm541, %v539, 0.0
  %v544 = vadd.f32 %v542, %v543
  %vm545 = vcmask 259072
  %v546 = vsel %vm545, %v540, 0.0
  %v547 = vadd.f32 %v544, %v546
  %548 = vadd.xlane.f32.xlu0 %v547
  %v549 = vpop.xlane.xlu0 %548
  %v550 = vrcp.pop 288.0
  %v551 = vmul.f32 %v549, %v550
  %v552 = vmul.f32 %v551, 0.25
  %v553 = vsub.f32 %v102, %v552
  %v554 = vsub.f32 %v104, %v552
  %v555 = vsub.f32 %v143, %v552
  %v556 = vmul.f32 %v553, %v553
  %v557 = vmul.f32 %v554, %v554
  %v558 = vmul.f32 %v555, %v555
  %v559 = vsel %vm541, %v556, 0.0
  %v560 = vsel %vm541, %v557, 0.0
  %v561 = vadd.f32 %v559, %v560
  %v562 = vsel %vm545, %v558, 0.0
  %v563 = vadd.f32 %v561, %v562
  %564 = vadd.xlane.f32.xlu0 %v563
  %v565 = vpop.xlane.xlu0 %564
  %v566 = vmul.f32 %v565, %v550
  %v567 = vsub.f32 %v230, %v552
  %v568 = vsub.f32 %v232, %v552
  %v569 = vsub.f32 %v271, %v552
  %v570 = vmul.f32 %v567, %v567
  %v571 = vmul.f32 %v568, %v568
  %v572 = vmul.f32 %v569, %v569
  %v573 = vsel %vm541, %v570, 0.0
  %v574 = vsel %vm541, %v571, 0.0
  %v575 = vadd.f32 %v573, %v574
  %v576 = vsel %vm545, %v572, 0.0
  %v577 = vadd.f32 %v575, %v576
  %578 = vadd.xlane.f32.xlu0 %v577
  %v579 = vpop.xlane.xlu0 %578
  %v580 = vmul.f32 %v579, %v550
  %v581 = vadd.f32 %v566, %v580
  %v582 = vsub.f32 %v358, %v552
  %v583 = vsub.f32 %v360, %v552
  %v584 = vsub.f32 %v399, %v552
  %v585 = vmul.f32 %v582, %v582
  %v586 = vmul.f32 %v583, %v583
  %v587 = vmul.f32 %v584, %v584
  %v588 = vsel %vm541, %v585, 0.0
  %v589 = vsel %vm541, %v586, 0.0
  %v590 = vadd.f32 %v588, %v589
  %v591 = vsel %vm545, %v587, 0.0
  %v592 = vadd.f32 %v590, %v591
  %593 = vadd.xlane.f32.xlu0 %v592
  %v594 = vpop.xlane.xlu0 %593
  %v595 = vmul.f32 %v594, %v550
  %v596 = vadd.f32 %v581, %v595
  %v597 = vsub.f32 %v486, %v552
  %v598 = vsub.f32 %v488, %v552
  %v599 = vsub.f32 %v527, %v552
  %v600 = vmul.f32 %v597, %v597
  %v601 = vmul.f32 %v598, %v598
  %v602 = vmul.f32 %v599, %v599
  %v603 = vsel %vm541, %v600, 0.0
  %v604 = vsel %vm541, %v601, 0.0
  %v605 = vadd.f32 %v603, %v604
  %v606 = vsel %vm545, %v602, 0.0
  %v607 = vadd.f32 %v605, %v606
  %608 = vadd.xlane.f32.xlu0 %v607
  %v609 = vpop.xlane.xlu0 %608
  %v610 = vmul.f32 %v609, %v550
  %v611 = vadd.f32 %v596, %v610
  %v612 = vmul.f32 %v611, 0.25
  %v613 = vmul.f32 %v538, 0.25
  %v614 = vmul.f32 %v539, 0.25
  %v615 = vmul.f32 %v540, 0.25
  %v616 = vsub.f32 %v613, %v552
  %v617 = vsub.f32 %v614, %v552
  %v618 = vsub.f32 %v615, %v552
  %v619 = vadd.f32 %v612, 1e-05
  %v620 = vrsqrt.pop %v619
  %v621 = vmul.f32 %v616, %v620
  %v622 = vmul.f32 %v617, %v620
  %v623 = vmul.f32 %v618, %v620
  %v624 = vmax.f32 %v621, 0.0
  %v625 = vmax.f32 %v622, 0.0
  %v626 = vmax.f32 %v623, 0.0
  %627 = vst [vmem:[%s2] sm:$0x3f] %v624
  %628 = vst [vmem:[%s2 + $0x8] sm:$0x3f] %v625
  %629 = vst.msk [vmem:[%s2 + $0x10] sm:$0x3f] %vm545, %v626
  // Predicated region
  $region10: #{lenet5_ours_forward.2} parent=0 // pred_check
    _
  $region11: #{lenet5_ours_forward.2} parent=0 // pred_check_branch
    %631 = sbr.rel (0) target = $region13
  $region12: #{lenet5_ours_forward.2} parent=0 // pred_region
    _
  $region13: #{lenet5_ours_forward.2} parent=0 // pred_fallthru
    _
  // Predicated region
  $region14: #{lenet5_ours_forward.2} parent=0 // pred_check
    _
  $region15: #{lenet5_ours_forward.2} parent=0 // pred_check_branch
    %633 = sbr.rel (0) target = $region17
  $region16: #{lenet5_ours_forward.2} parent=0 // pred_region
    _
  $region17: #{lenet5_ours_forward.2} parent=0 // pred_fallthru
    _

// kernel: lenet5_ours_forward.3
$region0: #{lenet5_ours_forward.3}
  #allocation0 [shape = 'u32[]', space=smem, size = 0x4, offset = 0x4, fixed_abs, tag = 'smem constant byte address 0x4 - core index']
  #allocation1 [shape = 'u32[144,128]{1,0:T(1,128)}', space=vmem, size = 0x12000, scoped, tag = 'internal scratch']
  #allocation2 [shape = 'f32[32,16]{1,0:T(8,128)}', space=vmem, size = 0x4000, scoped, tag = 'scratch operand']
  #allocation3 [shape = 'f32[2,256]{1,0:T(2,128)}', space=vmem, size = 0x800, scoped, tag = 'scratch operand']
  %s0 = inlined_call_operand.vmem [shape: bf16[4,32,150], index: 0, kind: input, shape index: {}]
  %s1 = inlined_call_operand.vmem [shape: bf16[150,16], index: 1, kind: input, shape index: {}]
  %s2 = inlined_call_operand.vmem [shape: bf16[256,600], index: 2, kind: input, shape index: {}]
  %s3 = inlined_call_operand.vmem [shape: f32[1,600], index: 3, kind: input, shape index: {}]
  %s4 = inlined_call_operand.vmem [shape: bf16[600,420], index: 4, kind: input, shape index: {}]
  %s5 = inlined_call_operand.vmem [shape: f32[1,420], index: 5, kind: input, shape index: {}]
  %s6 = inlined_call_operand.vmem [shape: bf16[420,128], index: 6, kind: input, shape index: {}]
  %s7 = inlined_call_operand.vmem [shape: f32[1,128], index: 7, kind: input, shape index: {}]
  %s8 = inlined_call_operand.vmem [shape: f32[2,128], index: 8, kind: output, shape index: {}]
  %s9 = sld [smem:[#allocation0]]
  $region42: #{lenet5_ours_forward.3} parent=0
    _
  %s11 = ssub.s32 1, %s9
  %s12 = scalar_select 0, %s11, %s9
  // Predicated region
  $region2: #{lenet5_ours_forward.3} parent=0 // pred_check
    _
  $region3: #{lenet5_ours_forward.3} parent=0 // pred_check_branch
    %14 = sbr.rel (0) target = $region5
  $region4: #{lenet5_ours_forward.3} parent=0 // pred_region
    _
  $region5: #{lenet5_ours_forward.3} parent=0 // pred_fallthru
    _
  // Predicated region
  $region6: #{lenet5_ours_forward.3} parent=0 // pred_check
    _
  $region7: #{lenet5_ours_forward.3} parent=0 // pred_check_branch
    %16 = sbr.rel (0) target = $region9
  $region8: #{lenet5_ours_forward.3} parent=0 // pred_region
    _
  $region9: #{lenet5_ours_forward.3} parent=0 // pred_fallthru
    _
  // Predicated region
  $region10: #{lenet5_ours_forward.3} parent=0 // pred_check
    _
  $region11: #{lenet5_ours_forward.3} parent=0 // pred_check_branch
    %18 = sbr.rel (0) target = $region13
  $region12: #{lenet5_ours_forward.3} parent=0 // pred_region
    _
  $region13: #{lenet5_ours_forward.3} parent=0 // pred_fallthru
    _
  // Predicated region
  $region14: #{lenet5_ours_forward.3} parent=0 // pred_check
    _
  $region15: #{lenet5_ours_forward.3} parent=0 // pred_check_branch
    %20 = sbr.rel (0) target = $region17
  $region16: #{lenet5_ours_forward.3} parent=0 // pred_region
    _
  $region17: #{lenet5_ours_forward.3} parent=0 // pred_fallthru
    _
  // Predicated region
  $region18: #{lenet5_ours_forward.3} parent=0 // pred_check
    _
  $region19: #{lenet5_ours_forward.3} parent=0 // pred_check_branch
    %22 = sbr.rel (0) target = $region21
  $region20: #{lenet5_ours_forward.3} parent=0 // pred_region
    _
  $region21: #{lenet5_ours_forward.3} parent=0 // pred_fallthru
    _
  // Predicated region
  $region22: #{lenet5_ours_forward.3} parent=0 // pred_check
    _
  $region23: #{lenet5_ours_forward.3} parent=0 // pred_check_branch
    %24 = sbr.rel (0) target = $region25
  $region24: #{lenet5_ours_forward.3} parent=0 // pred_region
    _
  $region25: #{lenet5_ours_forward.3} parent=0 // pred_fallthru
    _
  // Predicated region
  $region26: #{lenet5_ours_forward.3} parent=0 // pred_check
    _
  $region27: #{lenet5_ours_forward.3} parent=0 // pred_check_branch
    %26 = sbr.rel (0) target = $region29
  $region28: #{lenet5_ours_forward.3} parent=0 // pred_region
    _
  $region29: #{lenet5_ours_forward.3} parent=0 // pred_fallthru
    _
  // Predicated region
  $region30: #{lenet5_ours_forward.3} parent=0 // pred_check
    _
  $region31: #{lenet5_ours_forward.3} parent=0 // pred_check_branch
    %28 = sbr.rel (0) target = $region33
  $region32: #{lenet5_ours_forward.3} parent=0 // pred_region
    _
  $region33: #{lenet5_ours_forward.3} parent=0 // pred_fallthru
    _
  %v30 = vld [vmem:[%s1] sm:$0xf]
  %v31 = vld [vmem:[%s1 + $0x4] sm:$0xf]
  %v32 = vld [vmem:[%s1 + $0x8] sm:$0xf]
  %v33 = vld [vmem:[%s1 + $0xc] sm:$0xf]
  %v34 = vld [vmem:[%s1 + $0x10] sm:$0xf]
  %v35 = vld [vmem:[%s1 + $0x14] sm:$0xf]
  %v36 = vld [vmem:[%s1 + $0x18] sm:$0xf]
  %v37 = vld [vmem:[%s1 + $0x1c] sm:$0xf]
  %v38 = vld [vmem:[%s1 + $0x20] sm:$0xf]
  %v39 = vld [vmem:[%s1 + $0x24] sm:$0xf]
  %v40 = vld [vmem:[%s1 + $0x28] sm:$0xf]
  %v41 = vld [vmem:[%s1 + $0x2c] sm:$0xf]
  %v42 = vld [vmem:[%s1 + $0x30] sm:$0xf]
  %v43 = vld [vmem:[%s1 + $0x34] sm:$0xf]
  %v44 = vld [vmem:[%s1 + $0x38] sm:$0xf]
  %v45 = vld [vmem:[%s1 + $0x3c] sm:$0xf]
  %v46 = vld [vmem:[%s1 + $0x40] sm:$0xf]
  %v47 = vld [vmem:[%s1 + $0x44] sm:$0xf]
  %v48 = vld [vmem:[%s1 + $0x48] sm:$0x7]
  %v49 = vld [vmem:[%s0] sm:$0xff]
  %v50 = vld [vmem:[%s0 + $0x8] sm:$0xff]
  %v51 = vld [vmem:[%s0 + $0x10] sm:$0xff]
  %v52 = vld [vmem:[%s0 + $0x18] sm:$0xff]
  %v57 = vunpack.c.l.b16 %v49
  %v58 = vunpack.c.h.b16 %v49
  %v59 = vunpack.c.l.b16 %v50
  %v60 = vunpack.c.h.b16 %v50
  %v61 = vunpack.c.l.b16 %v51
  %v62 = vunpack.c.h.b16 %v51
  %v63 = vunpack.c.l.b16 %v52
  %v64 = vunpack.c.h.b16 %v52
  %v65 = vpack.c.b16 %v59, %v57
  %v66 = vpack.c.b16 %v60, %v58
  %v67 = vpack.c.b16 %v63, %v61
  %v68 = vpack.c.b16 %v64, %v62
  %v90 = vunpack.c.l.b16 %v30
  %v91 = vunpack.c.l.b16 %v31
  %v92 = vunpack.c.l.b16 %v32
  %v93 = vunpack.c.l.b16 %v33
  %v94 = vunpack.c.l.b16 %v34
  %v95 = vunpack.c.l.b16 %v35
  %v96 = vunpack.c.l.b16 %v36
  %v97 = vunpack.c.l.b16 %v37
  %v98 = vunpack.c.l.b16 %v38
  %v99 = vunpack.c.l.b16 %v39
  %v100 = vunpack.c.l.b16 %v40
  %v101 = vunpack.c.l.b16 %v41
  %v102 = vunpack.c.l.b16 %v42
  %v103 = vunpack.c.l.b16 %v43
  %v104 = vunpack.c.l.b16 %v44
  %v105 = vunpack.c.l.b16 %v45
  %v106 = vunpack.c.l.b16 %v46
  %v107 = vunpack.c.l.b16 %v47
  %v108 = vunpack.c.l.b16 %v48
  %v109 = vpack.c.b16 %v91, %v90
  %v110 = vpack.c.b16 %v93, %v92
  %v111 = vpack.c.b16 %v95, %v94
  %v112 = vpack.c.b16 %v97, %v96
  %v113 = vpack.c.b16 %v99, %v98
  %v114 = vpack.c.b16 %v101, %v100
  %v115 = vpack.c.b16 %v103, %v102
  %v116 = vpack.c.b16 %v105, %v104
  %v117 = vpack.c.b16 %v107, %v106
  %v118 = vpack.c.b16 %v108, %v108
  %vm128 = vcmask 179200
  %v130 = vsel %vm128, %v66, 0
  %v133 = vsel %vm128, %v68, 0
  %vm135 = vcmask 1042432
  %v137 = vsel %vm135, %v118, 0
  %139 = vmatprep.subr.bf16.mxu0 0
  %140 = vmatpush1.bf16.msra.mxu0 %v109
  %141 = vmatprep.subr.bf16.mxu0 0
  %142 = vmatpush1.bf16.msra.mxu0 %v110
  %143 = vmatprep.subr.bf16.mxu0 0
  %144 = vmatpush1.bf16.msra.mxu0 %v111
  %145 = vmatprep.subr.bf16.mxu0 0
  %146 = vmatpush1.bf16.msra.mxu0 %v112
  %147 = vmatprep.subr.bf16.mxu0 0
  %148 = vmatpush1.bf16.msra.mxu0 %v113
  %149 = vmatprep.subr.bf16.mxu0 0
  %150 = vmatpush1.bf16.msra.mxu0 %v114
  %151 = vmatprep.subr.bf16.mxu0 0
  %152 = vmatpush1.bf16.msra.mxu0 %v115
  %153 = vmatprep.subr.bf16.mxu0 0
  %154 = vmatpush1.bf16.msra.mxu0 %v116
  %155 = vmatprep.subr.bf16.mxu0 0
  %156 = vmatpush1.bf16.msra.mxu0 %v117
  %157 = vmatprep.subr.bf16.mxu0 0
  %158 = vmatpush1.bf16.msra.mxu0 %v137
  %159 = vmatprep.subr.bf16.mxu0 0
  %160 = vmatpush1.bf16.msra.mxu0 0
  %161 = vmatprep.subr.bf16.mxu0 0
  %162 = vmatpush1.bf16.msra.mxu0 0
  %163 = vmatprep.subr.bf16.mxu0 0
  %164 = vmatpush1.bf16.msra.mxu0 0
  %165 = vmatprep.subr.bf16.mxu0 0
  %166 = vmatpush1.bf16.msra.mxu0 0
  %167 = vmatprep.subr.bf16.mxu0 0
  %168 = vmatpush1.bf16.msra.mxu0 0
  %169 = vmatprep.subr.bf16.mxu0 0
  %170 = vmatpush1.bf16.msra.mxu0 0
  %171 = vmatprep.mubr.bf16.mxu0 %v130
  %172 = vmatmul.mubr.bf16.gmra.mrb[0].mxu0 %v65
  %v173 = vpop.f32.mrb[0].mxu0
  %v174 = vadd.f32 0.0, %v173
  %v175 = vpop.f32.mrb[0].mxu0
  %v176 = vpop.f32.mrb[0].mxu0
  %v177 = vadd.f32 0.0, %v176
  %v178 = vpop.f32.mrb[0].mxu0
  %179 = vmatprep.mubr.bf16.mxu0 %v133
  %180 = vmatmul.mubr.bf16.gmra.mrb[0].mxu0 %v67
  %v181 = vpop.f32.mrb[0].mxu0
  %v182 = vadd.f32 0.0, %v181
  %v183 = vpop.f32.mrb[0].mxu0
  %v184 = vpop.f32.mrb[0].mxu0
  %v185 = vadd.f32 0.0, %v184
  %v186 = vpop.f32.mrb[0].mxu0
  %187 = vdwg.mxu0
  %s188 = scalar_lea.vmem %s0, 32
  %v189 = vld [vmem:[%s188] sm:$0xff]
  %v190 = vld [vmem:[%s188 + $0x8] sm:$0xff]
  %v191 = vld [vmem:[%s188 + $0x10] sm:$0xff]
  %v192 = vld [vmem:[%s188 + $0x18] sm:$0xff]
  %v197 = vunpack.c.l.b16 %v189
  %v198 = vunpack.c.h.b16 %v189
  %v199 = vunpack.c.l.b16 %v190
  %v200 = vunpack.c.h.b16 %v190
  %v201 = vunpack.c.l.b16 %v191
  %v202 = vunpack.c.h.b16 %v191
  %v203 = vunpack.c.l.b16 %v192
  %v204 = vunpack.c.h.b16 %v192
  %v205 = vpack.c.b16 %v199, %v197
  %v206 = vpack.c.b16 %v200, %v198
  %v207 = vpack.c.b16 %v203, %v201
  %v208 = vpack.c.b16 %v204, %v202
  %v212 = vsel %vm128, %v206, 0
  %v215 = vsel %vm128, %v208, 0
  %217 = vmatprep.subr.bf16.mxu0 0
  %218 = vmatpush1.bf16.msra.mxu0 %v109
  %219 = vmatprep.subr.bf16.mxu0 0
  %220 = vmatpush1.bf16.msra.mxu0 %v110
  %221 = vmatprep.subr.bf16.mxu0 0
  %222 = vmatpush1.bf16.msra.mxu0 %v111
  %223 = vmatprep.subr.bf16.mxu0 0
  %224 = vmatpush1.bf16.msra.mxu0 %v112
  %225 = vmatprep.subr.bf16.mxu0 0
  %226 = vmatpush1.bf16.msra.mxu0 %v113
  %227 = vmatprep.subr.bf16.mxu0 0
  %228 = vmatpush1.bf16.msra.mxu0 %v114
  %229 = vmatprep.subr.bf16.mxu0 0
  %230 = vmatpush1.bf16.msra.mxu0 %v115
  %231 = vmatprep.subr.bf16.mxu0 0
  %232 = vmatpush1.bf16.msra.mxu0 %v116
  %233 = vmatprep.subr.bf16.mxu0 0
  %234 = vmatpush1.bf16.msra.mxu0 %v117
  %235 = vmatprep.subr.bf16.mxu0 0
  %236 = vmatpush1.bf16.msra.mxu0 %v137
  %237 = vmatprep.subr.bf16.mxu0 0
  %238 = vmatpush1.bf16.msra.mxu0 0
  %239 = vmatprep.subr.bf16.mxu0 0
  %240 = vmatpush1.bf16.msra.mxu0 0
  %241 = vmatprep.subr.bf16.mxu0 0
  %242 = vmatpush1.bf16.msra.mxu0 0
  %243 = vmatprep.subr.bf16.mxu0 0
  %244 = vmatpush1.bf16.msra.mxu0 0
  %245 = vmatprep.subr.bf16.mxu0 0
  %246 = vmatpush1.bf16.msra.mxu0 0
  %247 = vmatprep.subr.bf16.mxu0 0
  %248 = vmatpush1.bf16.msra.mxu0 0
  %249 = vmatprep.mubr.bf16.mxu0 %v212
  %250 = vmatmul.mubr.bf16.gmra.mrb[0].mxu0 %v205
  %v251 = vpop.f32.mrb[0].mxu0
  %v252 = vadd.f32 0.0, %v251
  %v253 = vpop.f32.mrb[0].mxu0
  %v254 = vpop.f32.mrb[0].mxu0
  %v255 = vadd.f32 0.0, %v254
  %v256 = vpop.f32.mrb[0].mxu0
  %257 = vmatprep.mubr.bf16.mxu0 %v215
  %258 = vmatmul.mubr.bf16.gmra.mrb[0].mxu0 %v207
  %v259 = vpop.f32.mrb[0].mxu0
  %v260 = vadd.f32 0.0, %v259
  %v261 = vpop.f32.mrb[0].mxu0
  %v262 = vpop.f32.mrb[0].mxu0
  %v263 = vadd.f32 0.0, %v262
  %v264 = vpop.f32.mrb[0].mxu0
  %265 = vdwg.mxu0
  %s266 = scalar_lea.vmem %s0, 64
  %v267 = vld [vmem:[%s266] sm:$0xff]
  %v268 = vld [vmem:[%s266 + $0x8] sm:$0xff]
  %v269 = vld [vmem:[%s266 + $0x10] sm:$0xff]
  %v270 = vld [vmem:[%s266 + $0x18] sm:$0xff]
  %v275 = vunpack.c.l.b16 %v267
  %v276 = vunpack.c.h.b16 %v267
  %v277 = vunpack.c.l.b16 %v268
  %v278 = vunpack.c.h.b16 %v268
  %v279 = vunpack.c.l.b16 %v269
  %v280 = vunpack.c.h.b16 %v269
  %v281 = vunpack.c.l.b16 %v270
  %v282 = vunpack.c.h.b16 %v270
  %v283 = vpack.c.b16 %v277, %v275
  %v284 = vpack.c.b16 %v278, %v276
  %v285 = vpack.c.b16 %v281, %v279
  %v286 = vpack.c.b16 %v282, %v280
  %v290 = vsel %vm128, %v284, 0
  %v293 = vsel %vm128, %v286, 0
  %295 = vmatprep.subr.bf16.mxu0 0
  %296 = vmatpush1.bf16.msra.mxu0 %v109
  %297 = vmatprep.subr.bf16.mxu0 0
  %298 = vmatpush1.bf16.msra.mxu0 %v110
  %299 = vmatprep.subr.bf16.mxu0 0
  %300 = vmatpush1.bf16.msra.mxu0 %v111
  %301 = vmatprep.subr.bf16.mxu0 0
  %302 = vmatpush1.bf16.msra.mxu0 %v112
  %303 = vmatprep.subr.bf16.mxu0 0
  %304 = vmatpush1.bf16.msra.mxu0 %v113
  %305 = vmatprep.subr.bf16.mxu0 0
  %306 = vmatpush1.bf16.msra.mxu0 %v114
  %307 = vmatprep.subr.bf16.mxu0 0
  %308 = vmatpush1.bf16.msra.mxu0 %v115
  %309 = vmatprep.subr.bf16.mxu0 0
  %310 = vmatpush1.bf16.msra.mxu0 %v116
  %311 = vmatprep.subr.bf16.mxu0 0
  %312 = vmatpush1.bf16.msra.mxu0 %v117
  %313 = vmatprep.subr.bf16.mxu0 0
  %314 = vmatpush1.bf16.msra.mxu0 %v137
  %315 = vmatprep.subr.bf16.mxu0 0
  %316 = vmatpush1.bf16.msra.mxu0 0
  %317 = vmatprep.subr.bf16.mxu0 0
  %318 = vmatpush1.bf16.msra.mxu0 0
  %319 = vmatprep.subr.bf16.mxu0 0
  %320 = vmatpush1.bf16.msra.mxu0 0
  %321 = vmatprep.subr.bf16.mxu0 0
  %322 = vmatpush1.bf16.msra.mxu0 0
  %323 = vmatprep.subr.bf16.mxu0 0
  %324 = vmatpush1.bf16.msra.mxu0 0
  %325 = vmatprep.subr.bf16.mxu0 0
  %326 = vmatpush1.bf16.msra.mxu0 0
  %327 = vmatprep.mubr.bf16.mxu0 %v290
  %328 = vmatmul.mubr.bf16.gmra.mrb[0].mxu0 %v283
  %v329 = vpop.f32.mrb[0].mxu0
  %v330 = vadd.f32 0.0, %v329
  %v331 = vpop.f32.mrb[0].mxu0
  %v332 = vpop.f32.mrb[0].mxu0
  %v333 = vadd.f32 0.0, %v332
  %v334 = vpop.f32.mrb[0].mxu0
  %335 = vmatprep.mubr.bf16.mxu0 %v293
  %336 = vmatmul.mubr.bf16.gmra.mrb[0].mxu0 %v285
  %v337 = vpop.f32.mrb[0].mxu0
  %v338 = vadd.f32 0.0, %v337
  %v339 = vpop.f32.mrb[0].mxu0
  %v340 = vpop.f32.mrb[0].mxu0
  %v341 = vadd.f32 0.0, %v340
  %v342 = vpop.f32.mrb[0].mxu0
  %343 = vdwg.mxu0
  %s344 = scalar_lea.vmem %s0, 96
  %v345 = vld [vmem:[%s344] sm:$0xff]
  %v346 = vld [vmem:[%s344 + $0x8] sm:$0xff]
  %v347 = vld [vmem:[%s344 + $0x10] sm:$0xff]
  %v348 = vld [vmem:[%s344 + $0x18] sm:$0xff]
  %v353 = vunpack.c.l.b16 %v345
  %v354 = vunpack.c.h.b16 %v345
  %v355 = vunpack.c.l.b16 %v346
  %v356 = vunpack.c.h.b16 %v346
  %v357 = vunpack.c.l.b16 %v347
  %v358 = vunpack.c.h.b16 %v347
  %v359 = vunpack.c.l.b16 %v348
  %v360 = vunpack.c.h.b16 %v348
  %v361 = vpack.c.b16 %v355, %v353
  %v362 = vpack.c.b16 %v356, %v354
  %v363 = vpack.c.b16 %v359, %v357
  %v364 = vpack.c.b16 %v360, %v358
  %v368 = vsel %vm128, %v362, 0
  %v371 = vsel %vm128, %v364, 0
  %373 = vmatprep.subr.bf16.mxu0 0
  %374 = vmatpush1.bf16.msra.mxu0 %v109
  %375 = vmatprep.subr.bf16.mxu0 0
  %376 = vmatpush1.bf16.msra.mxu0 %v110
  %377 = vmatprep.subr.bf16.mxu0 0
  %378 = vmatpush1.bf16.msra.mxu0 %v111
  %379 = vmatprep.subr.bf16.mxu0 0
  %380 = vmatpush1.bf16.msra.mxu0 %v112
  %381 = vmatprep.subr.bf16.mxu0 0
  %382 = vmatpush1.bf16.msra.mxu0 %v113
  %383 = vmatprep.subr.bf16.mxu0 0
  %384 = vmatpush1.bf16.msra.mxu0 %v114
  %385 = vmatprep.subr.bf16.mxu0 0
  %386 = vmatpush1.bf16.msra.mxu0 %v115
  %387 = vmatprep.subr.bf16.mxu0 0
  %388 = vmatpush1.bf16.msra.mxu0 %v116
  %389 = vmatprep.subr.bf16.mxu0 0
  %390 = vmatpush1.bf16.msra.mxu0 %v117
  %391 = vmatprep.subr.bf16.mxu0 0
  %392 = vmatpush1.bf16.msra.mxu0 %v137
  %393 = vmatprep.subr.bf16.mxu0 0
  %394 = vmatpush1.bf16.msra.mxu0 0
  %395 = vmatprep.subr.bf16.mxu0 0
  %396 = vmatpush1.bf16.msra.mxu0 0
  %397 = vmatprep.subr.bf16.mxu0 0
  %398 = vmatpush1.bf16.msra.mxu0 0
  %399 = vmatprep.subr.bf16.mxu0 0
  %400 = vmatpush1.bf16.msra.mxu0 0
  %401 = vmatprep.subr.bf16.mxu0 0
  %402 = vmatpush1.bf16.msra.mxu0 0
  %403 = vmatprep.subr.bf16.mxu0 0
  %404 = vmatpush1.bf16.msra.mxu0 0
  %405 = vmatprep.mubr.bf16.mxu0 %v368
  %406 = vmatmul.mubr.bf16.gmra.mrb[0].mxu0 %v361
  %v407 = vpop.f32.mrb[0].mxu0
  %v408 = vadd.f32 0.0, %v407
  %v409 = vpop.f32.mrb[0].mxu0
  %v410 = vpop.f32.mrb[0].mxu0
  %v411 = vadd.f32 0.0, %v410
  %v412 = vpop.f32.mrb[0].mxu0
  %413 = vmatprep.mubr.bf16.mxu0 %v371
  %414 = vmatmul.mubr.bf16.gmra.mrb[0].mxu0 %v363
  %v415 = vpop.f32.mrb[0].mxu0
  %v416 = vadd.f32 0.0, %v415
  %v417 = vpop.f32.mrb[0].mxu0
  %v418 = vpop.f32.mrb[0].mxu0
  %v419 = vadd.f32 0.0, %v418
  %v420 = vpop.f32.mrb[0].mxu0
  %421 = vdwg.mxu0
  %v422 = vadd.f32 %v174, %v252
  %v423 = vadd.f32 %v177, %v255
  %v424 = vadd.f32 %v182, %v260
  %v425 = vadd.f32 %v185, %v263
  %v426 = vadd.f32 %v422, %v330
  %v427 = vadd.f32 %v423, %v333
  %v428 = vadd.f32 %v424, %v338
  %v429 = vadd.f32 %v425, %v341
  %v430 = vadd.f32 %v426, %v408
  %v431 = vadd.f32 %v427, %v411
  %v432 = vadd.f32 %v428, %v416
  %v433 = vadd.f32 %v429, %v419
  %vm434 = vcmask 130048
  %v435 = vsel %vm434, %v430, 0.0
  %v436 = vsel %vm434, %v431, 0.0
  %v437 = vadd.f32 %v435, %v436
  %v438 = vsel %vm434, %v432, 0.0
  %v439 = vadd.f32 %v437, %v438
  %v440 = vsel %vm434, %v433, 0.0
  %v441 = vadd.f32 %v439, %v440
  %v442 = vrot.slane %v441, 4
  %v443 = vadd.f32 %v441, %v442
  %v444 = vrot.slane %v443, 2
  %v445 = vadd.f32 %v443, %v444
  %v446 = vrot.slane %v445, 1
  %v447 = vadd.f32 %v445, %v446
  %v448 = vrcp.pop 32.0
  %v449 = vmul.f32 %v447, %v448
  %v450 = vmul.f32 %v449, 0.25
  %v451 = vsub.f32 %v174, %v450
  %v452 = vsub.f32 %v177, %v450
  %v453 = vsub.f32 %v182, %v450
  %v454 = vsub.f32 %v185, %v450
  %v455 = vmul.f32 %v451, %v451
  %v456 = vmul.f32 %v452, %v452
  %v457 = vmul.f32 %v453, %v453
  %v458 = vmul.f32 %v454, %v454
  %v459 = vsel %vm434, %v455, 0.0
  %v460 = vsel %vm434, %v456, 0.0
  %v461 = vadd.f32 %v459, %v460
  %v462 = vsel %vm434, %v457, 0.0
  %v463 = vadd.f32 %v461, %v462
  %v464 = vsel %vm434, %v458, 0.0
  %v465 = vadd.f32 %v463, %v464
  %v466 = vrot.slane %v465, 4
  %v467 = vadd.f32 %v465, %v466
  %v468 = vrot.slane %v467, 2
  %v469 = vadd.f32 %v467, %v468
  %v470 = vrot.slane %v469, 1
  %v471 = vadd.f32 %v469, %v470
  %v472 = vmul.f32 %v471, %v448
  %v473 = vsub.f32 %v252, %v450
  %v474 = vsub.f32 %v255, %v450
  %v475 = vsub.f32 %v260, %v450
  %v476 = vsub.f32 %v263, %v450
  %v477 = vmul.f32 %v473, %v473
  %v478 = vmul.f32 %v474, %v474
  %v479 = vmul.f32 %v475, %v475
  %v480 = vmul.f32 %v476, %v476
  %v481 = vsel %vm434, %v477, 0.0
  %v482 = vsel %vm434, %v478, 0.0
  %v483 = vadd.f32 %v481, %v482
  %v484 = vsel %vm434, %v479, 0.0
  %v485 = vadd.f32 %v483, %v484
  %v486 = vsel %vm434, %v480, 0.0
  %v487 = vadd.f32 %v485, %v486
  %v488 = vrot.slane %v487, 4
  %v489 = vadd.f32 %v487, %v488
  %v490 = vrot.slane %v489, 2
  %v491 = vadd.f32 %v489, %v490
  %v492 = vrot.slane %v491, 1
  %v493 = vadd.f32 %v491, %v492
  %v494 = vmul.f32 %v493, %v448
  %v495 = vadd.f32 %v472, %v494
  %v496 = vsub.f32 %v330, %v450
  %v497 = vsub.f32 %v333, %v450
  %v498 = vsub.f32 %v338, %v450
  %v499 = vsub.f32 %v341, %v450
  %v500 = vmul.f32 %v496, %v496
  %v501 = vmul.f32 %v497, %v497
  %v502 = vmul.f32 %v498, %v498
  %v503 = vmul.f32 %v499, %v499
  %v504 = vsel %vm434, %v500, 0.0
  %v505 = vsel %vm434, %v501, 0.0
  %v506 = vadd.f32 %v504, %v505
  %v507 = vsel %vm434, %v502, 0.0
  %v508 = vadd.f32 %v506, %v507
  %v509 = vsel %vm434, %v503, 0.0
  %v510 = vadd.f32 %v508, %v509
  %v511 = vrot.slane %v510, 4
  %v512 = vadd.f32 %v510, %v511
  %v513 = vrot.slane %v512, 2
  %v514 = vadd.f32 %v512, %v513
  %v515 = vrot.slane %v514, 1
  %v516 = vadd.f32 %v514, %v515
  %v517 = vmul.f32 %v516, %v448
  %v518 = vadd.f32 %v495, %v517
  %v519 = vsub.f32 %v408, %v450
  %v520 = vsub.f32 %v411, %v450
  %v521 = vsub.f32 %v416, %v450
  %v522 = vsub.f32 %v419, %v450
  %v523 = vmul.f32 %v519, %v519
  %v524 = vmul.f32 %v520, %v520
  %v525 = vmul.f32 %v521, %v521
  %v526 = vmul.f32 %v522, %v522
  %v527 = vsel %vm434, %v523, 0.0
  %v528 = vsel %vm434, %v524, 0.0
  %v529 = vadd.f32 %v527, %v528
  %v530 = vsel %vm434, %v525, 0.0
  %v531 = vadd.f32 %v529, %v530
  %v532 = vsel %vm434, %v526, 0.0
  %v533 = vadd.f32 %v531, %v532
  %v534 = vrot.slane %v533, 4
  %v535 = vadd.f32 %v533, %v534
  %v536 = vrot.slane %v535, 2
  %v537 = vadd.f32 %v535, %v536
  %v538 = vrot.slane %v537, 1
  %v539 = vadd.f32 %v537, %v538
  %v540 = vmul.f32 %v539, %v448
  %v541 = vadd.f32 %v518, %v540
  %v542 = vmul.f32 %v541, 0.25
  %v543 = vmul.f32 %v430, 0.25
  %v544 = vmul.f32 %v431, 0.25
  %v545 = vmul.f32 %v432, 0.25
  %v546 = vmul.f32 %v433, 0.25
  %v547 = vsub.f32 %v543, %v450
  %v548 = vsub.f32 %v544, %v450
  %v549 = vsub.f32 %v545, %v450
  %v550 = vsub.f32 %v546, %v450
  %v551 = vadd.f32 %v542, 1e-05
  %v552 = vrsqrt.pop %v551
  %v553 = vmul.f32 %v547, %v552
  %v554 = vmul.f32 %v548, %v552
  %v555 = vmul.f32 %v549, %v552
  %v556 = vmul.f32 %v550, %v552
  %v557 = vmax.f32 %v553, 0.0
  %v558 = vmax.f32 %v554, 0.0
  %v559 = vmax.f32 %v555, 0.0
  %v560 = vmax.f32 %v556, 0.0
  %561 = vst.msk [vmem:[#allocation2] sm:$0xff] %vm434, %v557
  %562 = vst.msk [vmem:[#allocation2 + $0x8] sm:$0xff] %vm434, %v558
  %563 = vst.msk [vmem:[#allocation2 + $0x10] sm:$0xff] %vm434, %v559
  %564 = vst.msk [vmem:[#allocation2 + $0x18] sm:$0xff] %vm434, %v560
  %v565 = vld [vmem:[#allocation2] sm:$0x3]
  %vm566 = vcmask 123904
  %567 = vst.msk [vmem:[#allocation3] sm:$0x3] %vm566, %v565
  %v568 = vld [vmem:[#allocation2 + $0x2] sm:$0x3]
  %v571 = vunpack.c.l.s4 1983009808
  %v572 = vunpack.c.0.s8 %v571
  %v573 = vlaneseq
  %v574 = vshrl.u32 %v573, 7
  %v575 = vsub.s32 %v572, %v574
  %v576 = vrot.slane %v568, %v575
  %577 = vrot.lane.b32.xlu0 %v576, 16
  %v578 = vpop.permute.xlu0 %577
  %vm580 = vcmask 255104
  %581 = vst.msk [vmem:[#allocation3] sm:$0x3] %vm580, %v578
  %v582 = vld [vmem:[#allocation2 + $0x4] sm:$0x3]
  %v585 = vunpack.c.l.s4 1983009808
  %v586 = vunpack.c.0.s8 %v585
  %v587 = vlaneseq
  %v588 = vshrl.u32 %v587, 7
  %v589 = vsub.s32 %v586, %v588
  %v590 = vrot.slane %v582, %v589
  %591 = vrot.lane.b32.xlu0 %v590, 32
  %v592 = vpop.permute.xlu0 %591
  %vm594 = vcmask 386304
  %595 = vst.msk [vmem:[#allocation3] sm:$0x3] %vm594, %v592
  %v596 = vld [vmem:[#allocation2 + $0x6] sm:$0x3]
  %v599 = vunpack.c.l.s4 1983009808
  %v600 = vunpack.c.0.s8 %v599
  %v601 = vlaneseq
  %v602 = vshrl.u32 %v601, 7
  %v603 = vsub.s32 %v600, %v602
  %v604 = vrot.slane %v596, %v603
  %605 = vrot.lane.b32.xlu0 %v604, 48
  %v606 = vpop.permute.xlu0 %605
  %vm608 = vcmask 517504
  %609 = vst.msk [vmem:[#allocation3] sm:$0x3] %vm608, %v606
  %v610 = vld [vmem:[#allocation2 + $0x8] sm:$0x3]
  %v613 = vunpack.c.l.s4 1983009808
  %v614 = vunpack.c.0.s8 %v613
  %v615 = vlaneseq
  %v616 = vshrl.u32 %v615, 7
  %v617 = vsub.s32 %v614, %v616
  %v618 = vrot.slane %v610, %v617
  %619 = vrot.lane.b32.xlu0 %v618, 64
  %v620 = vpop.permute.xlu0 %619
  %vm622 = vcmask 648704
  %623 = vst.msk [vmem:[#allocation3] sm:$0x3] %vm622, %v620
  %v624 = vld [vmem:[#allocation2 + $0xa] sm:$0x3]
  %v627 = vunpack.c.l.s4 1983009808
  %v628 = vunpack.c.0.s8 %v627
  %v629 = vlaneseq
  %v630 = vshrl.u32 %v629, 7
  %v631 = vsub.s32 %v628, %v630
  %v632 = vrot.slane %v624, %v631
  %633 = vrot.lane.b32.xlu0 %v632, 80
  %v634 = vpop.permute.xlu0 %633
  %vm636 = vcmask 779904
  %637 = vst.msk [vmem:[#allocation3] sm:$0x3] %vm636, %v634
  %v638 = vld [vmem:[#allocation2 + $0xc] sm:$0x3]
  %v641 = vunpack.c.l.s4 1983009808
  %v642 = vunpack.c.0.s8 %v641
  %v643 = vlaneseq
  %v644 = vshrl.u32 %v643, 7
  %v645 = vsub.s32 %v642, %v644
  %v646 = vrot.slane %v638, %v645
  %647 = vrot.lane.b32.xlu0 %v646, 96
  %v648 = vpop.permute.xlu0 %647
  %vm650 = vcmask 911104
  %651 = vst.msk [vmem:[#allocation3] sm:$0x3] %vm650, %v648
  %v652 = vld [vmem:[#allocation2 + $0xe] sm:$0x3]
  %v655 = vunpack.c.l.s4 1983009808
  %v656 = vunpack.c.0.s8 %v655
  %v657 = vlaneseq
  %v658 = vshrl.u32 %v657, 7
  %v659 = vsub.s32 %v656, %v658
  %v660 = vrot.slane %v652, %v659
  %661 = vrot.lane.b32.xlu0 %v660, 112
  %v662 = vpop.permute.xlu0 %661
  %vm664 = vcmask 1042304
  %665 = vst.msk [vmem:[#allocation3] sm:$0x3] %vm664, %v662
  %v666 = vld [vmem:[#allocation2 + $0x10] sm:$0x3]
  %667 = vst.msk [vmem:[#allocation3 + $0x2] sm:$0x3] %vm566, %v666
  %v668 = vld [vmem:[#allocation2 + $0x12] sm:$0x3]
  %v671 = vunpack.c.l.s4 1983009808
  %v672 = vunpack.c.0.s8 %v671
  %v673 = vlaneseq
  %v674 = vshrl.u32 %v673, 7
  %v675 = vsub.s32 %v672, %v674
  %v676 = vrot.slane %v668, %v675
  %677 = vrot.lane.b32.xlu0 %v676, 16
  %v678 = vpop.permute.xlu0 %677
  %680 = vst.msk [vmem:[#allocation3 + $0x2] sm:$0x3] %vm580, %v678
  %v681 = vld [vmem:[#allocation2 + $0x14] sm:$0x3]
  %v684 = vunpack.c.l.s4 1983009808
  %v685 = vunpack.c.0.s8 %v684
  %v686 = vlaneseq
  %v687 = vshrl.u32 %v686, 7
  %v688 = vsub.s32 %v685, %v687
  %v689 = vrot.slane %v681, %v688
  %690 = vrot.lane.b32.xlu0 %v689, 32
  %v691 = vpop.permute.xlu0 %690
  %693 = vst.msk [vmem:[#allocation3 + $0x2] sm:$0x3] %vm594, %v691
  %v694 = vld [vmem:[#allocation2 + $0x16] sm:$0x3]
  %v697 = vunpack.c.l.s4 1983009808
  %v698 = vunpack.c.0.s8 %v697
  %v699 = vlaneseq
  %v700 = vshrl.u32 %v699, 7
  %v701 = vsub.s32 %v698, %v700
  %v702 = vrot.slane %v694, %v701
  %703 = vrot.lane.b32.xlu0 %v702, 48
  %v704 = vpop.permute.xlu0 %703
  %706 = vst.msk [vmem:[#allocation3 + $0x2] sm:$0x3] %vm608, %v704
  %v707 = vld [vmem:[#allocation2 + $0x18] sm:$0x3]
  %v710 = vunpack.c.l.s4 1983009808
  %v711 = vunpack.c.0.s8 %v710
  %v712 = vlaneseq
  %v713 = vshrl.u32 %v712, 7
  %v714 = vsub.s32 %v711, %v713
  %v715 = vrot.slane %v707, %v714
  %716 = vrot.lane.b32.xlu0 %v715, 64
  %v717 = vpop.permute.xlu0 %716
  %719 = vst.msk [vmem:[#allocation3 + $0x2] sm:$0x3] %vm622, %v717
  %v720 = vld [vmem:[#allocation2 + $0x1a] sm:$0x3]
  %v723 = vunpack.c.l.s4 1983009808
  %v724 = vunpack.c.0.s8 %v723
  %v725 = vlaneseq
  %v726 = vshrl.u32 %v725, 7
  %v727 = vsub.s32 %v724, %v726
  %v728 = vrot.slane %v720, %v727
  %729 = vrot.lane.b32.xlu0 %v728, 80
  %v730 = vpop.permute.xlu0 %729
  %732 = vst.msk [vmem:[#allocation3 + $0x2] sm:$0x3] %vm636, %v730
  %v733 = vld [vmem:[#allocation2 + $0x1c] sm:$0x3]
  %v736 = vunpack.c.l.s4 1983009808
  %v737 = vunpack.c.0.s8 %v736
  %v738 = vlaneseq
  %v739 = vshrl.u32 %v738, 7
  %v740 = vsub.s32 %v737, %v739
  %v741 = vrot.slane %v733, %v740
  %742 = vrot.lane.b32.xlu0 %v741, 96
  %v743 = vpop.permute.xlu0 %742
  %745 = vst.msk [vmem:[#allocation3 + $0x2] sm:$0x3] %vm650, %v743
  %v746 = vld [vmem:[#allocation2 + $0x1e] sm:$0x3]
  %v749 = vunpack.c.l.s4 1983009808
  %v750 = vunpack.c.0.s8 %v749
  %v751 = vlaneseq
  %v752 = vshrl.u32 %v751, 7
  %v753 = vsub.s32 %v750, %v752
  %v754 = vrot.slane %v746, %v753
  %755 = vrot.lane.b32.xlu0 %v754, 112
  %v756 = vpop.permute.xlu0 %755
  %758 = vst.msk [vmem:[#allocation3 + $0x2] sm:$0x3] %vm664, %v756
  %v759 = vld [vmem:[#allocation3] sm:$0xf]
  %v762 = vunpack.c.l.s4 1983009808
  %v763 = vunpack.c.0.s8 %v762
  %v764 = vlaneseq
  %v765 = vshrl.u32 %v764, 7
  %v766 = vsub.s32 %v763, %v765
  %v767 = vrot.slane %v759, %v766
  %v768 = vcombine.high %v767, %v767
  %v771 = vpack.c.bf16 %v767, %v767
  %v772 = vpack.c.bf16 %v768, %v768
  %v773 = vld [vmem:[%s2] sm:$0xff]
  %v774 = vld [vmem:[%s2 + $0x8] sm:$0xff]
  %v775 = vld [vmem:[%s2 + $0x10] sm:$0xf]
  %v776 = vld [vmem:[%s2 + $0x14] sm:$0xff]
  %v777 = vld [vmem:[%s2 + $0x1c] sm:$0xff]
  %v778 = vld [vmem:[%s2 + $0x24] sm:$0xf]
  %v779 = vld [vmem:[%s2 + $0x28] sm:$0xff]
  %v780 = vld [vmem:[%s2 + $0x30] sm:$0xff]
  %v781 = vld [vmem:[%s2 + $0x38] sm:$0xf]
  %v782 = vld [vmem:[%s2 + $0x3c] sm:$0xff]
  %v783 = vld [vmem:[%s2 + $0x44] sm:$0xff]
  %v784 = vld [vmem:[%s2 + $0x4c] sm:$0xf]
  %v785 = vld [vmem:[%s2 + $0x50] sm:$0xff]
  %v786 = vld [vmem:[%s2 + $0x58] sm:$0xff]
  %v787 = vld [vmem:[%s2 + $0x60] sm:$0xf]
  %v788 = vld [vmem:[%s2 + $0x64] sm:$0xff]
  %v789 = vld [vmem:[%s2 + $0x6c] sm:$0xff]
  %v790 = vld [vmem:[%s2 + $0x74] sm:$0xf]
  %v791 = vld [vmem:[%s2 + $0x78] sm:$0xff]
  %v792 = vld [vmem:[%s2 + $0x80] sm:$0xff]
  %v793 = vld [vmem:[%s2 + $0x88] sm:$0xf]
  %v794 = vld [vmem:[%s2 + $0x8c] sm:$0xff]
  %v795 = vld [vmem:[%s2 + $0x94] sm:$0xff]
  %v796 = vld [vmem:[%s2 + $0x9c] sm:$0xf]
  %v797 = vld [vmem:[%s2 + $0xa0] sm:$0xff]
  %v798 = vld [vmem:[%s2 + $0xa8] sm:$0xff]
  %v799 = vld [vmem:[%s2 + $0xb0] sm:$0xf]
  %v800 = vld [vmem:[%s2 + $0xb4] sm:$0xff]
  %v801 = vld [vmem:[%s2 + $0xbc] sm:$0xff]
  %v802 = vld [vmem:[%s2 + $0xc4] sm:$0xf]
  %v803 = vld [vmem:[%s2 + $0xc8] sm:$0xff]
  %v804 = vld [vmem:[%s2 + $0xd0] sm:$0xff]
  %v805 = vld [vmem:[%s2 + $0xd8] sm:$0xf]
  %v806 = vld [vmem:[%s2 + $0xdc] sm:$0xff]
  %v807 = vld [vmem:[%s2 + $0xe4] sm:$0xff]
  %v808 = vld [vmem:[%s2 + $0xec] sm:$0xf]
  %v809 = vld [vmem:[%s2 + $0xf0] sm:$0xff]
  %v810 = vld [vmem:[%s2 + $0xf8] sm:$0xff]
  %v811 = vld [vmem:[%s2 + $0x100] sm:$0xf]
  %v812 = vld [vmem:[%s2 + $0x104] sm:$0xff]
  %v813 = vld [vmem:[%s2 + $0x10c] sm:$0xff]
  %v814 = vld [vmem:[%s2 + $0x114] sm:$0xf]
  %v815 = vld [vmem:[%s2 + $0x118] sm:$0xff]
  %v816 = vld [vmem:[%s2 + $0x120] sm:$0xff]
  %v817 = vld [vmem:[%s2 + $0x128] sm:$0xf]
  %v818 = vld [vmem:[%s2 + $0x12c] sm:$0xff]
  %v819 = vld [vmem:[%s2 + $0x134] sm:$0xff]
  %v820 = vld [vmem:[%s2 + $0x13c] sm:$0xf]
  %v821 = vld [vmem:[%s2 + $0x140] sm:$0xff]
  %v822 = vld [vmem:[%s2 + $0x148] sm:$0xff]
  %v823 = vld [vmem:[%s2 + $0x150] sm:$0xf]
  %v824 = vld [vmem:[%s2 + $0x154] sm:$0xff]
  %v825 = vld [vmem:[%s2 + $0x15c] sm:$0xff]
  %v826 = vld [vmem:[%s2 + $0x164] sm:$0xf]
  %v827 = vld [vmem:[%s2 + $0x168] sm:$0xff]
  %v828 = vld [vmem:[%s2 + $0x170] sm:$0xff]
  %v829 = vld [vmem:[%s2 + $0x178] sm:$0xf]
  %v830 = vld [vmem:[%s2 + $0x17c] sm:$0xff]
  %v831 = vld [vmem:[%s2 + $0x184] sm:$0xff]
  %v832 = vld [vmem:[%s2 + $0x18c] sm:$0xf]
  %v833 = vld [vmem:[%s2 + $0x190] sm:$0xff]
  %v834 = vld [vmem:[%s2 + $0x198] sm:$0xff]
  %v835 = vld [vmem:[%s2 + $0x1a0] sm:$0xf]
  %v836 = vld [vmem:[%s2 + $0x1a4] sm:$0xff]
  %v837 = vld [vmem:[%s2 + $0x1ac] sm:$0xff]
  %v838 = vld [vmem:[%s2 + $0x1b4] sm:$0xf]
  %v839 = vld [vmem:[%s2 + $0x1b8] sm:$0xff]
  %v840 = vld [vmem:[%s2 + $0x1c0] sm:$0xff]
  %v841 = vld [vmem:[%s2 + $0x1c8] sm:$0xf]
  %v842 = vld [vmem:[%s2 + $0x1cc] sm:$0xff]
  %v843 = vld [vmem:[%s2 + $0x1d4] sm:$0xff]
  %v844 = vld [vmem:[%s2 + $0x1dc] sm:$0xf]
  %v845 = vld [vmem:[%s2 + $0x1e0] sm:$0xff]
  %v846 = vld [vmem:[%s2 + $0x1e8] sm:$0xff]
  %v847 = vld [vmem:[%s2 + $0x1f0] sm:$0xf]
  %v848 = vld [vmem:[%s2 + $0x1f4] sm:$0xff]
  %v849 = vld [vmem:[%s2 + $0x1fc] sm:$0xff]
  %v850 = vld [vmem:[%s2 + $0x204] sm:$0xf]
  %v851 = vld [vmem:[%s2 + $0x208] sm:$0xff]
  %v852 = vld [vmem:[%s2 + $0x210] sm:$0xff]
  %v853 = vld [vmem:[%s2 + $0x218] sm:$0xf]
  %v854 = vld [vmem:[%s2 + $0x21c] sm:$0xff]
  %v855 = vld [vmem:[%s2 + $0x224] sm:$0xff]
  %v856 = vld [vmem:[%s2 + $0x22c] sm:$0xf]
  %v857 = vld [vmem:[%s2 + $0x230] sm:$0xff]
  %v858 = vld [vmem:[%s2 + $0x238] sm:$0xff]
  %v859 = vld [vmem:[%s2 + $0x240] sm:$0xf]
  %v860 = vld [vmem:[%s2 + $0x244] sm:$0xff]
  %v861 = vld [vmem:[%s2 + $0x24c] sm:$0xff]
  %v862 = vld [vmem:[%s2 + $0x254] sm:$0xf]
  %v863 = vld [vmem:[%s2 + $0x258] sm:$0xff]
  %v864 = vld [vmem:[%s2 + $0x260] sm:$0xff]
  %v865 = vld [vmem:[%s2 + $0x268] sm:$0xf]
  %v866 = vld [vmem:[%s2 + $0x26c] sm:$0xff]
  %v867 = vld [vmem:[%s2 + $0x274] sm:$0xff]
  %v868 = vld [vmem:[%s2 + $0x27c] sm:$0xf]
  %v869 = vld [vmem:[%s3] sm:$0x1f]
  %v871 = vlaneseq
  %v872 = vshrl.u32 %v871, 7
  %v873 = vsub.s32 0, %v872
  %v874 = vrot.slane %v869, %v873
  %v875 = vlaneseq
  %v876 = vshrl.u32 %v875, 7
  %v877 = vsub.s32 1, %v876
  %v878 = vrot.slane %v869, %v877
  %v879 = vlaneseq
  %v880 = vshrl.u32 %v879, 7
  %v881 = vsub.s32 2, %v880
  %v882 = vrot.slane %v869, %v881
  %v883 = vlaneseq
  %v884 = vshrl.u32 %v883, 7
  %v885 = vsub.s32 3, %v884
  %v886 = vrot.slane %v869, %v885
  %v887 = vlaneseq
  %v888 = vshrl.u32 %v887, 7
  %v889 = vsub.s32 4, %v888
  %v890 = vrot.slane %v869, %v889
  %v992 = vunpack.c.l.b16 %v773
  %v993 = vunpack.c.h.b16 %v773
  %v994 = vunpack.c.l.b16 %v774
  %v995 = vunpack.c.h.b16 %v774
  %v996 = vunpack.c.l.b16 %v775
  %v997 = vunpack.c.l.b16 %v776
  %v998 = vunpack.c.h.b16 %v776
  %v999 = vunpack.c.l.b16 %v777
  %v1000 = vunpack.c.h.b16 %v777
  %v1001 = vunpack.c.l.b16 %v778
  %v1002 = vunpack.c.l.b16 %v779
  %v1003 = vunpack.c.h.b16 %v779
  %v1004 = vunpack.c.l.b16 %v780
  %v1005 = vunpack.c.h.b16 %v780
  %v1006 = vunpack.c.l.b16 %v781
  %v1007 = vunpack.c.l.b16 %v782
  %v1008 = vunpack.c.h.b16 %v782
  %v1009 = vunpack.c.l.b16 %v783
  %v1010 = vunpack.c.h.b16 %v783
  %v1011 = vunpack.c.l.b16 %v784
  %v1012 = vunpack.c.l.b16 %v785
  %v1013 = vunpack.c.h.b16 %v785
  %v1014 = vunpack.c.l.b16 %v786
  %v1015 = vunpack.c.h.b16 %v786
  %v1016 = vunpack.c.l.b16 %v787
  %v1017 = vunpack.c.l.b16 %v788
  %v1018 = vunpack.c.h.b16 %v788
  %v1019 = vunpack.c.l.b16 %v789
  %v1020 = vunpack.c.h.b16 %v789
  %v1021 = vunpack.c.l.b16 %v790
  %v1022 = vunpack.c.l.b16 %v791
  %v1023 = vunpack.c.h.b16 %v791
  %v1024 = vunpack.c.l.b16 %v792
  %v1025 = vunpack.c.h.b16 %v792
  %v1026 = vunpack.c.l.b16 %v793
  %v1027 = vunpack.c.l.b16 %v794
  %v1028 = vunpack.c.h.b16 %v794
  %v1029 = vunpack.c.l.b16 %v795
  %v1030 = vunpack.c.h.b16 %v795
  %v1031 = vunpack.c.l.b16 %v796
  %v1032 = vunpack.c.l.b16 %v797
  %v1033 = vunpack.c.h.b16 %v797
  %v1034 = vunpack.c.l.b16 %v798
  %v1035 = vunpack.c.h.b16 %v798
  %v1036 = vunpack.c.l.b16 %v799
  %v1037 = vunpack.c.l.b16 %v800
  %v1038 = vunpack.c.h.b16 %v800
  %v1039 = vunpack.c.l.b16 %v801
  %v1040 = vunpack.c.h.b16 %v801
  %v1041 = vunpack.c.l.b16 %v802
  %v1042 = vunpack.c.l.b16 %v803
  %v1043 = vunpack.c.h.b16 %v803
  %v1044 = vunpack.c.l.b16 %v804
  %v1045 = vunpack.c.h.b16 %v804
  %v1046 = vunpack.c.l.b16 %v805
  %v1047 = vunpack.c.l.b16 %v806
  %v1048 = vunpack.c.h.b16 %v806
  %v1049 = vunpack.c.l.b16 %v807
  %v1050 = vunpack.c.h.b16 %v807
  %v1051 = vunpack.c.l.b16 %v808
  %v1052 = vunpack.c.l.b16 %v809
  %v1053 = vunpack.c.h.b16 %v809
  %v1054 = vunpack.c.l.b16 %v810
  %v1055 = vunpack.c.h.b16 %v810
  %v1056 = vunpack.c.l.b16 %v811
  %v1057 = vunpack.c.l.b16 %v812
  %v1058 = vunpack.c.h.b16 %v812
  %v1059 = vunpack.c.l.b16 %v813
  %v1060 = vunpack.c.h.b16 %v813
  %v1061 = vunpack.c.l.b16 %v814
  %v1062 = vunpack.c.l.b16 %v815
  %v1063 = vunpack.c.h.b16 %v815
  %v1064 = vunpack.c.l.b16 %v816
  %v1065 = vunpack.c.h.b16 %v816
  %v1066 = vunpack.c.l.b16 %v817
  %v1067 = vunpack.c.l.b16 %v818
  %v1068 = vunpack.c.h.b16 %v818
  %v1069 = vunpack.c.l.b16 %v819
  %v1070 = vunpack.c.h.b16 %v819
  %v1071 = vunpack.c.l.b16 %v820
  %v1072 = vunpack.c.l.b16 %v821
  %v1073 = vunpack.c.h.b16 %v821
  %v1074 = vunpack.c.l.b16 %v822
  %v1075 = vunpack.c.h.b16 %v822
  %v1076 = vunpack.c.l.b16 %v823
  %v1077 = vunpack.c.l.b16 %v824
  %v1078 = vunpack.c.h.b16 %v824
  %v1079 = vunpack.c.l.b16 %v825
  %v1080 = vunpack.c.h.b16 %v825
  %v1081 = vunpack.c.l.b16 %v826
  %v1082 = vunpack.c.l.b16 %v827
  %v1083 = vunpack.c.h.b16 %v827
  %v1084 = vunpack.c.l.b16 %v828
  %v1085 = vunpack.c.h.b16 %v828
  %v1086 = vunpack.c.l.b16 %v829
  %v1087 = vunpack.c.l.b16 %v830
  %v1088 = vunpack.c.h.b16 %v830
  %v1089 = vunpack.c.l.b16 %v831
  %v1090 = vunpack.c.h.b16 %v831
  %v1091 = vunpack.c.l.b16 %v832
  %v1092 = vunpack.c.l.b16 %v833
  %v1093 = vunpack.c.h.b16 %v833
  %v1094 = vunpack.c.l.b16 %v834
  %v1095 = vunpack.c.h.b16 %v834
  %v1096 = vunpack.c.l.b16 %v835
  %v1097 = vunpack.c.l.b16 %v836
  %v1098 = vunpack.c.h.b16 %v836
  %v1099 = vunpack.c.l.b16 %v837
  %v1100 = vunpack.c.h.b16 %v837
  %v1101 = vunpack.c.l.b16 %v838
  %v1102 = vunpack.c.l.b16 %v839
  %v1103 = vunpack.c.h.b16 %v839
  %v1104 = vunpack.c.l.b16 %v840
  %v1105 = vunpack.c.h.b16 %v840
  %v1106 = vunpack.c.l.b16 %v841
  %v1107 = vunpack.c.l.b16 %v842
  %v1108 = vunpack.c.h.b16 %v842
  %v1109 = vunpack.c.l.b16 %v843
  %v1110 = vunpack.c.h.b16 %v843
  %v1111 = vunpack.c.l.b16 %v844
  %v1112 = vunpack.c.l.b16 %v845
  %v1113 = vunpack.c.h.b16 %v845
  %v1114 = vunpack.c.l.b16 %v846
  %v1115 = vunpack.c.h.b16 %v846
  %v1116 = vunpack.c.l.b16 %v847
  %v1117 = vunpack.c.l.b16 %v848
  %v1118 = vunpack.c.h.b16 %v848
  %v1119 = vunpack.c.l.b16 %v849
  %v1120 = vunpack.c.h.b16 %v849
  %v1121 = vunpack.c.l.b16 %v850
  %v1122 = vunpack.c.l.b16 %v851
  %v1123 = vunpack.c.h.b16 %v851
  %v1124 = vunpack.c.l.b16 %v852
  %v1125 = vunpack.c.h.b16 %v852
  %v1126 = vunpack.c.l.b16 %v853
  %v1127 = vunpack.c.l.b16 %v854
  %v1128 = vunpack.c.h.b16 %v854
  %v1129 = vunpack.c.l.b16 %v855
  %v1130 = vunpack.c.h.b16 %v855
  %v1131 = vunpack.c.l.b16 %v856
  %v1132 = vunpack.c.l.b16 %v857
  %v1133 = vunpack.c.h.b16 %v857
  %v1134 = vunpack.c.l.b16 %v858
  %v1135 = vunpack.c.h.b16 %v858
  %v1136 = vunpack.c.l.b16 %v859
  %v1137 = vunpack.c.l.b16 %v860
  %v1138 = vunpack.c.h.b16 %v860
  %v1139 = vunpack.c.l.b16 %v861
  %v1140 = vunpack.c.h.b16 %v861
  %v1141 = vunpack.c.l.b16 %v862
  %v1142 = vunpack.c.l.b16 %v863
  %v1143 = vunpack.c.h.b16 %v863
  %v1144 = vunpack.c.l.b16 %v864
  %v1145 = vunpack.c.h.b16 %v864
  %v1146 = vunpack.c.l.b16 %v865
  %v1147 = vunpack.c.l.b16 %v866
  %v1148 = vunpack.c.h.b16 %v866
  %v1149 = vunpack.c.l.b16 %v867
  %v1150 = vunpack.c.h.b16 %v867
  %v1151 = vunpack.c.l.b16 %v868
  %v1152 = vpack.c.b16 %v997, %v992
  %v1153 = vpack.c.b16 %v998, %v993
  %v1154 = vpack.c.b16 %v999, %v994
  %v1155 = vpack.c.b16 %v1000, %v995
  %v1156 = vpack.c.b16 %v1001, %v996
  %v1157 = vpack.c.b16 %v1007, %v1002
  %v1158 = vpack.c.b16 %v1008, %v1003
  %v1159 = vpack.c.b16 %v1009, %v1004
  %v1160 = vpack.c.b16 %v1010, %v1005
  %v1161 = vpack.c.b16 %v1011, %v1006
  %v1162 = vpack.c.b16 %v1017, %v1012
  %v1163 = vpack.c.b16 %v1018, %v1013
  %v1164 = vpack.c.b16 %v1019, %v1014
  %v1165 = vpack.c.b16 %v1020, %v1015
  %v1166 = vpack.c.b16 %v1021, %v1016
  %v1167 = vpack.c.b16 %v1027, %v1022
  %v1168 = vpack.c.b16 %v1028, %v1023
  %v1169 = vpack.c.b16 %v1029, %v1024
  %v1170 = vpack.c.b16 %v1030, %v1025
  %v1171 = vpack.c.b16 %v1031, %v1026
  %v1172 = vpack.c.b16 %v1037, %v1032
  %v1173 = vpack.c.b16 %v1038, %v1033
  %v1174 = vpack.c.b16 %v1039, %v1034
  %v1175 = vpack.c.b16 %v1040, %v1035
  %v1176 = vpack.c.b16 %v1041, %v1036
  %v1177 = vpack.c.b16 %v1047, %v1042
  %v1178 = vpack.c.b16 %v1048, %v1043
  %v1179 = vpack.c.b16 %v1049, %v1044
  %v1180 = vpack.c.b16 %v1050, %v1045
  %v1181 = vpack.c.b16 %v1051, %v1046
  %v1182 = vpack.c.b16 %v1057, %v1052
  %v1183 = vpack.c.b16 %v1058, %v1053
  %v1184 = vpack.c.b16 %v1059, %v1054
  %v1185 = vpack.c.b16 %v1060, %v1055
  %v1186 = vpack.c.b16 %v1061, %v1056
  %v1187 = vpack.c.b16 %v1067, %v1062
  %v1188 = vpack.c.b16 %v1068, %v1063
  %v1189 = vpack.c.b16 %v1069, %v1064
  %v1190 = vpack.c.b16 %v1070, %v1065
  %v1191 = vpack.c.b16 %v1071, %v1066
  %v1192 = vpack.c.b16 %v1077, %v1072
  %v1193 = vpack.c.b16 %v1078, %v1073
  %v1194 = vpack.c.b16 %v1079, %v1074
  %v1195 = vpack.c.b16 %v1080, %v1075
  %v1196 = vpack.c.b16 %v1081, %v1076
  %v1197 = vpack.c.b16 %v1087, %v1082
  %v1198 = vpack.c.b16 %v1088, %v1083
  %v1199 = vpack.c.b16 %v1089, %v1084
  %v1200 = vpack.c.b16 %v1090, %v1085
  %v1201 = vpack.c.b16 %v1091, %v1086
  %v1202 = vpack.c.b16 %v1097, %v1092
  %v1203 = vpack.c.b16 %v1098, %v1093
  %v1204 = vpack.c.b16 %v1099, %v1094
  %v1205 = vpack.c.b16 %v1100, %v1095
  %v1206 = vpack.c.b16 %v1101, %v1096
  %v1207 = vpack.c.b16 %v1107, %v1102
  %v1208 = vpack.c.b16 %v1108, %v1103
  %v1209 = vpack.c.b16 %v1109, %v1104
  %v1210 = vpack.c.b16 %v1110, %v1105
  %v1211 = vpack.c.b16 %v1111, %v1106
  %v1212 = vpack.c.b16 %v1117, %v1112
  %v1213 = vpack.c.b16 %v1118, %v1113
  %v1214 = vpack.c.b16 %v1119, %v1114
  %v1215 = vpack.c.b16 %v1120, %v1115
  %v1216 = vpack.c.b16 %v1121, %v1116
  %v1217 = vpack.c.b16 %v1127, %v1122
  %v1218 = vpack.c.b16 %v1128, %v1123
  %v1219 = vpack.c.b16 %v1129, %v1124
  %v1220 = vpack.c.b16 %v1130, %v1125
  %v1221 = vpack.c.b16 %v1131, %v1126
  %v1222 = vpack.c.b16 %v1137, %v1132
  %v1223 = vpack.c.b16 %v1138, %v1133
  %v1224 = vpack.c.b16 %v1139, %v1134
  %v1225 = vpack.c.b16 %v1140, %v1135
  %v1226 = vpack.c.b16 %v1141, %v1136
  %v1227 = vpack.c.b16 %v1147, %v1142
  %v1228 = vpack.c.b16 %v1148, %v1143
  %v1229 = vpack.c.b16 %v1149, %v1144
  %v1230 = vpack.c.b16 %v1150, %v1145
  %v1231 = vpack.c.b16 %v1151, %v1146
  %1312 = vmatprep.subr.bf16.mxu0 %v1153
  %1313 = vmatpush1.bf16.msra.mxu0 %v1152
  %1314 = vmatprep.subr.bf16.mxu0 %v1158
  %1315 = vmatpush1.bf16.msra.mxu0 %v1157
  %1316 = vmatprep.subr.bf16.mxu0 %v1163
  %1317 = vmatpush1.bf16.msra.mxu0 %v1162
  %1318 = vmatprep.subr.bf16.mxu0 %v1168
  %1319 = vmatpush1.bf16.msra.mxu0 %v1167
  %1320 = vmatprep.subr.bf16.mxu0 %v1173
  %1321 = vmatpush1.bf16.msra.mxu0 %v1172
  %1322 = vmatprep.subr.bf16.mxu0 %v1178
  %1323 = vmatpush1.bf16.msra.mxu0 %v1177
  %1324 = vmatprep.subr.bf16.mxu0 %v1183
  %1325 = vmatpush1.bf16.msra.mxu0 %v1182
  %1326 = vmatprep.subr.bf16.mxu0 %v1188
  %1327 = vmatpush1.bf16.msra.mxu0 %v1187
  %1328 = vmatprep.subr.bf16.mxu0 %v1193
  %1329 = vmatpush1.bf16.msra.mxu0 %v1192
  %1330 = vmatprep.subr.bf16.mxu0 %v1198
  %1331 = vmatpush1.bf16.msra.mxu0 %v1197
  %1332 = vmatprep.subr.bf16.mxu0 %v1203
  %1333 = vmatpush1.bf16.msra.mxu0 %v1202
  %1334 = vmatprep.subr.bf16.mxu0 %v1208
  %1335 = vmatpush1.bf16.msra.mxu0 %v1207
  %1336 = vmatprep.subr.bf16.mxu0 %v1213
  %1337 = vmatpush1.bf16.msra.mxu0 %v1212
  %1338 = vmatprep.subr.bf16.mxu0 %v1218
  %1339 = vmatpush1.bf16.msra.mxu0 %v1217
  %1340 = vmatprep.subr.bf16.mxu0 %v1223
  %1341 = vmatpush1.bf16.msra.mxu0 %v1222
  %1342 = vmatprep.subr.bf16.mxu0 %v1228
  %1343 = vmatpush1.bf16.msra.mxu0 %v1227
  %1344 = vmatprep.mubr.bf16.mxu0 %v772
  %1345 = vmatmul.mubr.bf16.gmra.mrb[0].mxu0 %v771
  %v1346 = vpop.f32.mrb[0].mxu0
  %v1347 = vadd.f32 %v874, %v1346
  %v1348 = vpop.f32.mrb[0].mxu0
  %v1349 = vadd.f32 %v878, %v1348
  %v1350 = vpop.f32.mrb[0].mxu0
  %v1351 = vpop.f32.mrb[0].mxu0
  %1352 = vdwg.mxu0
  %1353 = vmatprep.subr.bf16.mxu0 %v1155
  %1354 = vmatpush1.bf16.msra.mxu0 %v1154
  %1355 = vmatprep.subr.bf16.mxu0 %v1160
  %1356 = vmatpush1.bf16.msra.mxu0 %v1159
  %1357 = vmatprep.subr.bf16.mxu0 %v1165
  %1358 = vmatpush1.bf16.msra.mxu0 %v1164
  %1359 = vmatprep.subr.bf16.mxu0 %v1170
  %1360 = vmatpush1.bf16.msra.mxu0 %v1169
  %1361 = vmatprep.subr.bf16.mxu0 %v1175
  %1362 = vmatpush1.bf16.msra.mxu0 %v1174
  %1363 = vmatprep.subr.bf16.mxu0 %v1180
  %1364 = vmatpush1.bf16.msra.mxu0 %v1179
  %1365 = vmatprep.subr.bf16.mxu0 %v1185
  %1366 = vmatpush1.bf16.msra.mxu0 %v1184
  %1367 = vmatprep.subr.bf16.mxu0 %v1190
  %1368 = vmatpush1.bf16.msra.mxu0 %v1189
  %1369 = vmatprep.subr.bf16.mxu0 %v1195
  %1370 = vmatpush1.bf16.msra.mxu0 %v1194
  %1371 = vmatprep.subr.bf16.mxu0 %v1200
  %1372 = vmatpush1.bf16.msra.mxu0 %v1199
  %1373 = vmatprep.subr.bf16.mxu0 %v1205
  %1374 = vmatpush1.bf16.msra.mxu0 %v1204
  %1375 = vmatprep.subr.bf16.mxu0 %v1210
  %1376 = vmatpush1.bf16.msra.mxu0 %v1209
  %1377 = vmatprep.subr.bf16.mxu0 %v1215
  %1378 = vmatpush1.bf16.msra.mxu0 %v1214
  %1379 = vmatprep.subr.bf16.mxu0 %v1220
  %1380 = vmatpush1.bf16.msra.mxu0 %v1219
  %1381 = vmatprep.subr.bf16.mxu0 %v1225
  %1382 = vmatpush1.bf16.msra.mxu0 %v1224
  %1383 = vmatprep.subr.bf16.mxu0 %v1230
  %1384 = vmatpush1.bf16.msra.mxu0 %v1229
  %1385 = vmatprep.mubr.bf16.mxu0 %v772
  %1386 = vmatmul.mubr.bf16.gmra.mrb[0].mxu0 %v771
  %v1387 = vpop.f32.mrb[0].mxu0
  %v1388 = vadd.f32 %v882, %v1387
  %v1389 = vpop.f32.mrb[0].mxu0
  %v1390 = vadd.f32 %v886, %v1389
  %v1391 = vpop.f32.mrb[0].mxu0
  %v1392 = vpop.f32.mrb[0].mxu0
  %1393 = vdwg.mxu0
  %1394 = vmatprep.subr.bf16.mxu0 0
  %1395 = vmatpush1.bf16.msra.mxu0 %v1156
  %1396 = vmatprep.subr.bf16.mxu0 0
  %1397 = vmatpush1.bf16.msra.mxu0 %v1161
  %1398 = vmatprep.subr.bf16.mxu0 0
  %1399 = vmatpush1.bf16.msra.mxu0 %v1166
  %1400 = vmatprep.subr.bf16.mxu0 0
  %1401 = vmatpush1.bf16.msra.mxu0 %v1171
  %1402 = vmatprep.subr.bf16.mxu0 0
  %1403 = vmatpush1.bf16.msra.mxu0 %v1176
  %1404 = vmatprep.subr.bf16.mxu0 0
  %1405 = vmatpush1.bf16.msra.mxu0 %v1181
  %1406 = vmatprep.subr.bf16.mxu0 0
  %1407 = vmatpush1.bf16.msra.mxu0 %v1186
  %1408 = vmatprep.subr.bf16.mxu0 0
  %1409 = vmatpush1.bf16.msra.mxu0 %v1191
  %1410 = vmatprep.subr.bf16.mxu0 0
  %1411 = vmatpush1.bf16.msra.mxu0 %v1196
  %1412 = vmatprep.subr.bf16.mxu0 0
  %1413 = vmatpush1.bf16.msra.mxu0 %v1201
  %1414 = vmatprep.subr.bf16.mxu0 0
  %1415 = vmatpush1.bf16.msra.mxu0 %v1206
  %1416 = vmatprep.subr.bf16.mxu0 0
  %1417 = vmatpush1.bf16.msra.mxu0 %v1211
  %1418 = vmatprep.subr.bf16.mxu0 0
  %1419 = vmatpush1.bf16.msra.mxu0 %v1216
  %1420 = vmatprep.subr.bf16.mxu0 0
  %1421 = vmatpush1.bf16.msra.mxu0 %v1221
  %1422 = vmatprep.subr.bf16.mxu0 0
  %1423 = vmatpush1.bf16.msra.mxu0 %v1226
  %1424 = vmatprep.subr.bf16.mxu0 0
  %1425 = vmatpush1.bf16.msra.mxu0 %v1231
  %1426 = vmatprep.mubr.bf16.mxu0 %v772
  %1427 = vmatmul.mubr.bf16.gmra.mrb[0].mxu0 %v771
  %v1428 = vpop.f32.mrb[0].mxu0
  %v1429 = vadd.f32 %v890, %v1428
  %v1430 = vpop.f32.mrb[0].mxu0
  %v1431 = vpop.f32.mrb[0].mxu0
  %v1432 = vpop.f32.mrb[0].mxu0
  %1433 = vdwg.mxu0
  %v1434 = vmax.f32 %v1347, 0.0
  %v1435 = vmax.f32 %v1349, 0.0
  %v1436 = vmax.f32 %v1388, 0.0
  %v1437 = vmax.f32 %v1390, 0.0
  %v1438 = vmax.f32 %v1429, 0.0
  %v1439 = vpack.c.bf16 %v1434, %v1434
  %v1440 = vpack.c.bf16 %v1435, %v1435
  %v1441 = vpack.c.bf16 %v1436, %v1436
  %v1442 = vpack.c.bf16 %v1437, %v1437
  %v1443 = vpack.c.bf16 %v1438, %v1438
  %v1444 = vld [vmem:[%s4] sm:$0xff]
  %v1445 = vld [vmem:[%s4 + $0x8] sm:$0xff]
  %v1446 = vld [vmem:[%s4 + $0x10] sm:$0xff]
  %v1447 = vld [vmem:[%s4 + $0x18] sm:$0xff]
  %v1448 = vld [vmem:[%s4 + $0x20] sm:$0xff]
  %v1449 = vld [vmem:[%s4 + $0x28] sm:$0xff]
  %v1450 = vld [vmem:[%s4 + $0x30] sm:$0xff]
  %v1451 = vld [vmem:[%s4 + $0x38] sm:$0xff]
  %v1452 = vld [vmem:[%s4 + $0x40] sm:$0xff]
  %v1453 = vld [vmem:[%s4 + $0x48] sm:$0xff]
  %v1454 = vld [vmem:[%s4 + $0x50] sm:$0xff]
  %v1455 = vld [vmem:[%s4 + $0x58] sm:$0xff]
  %v1456 = vld [vmem:[%s4 + $0x60] sm:$0xff]
  %v1457 = vld [vmem:[%s4 + $0x68] sm:$0xff]
  %v1458 = vld [vmem:[%s4 + $0x70] sm:$0xff]
  %v1459 = vld [vmem:[%s4 + $0x78] sm:$0xff]
  %v1460 = vld [vmem:[%s4 + $0x80] sm:$0xff]
  %v1461 = vld [vmem:[%s4 + $0x88] sm:$0xff]
  %v1462 = vld [vmem:[%s4 + $0x90] sm:$0xff]
  %v1463 = vld [vmem:[%s4 + $0x98] sm:$0xff]
  %v1464 = vld [vmem:[%s4 + $0xa0] sm:$0xff]
  %v1465 = vld [vmem:[%s4 + $0xa8] sm:$0xff]
  %v1466 = vld [vmem:[%s4 + $0xb0] sm:$0xff]
  %v1467 = vld [vmem:[%s4 + $0xb8] sm:$0xff]
  %v1468 = vld [vmem:[%s4 + $0xc0] sm:$0xff]
  %v1469 = vld [vmem:[%s4 + $0xc8] sm:$0xff]
  %v1470 = vld [vmem:[%s4 + $0xd0] sm:$0xff]
  %v1471 = vld [vmem:[%s4 + $0xd8] sm:$0xff]
  %v1472 = vld [vmem:[%s4 + $0xe0] sm:$0xff]
  %v1473 = vld [vmem:[%s4 + $0xe8] sm:$0xff]
  %v1474 = vld [vmem:[%s4 + $0xf0] sm:$0xff]
  %v1475 = vld [vmem:[%s4 + $0xf8] sm:$0xff]
  %v1476 = vld [vmem:[%s4 + $0x100] sm:$0xff]
  %v1477 = vld [vmem:[%s4 + $0x108] sm:$0xff]
  %v1478 = vld [vmem:[%s4 + $0x110] sm:$0xff]
  %v1479 = vld [vmem:[%s4 + $0x118] sm:$0xff]
  %v1480 = vld [vmem:[%s4 + $0x120] sm:$0xff]
  %v1481 = vld [vmem:[%s4 + $0x128] sm:$0xff]
  %v1482 = vld [vmem:[%s4 + $0x130] sm:$0xff]
  %v1483 = vld [vmem:[%s4 + $0x138] sm:$0xff]
  %v1484 = vld [vmem:[%s4 + $0x140] sm:$0xff]
  %v1485 = vld [vmem:[%s4 + $0x148] sm:$0xff]
  %v1486 = vld [vmem:[%s4 + $0x150] sm:$0xff]
  %v1487 = vld [vmem:[%s4 + $0x158] sm:$0xff]
  %v1488 = vld [vmem:[%s4 + $0x160] sm:$0xff]
  %v1489 = vld [vmem:[%s4 + $0x168] sm:$0xff]
  %v1490 = vld [vmem:[%s4 + $0x170] sm:$0xff]
  %v1491 = vld [vmem:[%s4 + $0x178] sm:$0xff]
  %v1492 = vld [vmem:[%s4 + $0x180] sm:$0xff]
  %v1493 = vld [vmem:[%s4 + $0x188] sm:$0xff]
  %v1494 = vld [vmem:[%s4 + $0x190] sm:$0xff]
  %v1495 = vld [vmem:[%s4 + $0x198] sm:$0xff]
  %v1496 = vld [vmem:[%s4 + $0x1a0] sm:$0xff]
  %v1497 = vld [vmem:[%s4 + $0x1a8] sm:$0xff]
  %v1498 = vld [vmem:[%s4 + $0x1b0] sm:$0xff]
  %v1499 = vld [vmem:[%s4 + $0x1b8] sm:$0xff]
  %v1500 = vld [vmem:[%s4 + $0x1c0] sm:$0xff]
  %v1501 = vld [vmem:[%s4 + $0x1c8] sm:$0xff]
  %v1502 = vld [vmem:[%s4 + $0x1d0] sm:$0xff]
  %v1503 = vld [vmem:[%s4 + $0x1d8] sm:$0xff]
  %v1504 = vld [vmem:[%s4 + $0x1e0] sm:$0xff]
  %v1505 = vld [vmem:[%s4 + $0x1e8] sm:$0xff]
  %v1506 = vld [vmem:[%s4 + $0x1f0] sm:$0xff]
  %v1507 = vld [vmem:[%s4 + $0x1f8] sm:$0xff]
  %v1508 = vld [vmem:[%s4 + $0x200] sm:$0xff]
  %v1509 = vld [vmem:[%s4 + $0x208] sm:$0xff]
  %v1510 = vld [vmem:[%s4 + $0x210] sm:$0xff]
  %v1511 = vld [vmem:[%s4 + $0x218] sm:$0xff]
  %v1512 = vld [vmem:[%s4 + $0x220] sm:$0xff]
  %v1513 = vld [vmem:[%s4 + $0x228] sm:$0xff]
  %v1514 = vld [vmem:[%s4 + $0x230] sm:$0xff]
  %v1515 = vld [vmem:[%s4 + $0x238] sm:$0xff]
  %v1516 = vld [vmem:[%s4 + $0x240] sm:$0xff]
  %v1517 = vld [vmem:[%s4 + $0x248] sm:$0xff]
  %v1518 = vld [vmem:[%s4 + $0x250] sm:$0xff]
  %v1519 = vld [vmem:[%s4 + $0x258] sm:$0xff]
  %v1520 = vld [vmem:[%s4 + $0x260] sm:$0xff]
  %v1521 = vld [vmem:[%s4 + $0x268] sm:$0xff]
  %v1522 = vld [vmem:[%s4 + $0x270] sm:$0xff]
  %v1523 = vld [vmem:[%s4 + $0x278] sm:$0xff]
  %v1524 = vld [vmem:[%s4 + $0x280] sm:$0xff]
  %v1525 = vld [vmem:[%s4 + $0x288] sm:$0xff]
  %v1526 = vld [vmem:[%s4 + $0x290] sm:$0xff]
  %v1527 = vld [vmem:[%s4 + $0x298] sm:$0xff]
  %v1528 = vld [vmem:[%s4 + $0x2a0] sm:$0xff]
  %v1529 = vld [vmem:[%s4 + $0x2a8] sm:$0xff]
  %v1530 = vld [vmem:[%s4 + $0x2b0] sm:$0xff]
  %v1531 = vld [vmem:[%s4 + $0x2b8] sm:$0xff]
  %v1532 = vld [vmem:[%s4 + $0x2c0] sm:$0xff]
  %v1533 = vld [vmem:[%s4 + $0x2c8] sm:$0xff]
  %v1534 = vld [vmem:[%s4 + $0x2d0] sm:$0xff]
  %v1535 = vld [vmem:[%s4 + $0x2d8] sm:$0xff]
  %v1536 = vld [vmem:[%s4 + $0x2e0] sm:$0xff]
  %v1537 = vld [vmem:[%s4 + $0x2e8] sm:$0xff]
  %v1538 = vld [vmem:[%s4 + $0x2f0] sm:$0xff]
  %v1539 = vld [vmem:[%s4 + $0x2f8] sm:$0xff]
  %v1540 = vld [vmem:[%s4 + $0x300] sm:$0xff]
  %v1541 = vld [vmem:[%s4 + $0x308] sm:$0xff]
  %v1542 = vld [vmem:[%s4 + $0x310] sm:$0xff]
  %v1543 = vld [vmem:[%s4 + $0x318] sm:$0xff]
  %v1544 = vld [vmem:[%s4 + $0x320] sm:$0xff]
  %v1545 = vld [vmem:[%s4 + $0x328] sm:$0xff]
  %v1546 = vld [vmem:[%s4 + $0x330] sm:$0xff]
  %v1547 = vld [vmem:[%s4 + $0x338] sm:$0xff]
  %v1548 = vld [vmem:[%s4 + $0x340] sm:$0xff]
  %v1549 = vld [vmem:[%s4 + $0x348] sm:$0xff]
  %v1550 = vld [vmem:[%s4 + $0x350] sm:$0xff]
  %v1551 = vld [vmem:[%s4 + $0x358] sm:$0xff]
  %v1552 = vld [vmem:[%s4 + $0x360] sm:$0xff]
  %v1553 = vld [vmem:[%s4 + $0x368] sm:$0xff]
  %v1554 = vld [vmem:[%s4 + $0x370] sm:$0xff]
  %v1555 = vld [vmem:[%s4 + $0x378] sm:$0xff]
  %v1556 = vld [vmem:[%s4 + $0x380] sm:$0xff]
  %v1557 = vld [vmem:[%s4 + $0x388] sm:$0xff]
  %v1558 = vld [vmem:[%s4 + $0x390] sm:$0xff]
  %v1559 = vld [vmem:[%s4 + $0x398] sm:$0xff]
  %v1560 = vld [vmem:[%s4 + $0x3a0] sm:$0xff]
  %v1561 = vld [vmem:[%s4 + $0x3a8] sm:$0xff]
  %v1562 = vld [vmem:[%s4 + $0x3b0] sm:$0xff]
  %v1563 = vld [vmem:[%s4 + $0x3b8] sm:$0xff]
  %v1564 = vld [vmem:[%s4 + $0x3c0] sm:$0xff]
  %v1565 = vld [vmem:[%s4 + $0x3c8] sm:$0xff]
  %v1566 = vld [vmem:[%s4 + $0x3d0] sm:$0xff]
  %v1567 = vld [vmem:[%s4 + $0x3d8] sm:$0xff]
  %v1568 = vld [vmem:[%s4 + $0x3e0] sm:$0xff]
  %v1569 = vld [vmem:[%s4 + $0x3e8] sm:$0xff]
  %v1570 = vld [vmem:[%s4 + $0x3f0] sm:$0xff]
  %v1571 = vld [vmem:[%s4 + $0x3f8] sm:$0xff]
  %v1572 = vld [vmem:[%s4 + $0x400] sm:$0xff]
  %v1573 = vld [vmem:[%s4 + $0x408] sm:$0xff]
  %v1574 = vld [vmem:[%s4 + $0x410] sm:$0xff]
  %v1575 = vld [vmem:[%s4 + $0x418] sm:$0xff]
  %v1576 = vld [vmem:[%s4 + $0x420] sm:$0xff]
  %v1577 = vld [vmem:[%s4 + $0x428] sm:$0xff]
  %v1578 = vld [vmem:[%s4 + $0x430] sm:$0xff]
  %v1579 = vld [vmem:[%s4 + $0x438] sm:$0xff]
  %v1580 = vld [vmem:[%s4 + $0x440] sm:$0xff]
  %v1581 = vld [vmem:[%s4 + $0x448] sm:$0xff]
  %v1582 = vld [vmem:[%s4 + $0x450] sm:$0xff]
  %v1583 = vld [vmem:[%s4 + $0x458] sm:$0xff]
  %v1584 = vld [vmem:[%s4 + $0x460] sm:$0xff]
  %v1585 = vld [vmem:[%s4 + $0x468] sm:$0xff]
  %v1586 = vld [vmem:[%s4 + $0x470] sm:$0xff]
  %v1587 = vld [vmem:[%s4 + $0x478] sm:$0xff]
  %v1588 = vld [vmem:[%s4 + $0x480] sm:$0xff]
  %v1589 = vld [vmem:[%s4 + $0x488] sm:$0xff]
  %v1590 = vld [vmem:[%s4 + $0x490] sm:$0xff]
  %v1591 = vld [vmem:[%s4 + $0x498] sm:$0xff]
  %v1592 = vld [vmem:[%s4 + $0x4a0] sm:$0xff]
  %v1593 = vld [vmem:[%s4 + $0x4a8] sm:$0xff]
  %v1594 = vld [vmem:[%s5] sm:$0xf]
  %v1596 = vlaneseq
  %v1597 = vshrl.u32 %v1596, 7
  %v1598 = vsub.s32 0, %v1597
  %v1599 = vrot.slane %v1594, %v1598
  %v1600 = vlaneseq
  %v1601 = vshrl.u32 %v1600, 7
  %v1602 = vsub.s32 1, %v1601
  %v1603 = vrot.slane %v1594, %v1602
  %v1604 = vlaneseq
  %v1605 = vshrl.u32 %v1604, 7
  %v1606 = vsub.s32 2, %v1605
  %v1607 = vrot.slane %v1594, %v1606
  %v1608 = vlaneseq
  %v1609 = vshrl.u32 %v1608, 7
  %v1610 = vsub.s32 3, %v1609
  %v1611 = vrot.slane %v1594, %v1610
  %v1766 = vunpack.c.l.b16 %v1444
  %v1767 = vunpack.c.h.b16 %v1444
  %v1768 = vunpack.c.l.b16 %v1445
  %v1769 = vunpack.c.h.b16 %v1445
  %v1770 = vunpack.c.l.b16 %v1446
  %v1771 = vunpack.c.h.b16 %v1446
  %v1772 = vunpack.c.l.b16 %v1447
  %v1773 = vunpack.c.h.b16 %v1447
  %v1774 = vunpack.c.l.b16 %v1448
  %v1775 = vunpack.c.h.b16 %v1448
  %v1776 = vunpack.c.l.b16 %v1449
  %v1777 = vunpack.c.h.b16 %v1449
  %v1778 = vunpack.c.l.b16 %v1450
  %v1779 = vunpack.c.h.b16 %v1450
  %v1780 = vunpack.c.l.b16 %v1451
  %v1781 = vunpack.c.h.b16 %v1451
  %v1782 = vunpack.c.l.b16 %v1452
  %v1783 = vunpack.c.h.b16 %v1452
  %v1784 = vunpack.c.l.b16 %v1453
  %v1785 = vunpack.c.h.b16 %v1453
  %v1786 = vunpack.c.l.b16 %v1454
  %v1787 = vunpack.c.h.b16 %v1454
  %v1788 = vunpack.c.l.b16 %v1455
  %v1789 = vunpack.c.h.b16 %v1455
  %v1790 = vunpack.c.l.b16 %v1456
  %v1791 = vunpack.c.h.b16 %v1456
  %v1792 = vunpack.c.l.b16 %v1457
  %v1793 = vunpack.c.h.b16 %v1457
  %v1794 = vunpack.c.l.b16 %v1458
  %v1795 = vunpack.c.h.b16 %v1458
  %v1796 = vunpack.c.l.b16 %v1459
  %v1797 = vunpack.c.h.b16 %v1459
  %v1798 = vunpack.c.l.b16 %v1460
  %v1799 = vunpack.c.h.b16 %v1460
  %v1800 = vunpack.c.l.b16 %v1461
  %v1801 = vunpack.c.h.b16 %v1461
  %v1802 = vunpack.c.l.b16 %v1462
  %v1803 = vunpack.c.h.b16 %v1462
  %v1804 = vunpack.c.l.b16 %v1463
  %v1805 = vunpack.c.h.b16 %v1463
  %v1806 = vunpack.c.l.b16 %v1464
  %v1807 = vunpack.c.h.b16 %v1464
  %v1808 = vunpack.c.l.b16 %v1465
  %v1809 = vunpack.c.h.b16 %v1465
  %v1810 = vunpack.c.l.b16 %v1466
  %v1811 = vunpack.c.h.b16 %v1466
  %v1812 = vunpack.c.l.b16 %v1467
  %v1813 = vunpack.c.h.b16 %v1467
  %v1814 = vunpack.c.l.b16 %v1468
  %v1815 = vunpack.c.h.b16 %v1468
  %v1816 = vunpack.c.l.b16 %v1469
  %v1817 = vunpack.c.h.b16 %v1469
  %v1818 = vunpack.c.l.b16 %v1470
  %v1819 = vunpack.c.h.b16 %v1470
  %v1820 = vunpack.c.l.b16 %v1471
  %v1821 = vunpack.c.h.b16 %v1471
  %v1822 = vunpack.c.l.b16 %v1472
  %v1823 = vunpack.c.h.b16 %v1472
  %v1824 = vunpack.c.l.b16 %v1473
  %v1825 = vunpack.c.h.b16 %v1473
  %v1826 = vunpack.c.l.b16 %v1474
  %v1827 = vunpack.c.h.b16 %v1474
  %v1828 = vunpack.c.l.b16 %v1475
  %v1829 = vunpack.c.h.b16 %v1475
  %v1830 = vunpack.c.l.b16 %v1476
  %v1831 = vunpack.c.h.b16 %v1476
  %v1832 = vunpack.c.l.b16 %v1477
  %v1833 = vunpack.c.h.b16 %v1477
  %v1834 = vunpack.c.l.b16 %v1478
  %v1835 = vunpack.c.h.b16 %v1478
  %v1836 = vunpack.c.l.b16 %v1479
  %v1837 = vunpack.c.h.b16 %v1479
  %v1838 = vunpack.c.l.b16 %v1480
  %v1839 = vunpack.c.h.b16 %v1480
  %v1840 = vunpack.c.l.b16 %v1481
  %v1841 = vunpack.c.h.b16 %v1481
  %v1842 = vunpack.c.l.b16 %v1482
  %v1843 = vunpack.c.h.b16 %v1482
  %v1844 = vunpack.c.l.b16 %v1483
  %v1845 = vunpack.c.h.b16 %v1483
  %v1846 = vunpack.c.l.b16 %v1484
  %v1847 = vunpack.c.h.b16 %v1484
  %v1848 = vunpack.c.l.b16 %v1485
  %v1849 = vunpack.c.h.b16 %v1485
  %v1850 = vunpack.c.l.b16 %v1486
  %v1851 = vunpack.c.h.b16 %v1486
  %v1852 = vunpack.c.l.b16 %v1487
  %v1853 = vunpack.c.h.b16 %v1487
  %v1854 = vunpack.c.l.b16 %v1488
  %v1855 = vunpack.c.h.b16 %v1488
  %v1856 = vunpack.c.l.b16 %v1489
  %v1857 = vunpack.c.h.b16 %v1489
  %v1858 = vunpack.c.l.b16 %v1490
  %v1859 = vunpack.c.h.b16 %v1490
  %v1860 = vunpack.c.l.b16 %v1491
  %v1861 = vunpack.c.h.b16 %v1491
  %v1862 = vunpack.c.l.b16 %v1492
  %v1863 = vunpack.c.h.b16 %v1492
  %v1864 = vunpack.c.l.b16 %v1493
  %v1865 = vunpack.c.h.b16 %v1493
  %v1866 = vunpack.c.l.b16 %v1494
  %v1867 = vunpack.c.h.b16 %v1494
  %v1868 = vunpack.c.l.b16 %v1495
  %v1869 = vunpack.c.h.b16 %v1495
  %v1870 = vunpack.c.l.b16 %v1496
  %v1871 = vunpack.c.h.b16 %v1496
  %v1872 = vunpack.c.l.b16 %v1497
  %v1873 = vunpack.c.h.b16 %v1497
  %v1874 = vunpack.c.l.b16 %v1498
  %v1875 = vunpack.c.h.b16 %v1498
  %v1876 = vunpack.c.l.b16 %v1499
  %v1877 = vunpack.c.h.b16 %v1499
  %v1878 = vunpack.c.l.b16 %v1500
  %v1879 = vunpack.c.h.b16 %v1500
  %v1880 = vunpack.c.l.b16 %v1501
  %v1881 = vunpack.c.h.b16 %v1501
  %v1882 = vunpack.c.l.b16 %v1502
  %v1883 = vunpack.c.h.b16 %v1502
  %v1884 = vunpack.c.l.b16 %v1503
  %v1885 = vunpack.c.h.b16 %v1503
  %v1886 = vunpack.c.l.b16 %v1504
  %v1887 = vunpack.c.h.b16 %v1504
  %v1888 = vunpack.c.l.b16 %v1505
  %v1889 = vunpack.c.h.b16 %v1505
  %v1890 = vunpack.c.l.b16 %v1506
  %v1891 = vunpack.c.h.b16 %v1506
  %v1892 = vunpack.c.l.b16 %v1507
  %v1893 = vunpack.c.h.b16 %v1507
  %v1894 = vunpack.c.l.b16 %v1508
  %v1895 = vunpack.c.h.b16 %v1508
  %v1896 = vunpack.c.l.b16 %v1509
  %v1897 = vunpack.c.h.b16 %v1509
  %v1898 = vunpack.c.l.b16 %v1510
  %v1899 = vunpack.c.h.b16 %v1510
  %v1900 = vunpack.c.l.b16 %v1511
  %v1901 = vunpack.c.h.b16 %v1511
  %v1902 = vunpack.c.l.b16 %v1512
  %v1903 = vunpack.c.h.b16 %v1512
  %v1904 = vunpack.c.l.b16 %v1513
  %v1905 = vunpack.c.h.b16 %v1513
  %v1906 = vunpack.c.l.b16 %v1514
  %v1907 = vunpack.c.h.b16 %v1514
  %v1908 = vunpack.c.l.b16 %v1515
  %v1909 = vunpack.c.h.b16 %v1515
  %v1910 = vunpack.c.l.b16 %v1516
  %v1911 = vunpack.c.h.b16 %v1516
  %v1912 = vunpack.c.l.b16 %v1517
  %v1913 = vunpack.c.h.b16 %v1517
  %v1914 = vunpack.c.l.b16 %v1518
  %v1915 = vunpack.c.h.b16 %v1518
  %v1916 = vunpack.c.l.b16 %v1519
  %v1917 = vunpack.c.h.b16 %v1519
  %v1918 = vunpack.c.l.b16 %v1520
  %v1919 = vunpack.c.h.b16 %v1520
  %v1920 = vunpack.c.l.b16 %v1521
  %v1921 = vunpack.c.h.b16 %v1521
  %v1922 = vunpack.c.l.b16 %v1522
  %v1923 = vunpack.c.h.b16 %v1522
  %v1924 = vunpack.c.l.b16 %v1523
  %v1925 = vunpack.c.h.b16 %v1523
  %v1926 = vunpack.c.l.b16 %v1524
  %v1927 = vunpack.c.h.b16 %v1524
  %v1928 = vunpack.c.l.b16 %v1525
  %v1929 = vunpack.c.h.b16 %v1525
  %v1930 = vunpack.c.l.b16 %v1526
  %v1931 = vunpack.c.h.b16 %v1526
  %v1932 = vunpack.c.l.b16 %v1527
  %v1933 = vunpack.c.h.b16 %v1527
  %v1934 = vunpack.c.l.b16 %v1528
  %v1935 = vunpack.c.h.b16 %v1528
  %v1936 = vunpack.c.l.b16 %v1529
  %v1937 = vunpack.c.h.b16 %v1529
  %v1938 = vunpack.c.l.b16 %v1530
  %v1939 = vunpack.c.h.b16 %v1530
  %v1940 = vunpack.c.l.b16 %v1531
  %v1941 = vunpack.c.h.b16 %v1531
  %v1942 = vunpack.c.l.b16 %v1532
  %v1943 = vunpack.c.h.b16 %v1532
  %v1944 = vunpack.c.l.b16 %v1533
  %v1945 = vunpack.c.h.b16 %v1533
  %v1946 = vunpack.c.l.b16 %v1534
  %v1947 = vunpack.c.h.b16 %v1534
  %v1948 = vunpack.c.l.b16 %v1535
  %v1949 = vunpack.c.h.b16 %v1535
  %v1950 = vunpack.c.l.b16 %v1536
  %v1951 = vunpack.c.h.b16 %v1536
  %v1952 = vunpack.c.l.b16 %v1537
  %v1953 = vunpack.c.h.b16 %v1537
  %v1954 = vunpack.c.l.b16 %v1538
  %v1955 = vunpack.c.h.b16 %v1538
  %v1956 = vunpack.c.l.b16 %v1539
  %v1957 = vunpack.c.h.b16 %v1539
  %v1958 = vunpack.c.l.b16 %v1540
  %v1959 = vunpack.c.h.b16 %v1540
  %v1960 = vunpack.c.l.b16 %v1541
  %v1961 = vunpack.c.h.b16 %v1541
  %v1962 = vunpack.c.l.b16 %v1542
  %v1963 = vunpack.c.h.b16 %v1542
  %v1964 = vunpack.c.l.b16 %v1543
  %v1965 = vunpack.c.h.b16 %v1543
  %v1966 = vunpack.c.l.b16 %v1544
  %v1967 = vunpack.c.h.b16 %v1544
  %v1968 = vunpack.c.l.b16 %v1545
  %v1969 = vunpack.c.h.b16 %v1545
  %v1970 = vunpack.c.l.b16 %v1546
  %v1971 = vunpack.c.h.b16 %v1546
  %v1972 = vunpack.c.l.b16 %v1547
  %v1973 = vunpack.c.h.b16 %v1547
  %v1974 = vunpack.c.l.b16 %v1548
  %v1975 = vunpack.c.h.b16 %v1548
  %v1976 = vunpack.c.l.b16 %v1549
  %v1977 = vunpack.c.h.b16 %v1549
  %v1978 = vunpack.c.l.b16 %v1550
  %v1979 = vunpack.c.h.b16 %v1550
  %v1980 = vunpack.c.l.b16 %v1551
  %v1981 = vunpack.c.h.b16 %v1551
  %v1982 = vunpack.c.l.b16 %v1552
  %v1983 = vunpack.c.h.b16 %v1552
  %v1984 = vunpack.c.l.b16 %v1553
  %v1985 = vunpack.c.h.b16 %v1553
  %v1986 = vunpack.c.l.b16 %v1554
  %v1987 = vunpack.c.h.b16 %v1554
  %v1988 = vunpack.c.l.b16 %v1555
  %v1989 = vunpack.c.h.b16 %v1555
  %v1990 = vunpack.c.l.b16 %v1556
  %v1991 = vunpack.c.h.b16 %v1556
  %v1992 = vunpack.c.l.b16 %v1557
  %v1993 = vunpack.c.h.b16 %v1557
  %v1994 = vunpack.c.l.b16 %v1558
  %v1995 = vunpack.c.h.b16 %v1558
  %v1996 = vunpack.c.l.b16 %v1559
  %v1997 = vunpack.c.h.b16 %v1559
  %v1998 = vunpack.c.l.b16 %v1560
  %v1999 = vunpack.c.h.b16 %v1560
  %v2000 = vunpack.c.l.b16 %v1561
  %v2001 = vunpack.c.h.b16 %v1561
  %v2002 = vunpack.c.l.b16 %v1562
  %v2003 = vunpack.c.h.b16 %v1562
  %v2004 = vunpack.c.l.b16 %v1563
  %v2005 = vunpack.c.h.b16 %v1563
  %v2006 = vunpack.c.l.b16 %v1564
  %v2007 = vunpack.c.h.b16 %v1564
  %v2008 = vunpack.c.l.b16 %v1565
  %v2009 = vunpack.c.h.b16 %v1565
  %v2010 = vunpack.c.l.b16 %v1566
  %v2011 = vunpack.c.h.b16 %v1566
  %v2012 = vunpack.c.l.b16 %v1567
  %v2013 = vunpack.c.h.b16 %v1567
  %v2014 = vunpack.c.l.b16 %v1568
  %v2015 = vunpack.c.h.b16 %v1568
  %v2016 = vunpack.c.l.b16 %v1569
  %v2017 = vunpack.c.h.b16 %v1569
  %v2018 = vunpack.c.l.b16 %v1570
  %v2019 = vunpack.c.h.b16 %v1570
  %v2020 = vunpack.c.l.b16 %v1571
  %v2021 = vunpack.c.h.b16 %v1571
  %v2022 = vunpack.c.l.b16 %v1572
  %v2023 = vunpack.c.h.b16 %v1572
  %v2024 = vunpack.c.l.b16 %v1573
  %v2025 = vunpack.c.h.b16 %v1573
  %v2026 = vunpack.c.l.b16 %v1574
  %v2027 = vunpack.c.h.b16 %v1574
  %v2028 = vunpack.c.l.b16 %v1575
  %v2029 = vunpack.c.h.b16 %v1575
  %v2030 = vunpack.c.l.b16 %v1576
  %v2031 = vunpack.c.h.b16 %v1576
  %v2032 = vunpack.c.l.b16 %v1577
  %v2033 = vunpack.c.h.b16 %v1577
  %v2034 = vunpack.c.l.b16 %v1578
  %v2035 = vunpack.c.h.b16 %v1578
  %v2036 = vunpack.c.l.b16 %v1579
  %v2037 = vunpack.c.h.b16 %v1579
  %v2038 = vunpack.c.l.b16 %v1580
  %v2039 = vunpack.c.h.b16 %v1580
  %v2040 = vunpack.c.l.b16 %v1581
  %v2041 = vunpack.c.h.b16 %v1581
  %v2042 = vunpack.c.l.b16 %v1582
  %v2043 = vunpack.c.h.b16 %v1582
  %v2044 = vunpack.c.l.b16 %v1583
  %v2045 = vunpack.c.h.b16 %v1583
  %v2046 = vunpack.c.l.b16 %v1584
  %v2047 = vunpack.c.h.b16 %v1584
  %v2048 = vunpack.c.l.b16 %v1585
  %v2049 = vunpack.c.h.b16 %v1585
  %v2050 = vunpack.c.l.b16 %v1586
  %v2051 = vunpack.c.h.b16 %v1586
  %v2052 = vunpack.c.l.b16 %v1587
  %v2053 = vunpack.c.h.b16 %v1587
  %v2054 = vunpack.c.l.b16 %v1588
  %v2055 = vunpack.c.h.b16 %v1588
  %v2056 = vunpack.c.l.b16 %v1589
  %v2057 = vunpack.c.h.b16 %v1589
  %v2058 = vunpack.c.l.b16 %v1590
  %v2059 = vunpack.c.h.b16 %v1590
  %v2060 = vunpack.c.l.b16 %v1591
  %v2061 = vunpack.c.h.b16 %v1591
  %v2062 = vunpack.c.l.b16 %v1592
  %v2063 = vunpack.c.h.b16 %v1592
  %v2064 = vunpack.c.l.b16 %v1593
  %v2065 = vunpack.c.h.b16 %v1593
  %v2066 = vpack.c.b16 %v1770, %v1766
  %v2067 = vpack.c.b16 %v1771, %v1767
  %v2068 = vpack.c.b16 %v1772, %v1768
  %v2069 = vpack.c.b16 %v1773, %v1769
  %v2070 = vpack.c.b16 %v1778, %v1774
  %v2071 = vpack.c.b16 %v1779, %v1775
  %v2072 = vpack.c.b16 %v1780, %v1776
  %v2073 = vpack.c.b16 %v1781, %v1777
  %v2074 = vpack.c.b16 %v1786, %v1782
  %v2075 = vpack.c.b16 %v1787, %v1783
  %v2076 = vpack.c.b16 %v1788, %v1784
  %v2077 = vpack.c.b16 %v1789, %v1785
  %v2078 = vpack.c.b16 %v1794, %v1790
  %v2079 = vpack.c.b16 %v1795, %v1791
  %v2080 = vpack.c.b16 %v1796, %v1792
  %v2081 = vpack.c.b16 %v1797, %v1793
  %v2082 = vpack.c.b16 %v1802, %v1798
  %v2083 = vpack.c.b16 %v1803, %v1799
  %v2084 = vpack.c.b16 %v1804, %v1800
  %v2085 = vpack.c.b16 %v1805, %v1801
  %v2086 = vpack.c.b16 %v1810, %v1806
  %v2087 = vpack.c.b16 %v1811, %v1807
  %v2088 = vpack.c.b16 %v1812, %v1808
  %v2089 = vpack.c.b16 %v1813, %v1809
  %v2090 = vpack.c.b16 %v1818, %v1814
  %v2091 = vpack.c.b16 %v1819, %v1815
  %v2092 = vpack.c.b16 %v1820, %v1816
  %v2093 = vpack.c.b16 %v1821, %v1817
  %v2094 = vpack.c.b16 %v1826, %v1822
  %v2095 = vpack.c.b16 %v1827, %v1823
  %v2096 = vpack.c.b16 %v1828, %v1824
  %v2097 = vpack.c.b16 %v1829, %v1825
  %v2098 = vpack.c.b16 %v1834, %v1830
  %v2099 = vpack.c.b16 %v1835, %v1831
  %v2100 = vpack.c.b16 %v1836, %v1832
  %v2101 = vpack.c.b16 %v1837, %v1833
  %v2102 = vpack.c.b16 %v1842, %v1838
  %v2103 = vpack.c.b16 %v1843, %v1839
  %v2104 = vpack.c.b16 %v1844, %v1840
  %v2105 = vpack.c.b16 %v1845, %v1841
  %v2106 = vpack.c.b16 %v1850, %v1846
  %v2107 = vpack.c.b16 %v1851, %v1847
  %v2108 = vpack.c.b16 %v1852, %v1848
  %v2109 = vpack.c.b16 %v1853, %v1849
  %v2110 = vpack.c.b16 %v1858, %v1854
  %v2111 = vpack.c.b16 %v1859, %v1855
  %v2112 = vpack.c.b16 %v1860, %v1856
  %v2113 = vpack.c.b16 %v1861, %v1857
  %v2114 = vpack.c.b16 %v1866, %v1862
  %v2115 = vpack.c.b16 %v1867, %v1863
  %v2116 = vpack.c.b16 %v1868, %v1864
  %v2117 = vpack.c.b16 %v1869, %v1865
  %v2118 = vpack.c.b16 %v1874, %v1870
  %v2119 = vpack.c.b16 %v1875, %v1871
  %v2120 = vpack.c.b16 %v1876, %v1872
  %v2121 = vpack.c.b16 %v1877, %v1873
  %v2122 = vpack.c.b16 %v1882, %v1878
  %v2123 = vpack.c.b16 %v1883, %v1879
  %v2124 = vpack.c.b16 %v1884, %v1880
  %v2125 = vpack.c.b16 %v1885, %v1881
  %v2126 = vpack.c.b16 %v1890, %v1886
  %v2127 = vpack.c.b16 %v1891, %v1887
  %v2128 = vpack.c.b16 %v1892, %v1888
  %v2129 = vpack.c.b16 %v1893, %v1889
  %v2130 = vpack.c.b16 %v1898, %v1894
  %v2131 = vpack.c.b16 %v1899, %v1895
  %v2132 = vpack.c.b16 %v1900, %v1896
  %v2133 = vpack.c.b16 %v1901, %v1897
  %v2134 = vpack.c.b16 %v1906, %v1902
  %v2135 = vpack.c.b16 %v1907, %v1903
  %v2136 = vpack.c.b16 %v1908, %v1904
  %v2137 = vpack.c.b16 %v1909, %v1905
  %v2138 = vpack.c.b16 %v1914, %v1910
  %v2139 = vpack.c.b16 %v1915, %v1911
  %v2140 = vpack.c.b16 %v1916, %v1912
  %v2141 = vpack.c.b16 %v1917, %v1913
  %v2142 = vpack.c.b16 %v1922, %v1918
  %v2143 = vpack.c.b16 %v1923, %v1919
  %v2144 = vpack.c.b16 %v1924, %v1920
  %v2145 = vpack.c.b16 %v1925, %v1921
  %v2146 = vpack.c.b16 %v1930, %v1926
  %v2147 = vpack.c.b16 %v1931, %v1927
  %v2148 = vpack.c.b16 %v1932, %v1928
  %v2149 = vpack.c.b16 %v1933, %v1929
  %v2150 = vpack.c.b16 %v1938, %v1934
  %v2151 = vpack.c.b16 %v1939, %v1935
  %v2152 = vpack.c.b16 %v1940, %v1936
  %v2153 = vpack.c.b16 %v1941, %v1937
  %v2154 = vpack.c.b16 %v1946, %v1942
  %v2155 = vpack.c.b16 %v1947, %v1943
  %v2156 = vpack.c.b16 %v1948, %v1944
  %v2157 = vpack.c.b16 %v1949, %v1945
  %v2158 = vpack.c.b16 %v1954, %v1950
  %v2159 = vpack.c.b16 %v1955, %v1951
  %v2160 = vpack.c.b16 %v1956, %v1952
  %v2161 = vpack.c.b16 %v1957, %v1953
  %v2162 = vpack.c.b16 %v1962, %v1958
  %v2163 = vpack.c.b16 %v1963, %v1959
  %v2164 = vpack.c.b16 %v1964, %v1960
  %v2165 = vpack.c.b16 %v1965, %v1961
  %v2166 = vpack.c.b16 %v1970, %v1966
  %v2167 = vpack.c.b16 %v1971, %v1967
  %v2168 = vpack.c.b16 %v1972, %v1968
  %v2169 = vpack.c.b16 %v1973, %v1969
  %v2170 = vpack.c.b16 %v1978, %v1974
  %v2171 = vpack.c.b16 %v1979, %v1975
  %v2172 = vpack.c.b16 %v1980, %v1976
  %v2173 = vpack.c.b16 %v1981, %v1977
  %v2174 = vpack.c.b16 %v1986, %v1982
  %v2175 = vpack.c.b16 %v1987, %v1983
  %v2176 = vpack.c.b16 %v1988, %v1984
  %v2177 = vpack.c.b16 %v1989, %v1985
  %v2178 = vpack.c.b16 %v1994, %v1990
  %v2179 = vpack.c.b16 %v1995, %v1991
  %v2180 = vpack.c.b16 %v1996, %v1992
  %v2181 = vpack.c.b16 %v1997, %v1993
  %v2182 = vpack.c.b16 %v2002, %v1998
  %v2183 = vpack.c.b16 %v2003, %v1999
  %v2184 = vpack.c.b16 %v2004, %v2000
  %v2185 = vpack.c.b16 %v2005, %v2001
  %v2186 = vpack.c.b16 %v2010, %v2006
  %v2187 = vpack.c.b16 %v2011, %v2007
  %v2188 = vpack.c.b16 %v2012, %v2008
  %v2189 = vpack.c.b16 %v2013, %v2009
  %v2190 = vpack.c.b16 %v2018, %v2014
  %v2191 = vpack.c.b16 %v2019, %v2015
  %v2192 = vpack.c.b16 %v2020, %v2016
  %v2193 = vpack.c.b16 %v2021, %v2017
  %v2194 = vpack.c.b16 %v2026, %v2022
  %v2195 = vpack.c.b16 %v2027, %v2023
  %v2196 = vpack.c.b16 %v2028, %v2024
  %v2197 = vpack.c.b16 %v2029, %v2025
  %v2198 = vpack.c.b16 %v2034, %v2030
  %v2199 = vpack.c.b16 %v2035, %v2031
  %v2200 = vpack.c.b16 %v2036, %v2032
  %v2201 = vpack.c.b16 %v2037, %v2033
  %v2202 = vpack.c.b16 %v2042, %v2038
  %v2203 = vpack.c.b16 %v2043, %v2039
  %v2204 = vpack.c.b16 %v2044, %v2040
  %v2205 = vpack.c.b16 %v2045, %v2041
  %v2206 = vpack.c.b16 %v2050, %v2046
  %v2207 = vpack.c.b16 %v2051, %v2047
  %v2208 = vpack.c.b16 %v2052, %v2048
  %v2209 = vpack.c.b16 %v2053, %v2049
  %v2210 = vpack.c.b16 %v2058, %v2054
  %v2211 = vpack.c.b16 %v2059, %v2055
  %v2212 = vpack.c.b16 %v2060, %v2056
  %v2213 = vpack.c.b16 %v2061, %v2057
  %v2214 = vpack.c.b16 %v2062, %v2062
  %v2215 = vpack.c.b16 %v2063, %v2063
  %v2216 = vpack.c.b16 %v2064, %v2064
  %v2217 = vpack.c.b16 %v2065, %v2065
  %vm2366 = vcmask 719872
  %v2368 = vsel %vm2366, %v1443, 0
  %vm2370 = vcmask 1043456
  %v2372 = vsel %vm2370, %v2214, 0
  %v2375 = vsel %vm2370, %v2215, 0
  %v2378 = vsel %vm2370, %v2216, 0
  %v2381 = vsel %vm2370, %v2217, 0
  %2383 = vmatprep.subr.bf16.mxu0 %v2067
  %2384 = vmatpush1.bf16.msra.mxu0 %v2066
  %2385 = vmatprep.subr.bf16.mxu0 %v2071
  %2386 = vmatpush1.bf16.msra.mxu0 %v2070
  %2387 = vmatprep.subr.bf16.mxu0 %v2075
  %2388 = vmatpush1.bf16.msra.mxu0 %v2074
  %2389 = vmatprep.subr.bf16.mxu0 %v2079
  %2390 = vmatpush1.bf16.msra.mxu0 %v2078
  %2391 = vmatprep.subr.bf16.mxu0 %v2083
  %2392 = vmatpush1.bf16.msra.mxu0 %v2082
  %2393 = vmatprep.subr.bf16.mxu0 %v2087
  %2394 = vmatpush1.bf16.msra.mxu0 %v2086
  %2395 = vmatprep.subr.bf16.mxu0 %v2091
  %2396 = vmatpush1.bf16.msra.mxu0 %v2090
  %2397 = vmatprep.subr.bf16.mxu0 %v2095
  %2398 = vmatpush1.bf16.msra.mxu0 %v2094
  %2399 = vmatprep.subr.bf16.mxu0 %v2099
  %2400 = vmatpush1.bf16.msra.mxu0 %v2098
  %2401 = vmatprep.subr.bf16.mxu0 %v2103
  %2402 = vmatpush1.bf16.msra.mxu0 %v2102
  %2403 = vmatprep.subr.bf16.mxu0 %v2107
  %2404 = vmatpush1.bf16.msra.mxu0 %v2106
  %2405 = vmatprep.subr.bf16.mxu0 %v2111
  %2406 = vmatpush1.bf16.msra.mxu0 %v2110
  %2407 = vmatprep.subr.bf16.mxu0 %v2115
  %2408 = vmatpush1.bf16.msra.mxu0 %v2114
  %2409 = vmatprep.subr.bf16.mxu0 %v2119
  %2410 = vmatpush1.bf16.msra.mxu0 %v2118
  %2411 = vmatprep.subr.bf16.mxu0 %v2123
  %2412 = vmatpush1.bf16.msra.mxu0 %v2122
  %2413 = vmatprep.subr.bf16.mxu0 %v2127
  %2414 = vmatpush1.bf16.msra.mxu0 %v2126
  %2415 = vmatprep.mubr.bf16.mxu0 %v1440
  %2416 = vmatmul.mubr.bf16.gmra.mrb[0].mxu0 %v1439
  %v2417 = vpop.f32.mrb[0].mxu0
  %v2418 = vadd.f32 %v1599, %v2417
  %v2419 = vpop.f32.mrb[0].mxu0
  %v2420 = vadd.f32 %v1603, %v2419
  %v2421 = vpop.f32.mrb[0].mxu0
  %v2422 = vpop.f32.mrb[0].mxu0
  %2423 = vdwg.mxu0
  %2424 = vmatprep.subr.bf16.mxu0 %v2131
  %2425 = vmatpush1.bf16.msra.mxu0 %v2130
  %2426 = vmatprep.subr.bf16.mxu0 %v2135
  %2427 = vmatpush1.bf16.msra.mxu0 %v2134
  %2428 = vmatprep.subr.bf16.mxu0 %v2139
  %2429 = vmatpush1.bf16.msra.mxu0 %v2138
  %2430 = vmatprep.subr.bf16.mxu0 %v2143
  %2431 = vmatpush1.bf16.msra.mxu0 %v2142
  %2432 = vmatprep.subr.bf16.mxu0 %v2147
  %2433 = vmatpush1.bf16.msra.mxu0 %v2146
  %2434 = vmatprep.subr.bf16.mxu0 %v2151
  %2435 = vmatpush1.bf16.msra.mxu0 %v2150
  %2436 = vmatprep.subr.bf16.mxu0 %v2155
  %2437 = vmatpush1.bf16.msra.mxu0 %v2154
  %2438 = vmatprep.subr.bf16.mxu0 %v2159
  %2439 = vmatpush1.bf16.msra.mxu0 %v2158
  %2440 = vmatprep.subr.bf16.mxu0 %v2163
  %2441 = vmatpush1.bf16.msra.mxu0 %v2162
  %2442 = vmatprep.subr.bf16.mxu0 %v2167
  %2443 = vmatpush1.bf16.msra.mxu0 %v2166
  %2444 = vmatprep.subr.bf16.mxu0 %v2171
  %2445 = vmatpush1.bf16.msra.mxu0 %v2170
  %2446 = vmatprep.subr.bf16.mxu0 %v2175
  %2447 = vmatpush1.bf16.msra.mxu0 %v2174
  %2448 = vmatprep.subr.bf16.mxu0 %v2179
  %2449 = vmatpush1.bf16.msra.mxu0 %v2178
  %2450 = vmatprep.subr.bf16.mxu0 %v2183
  %2451 = vmatpush1.bf16.msra.mxu0 %v2182
  %2452 = vmatprep.subr.bf16.mxu0 %v2187
  %2453 = vmatpush1.bf16.msra.mxu0 %v2186
  %2454 = vmatprep.subr.bf16.mxu0 %v2191
  %2455 = vmatpush1.bf16.msra.mxu0 %v2190
  %2456 = vmatprep.mubr.bf16.mxu0 %v1442
  %2457 = vmatmul.mubr.bf16.gmra.mrb[0].mxu0 %v1441
  %v2458 = vpop.f32.mrb[0].mxu0
  %v2459 = vadd.f32 %v2418, %v2458
  %v2460 = vpop.f32.mrb[0].mxu0
  %v2461 = vadd.f32 %v2420, %v2460
  %v2462 = vpop.f32.mrb[0].mxu0
  %v2463 = vpop.f32.mrb[0].mxu0
  %2464 = vdwg.mxu0
  %2465 = vmatprep.subr.bf16.mxu0 %v2195
  %2466 = vmatpush1.bf16.msra.mxu0 %v2194
  %2467 = vmatprep.subr.bf16.mxu0 %v2199
  %2468 = vmatpush1.bf16.msra.mxu0 %v2198
  %2469 = vmatprep.subr.bf16.mxu0 %v2203
  %2470 = vmatpush1.bf16.msra.mxu0 %v2202
  %2471 = vmatprep.subr.bf16.mxu0 %v2207
  %2472 = vmatpush1.bf16.msra.mxu0 %v2206
  %2473 = vmatprep.subr.bf16.mxu0 %v2211
  %2474 = vmatpush1.bf16.msra.mxu0 %v2210
  %2475 = vmatprep.subr.bf16.mxu0 %v2375
  %2476 = vmatpush1.bf16.msra.mxu0 %v2372
  %2477 = vmatprep.subr.bf16.mxu0 0
  %2478 = vmatpush1.bf16.msra.mxu0 0
  %2479 = vmatprep.subr.bf16.mxu0 0
  %2480 = vmatpush1.bf16.msra.mxu0 0
  %2481 = vmatprep.subr.bf16.mxu0 0
  %2482 = vmatpush1.bf16.msra.mxu0 0
  %2483 = vmatprep.subr.bf16.mxu0 0
  %2484 = vmatpush1.bf16.msra.mxu0 0
  %2485 = vmatprep.subr.bf16.mxu0 0
  %2486 = vmatpush1.bf16.msra.mxu0 0
  %2487 = vmatprep.subr.bf16.mxu0 0
  %2488 = vmatpush1.bf16.msra.mxu0 0
  %2489 = vmatprep.subr.bf16.mxu0 0
  %2490 = vmatpush1.bf16.msra.mxu0 0
  %2491 = vmatprep.subr.bf16.mxu0 0
  %2492 = vmatpush1.bf16.msra.mxu0 0
  %2493 = vmatprep.subr.bf16.mxu0 0
  %2494 = vmatpush1.bf16.msra.mxu0 0
  %2495 = vmatprep.subr.bf16.mxu0 0
  %2496 = vmatpush1.bf16.msra.mxu0 0
  %2497 = vmatprep.mubr.bf16.mxu0 0
  %2498 = vmatmul.mubr.bf16.gmra.mrb[0].mxu0 %v2368
  %v2499 = vpop.f32.mrb[0].mxu0
  %v2500 = vadd.f32 %v2459, %v2499
  %v2501 = vpop.f32.mrb[0].mxu0
  %v2502 = vadd.f32 %v2461, %v2501
  %v2503 = vpop.f32.mrb[0].mxu0
  %v2504 = vpop.f32.mrb[0].mxu0
  %2505 = vdwg.mxu0
  %2506 = vmatprep.subr.bf16.mxu0 %v2069
  %2507 = vmatpush1.bf16.msra.mxu0 %v2068
  %2508 = vmatprep.subr.bf16.mxu0 %v2073
  %2509 = vmatpush1.bf16.msra.mxu0 %v2072
  %2510 = vmatprep.subr.bf16.mxu0 %v2077
  %2511 = vmatpush1.bf16.msra.mxu0 %v2076
  %2512 = vmatprep.subr.bf16.mxu0 %v2081
  %2513 = vmatpush1.bf16.msra.mxu0 %v2080
  %2514 = vmatprep.subr.bf16.mxu0 %v2085
  %2515 = vmatpush1.bf16.msra.mxu0 %v2084
  %2516 = vmatprep.subr.bf16.mxu0 %v2089
  %2517 = vmatpush1.bf16.msra.mxu0 %v2088
  %2518 = vmatprep.subr.bf16.mxu0 %v2093
  %2519 = vmatpush1.bf16.msra.mxu0 %v2092
  %2520 = vmatprep.subr.bf16.mxu0 %v2097
  %2521 = vmatpush1.bf16.msra.mxu0 %v2096
  %2522 = vmatprep.subr.bf16.mxu0 %v2101
  %2523 = vmatpush1.bf16.msra.mxu0 %v2100
  %2524 = vmatprep.subr.bf16.mxu0 %v2105
  %2525 = vmatpush1.bf16.msra.mxu0 %v2104
  %2526 = vmatprep.subr.bf16.mxu0 %v2109
  %2527 = vmatpush1.bf16.msra.mxu0 %v2108
  %2528 = vmatprep.subr.bf16.mxu0 %v2113
  %2529 = vmatpush1.bf16.msra.mxu0 %v2112
  %2530 = vmatprep.subr.bf16.mxu0 %v2117
  %2531 = vmatpush1.bf16.msra.mxu0 %v2116
  %2532 = vmatprep.subr.bf16.mxu0 %v2121
  %2533 = vmatpush1.bf16.msra.mxu0 %v2120
  %2534 = vmatprep.subr.bf16.mxu0 %v2125
  %2535 = vmatpush1.bf16.msra.mxu0 %v2124
  %2536 = vmatprep.subr.bf16.mxu0 %v2129
  %2537 = vmatpush1.bf16.msra.mxu0 %v2128
  %2538 = vmatprep.mubr.bf16.mxu0 %v1440
  %2539 = vmatmul.mubr.bf16.gmra.mrb[0].mxu0 %v1439
  %v2540 = vpop.f32.mrb[0].mxu0
  %v2541 = vadd.f32 %v1607, %v2540
  %v2542 = vpop.f32.mrb[0].mxu0
  %v2543 = vadd.f32 %v1611, %v2542
  %v2544 = vpop.f32.mrb[0].mxu0
  %v2545 = vpop.f32.mrb[0].mxu0
  %2546 = vdwg.mxu0
  %2547 = vmatprep.subr.bf16.mxu0 %v2133
  %2548 = vmatpush1.bf16.msra.mxu0 %v2132
  %2549 = vmatprep.subr.bf16.mxu0 %v2137
  %2550 = vmatpush1.bf16.msra.mxu0 %v2136
  %2551 = vmatprep.subr.bf16.mxu0 %v2141
  %2552 = vmatpush1.bf16.msra.mxu0 %v2140
  %2553 = vmatprep.subr.bf16.mxu0 %v2145
  %2554 = vmatpush1.bf16.msra.mxu0 %v2144
  %2555 = vmatprep.subr.bf16.mxu0 %v2149
  %2556 = vmatpush1.bf16.msra.mxu0 %v2148
  %2557 = vmatprep.subr.bf16.mxu0 %v2153
  %2558 = vmatpush1.bf16.msra.mxu0 %v2152
  %2559 = vmatprep.subr.bf16.mxu0 %v2157
  %2560 = vmatpush1.bf16.msra.mxu0 %v2156
  %2561 = vmatprep.subr.bf16.mxu0 %v2161
  %2562 = vmatpush1.bf16.msra.mxu0 %v2160
  %2563 = vmatprep.subr.bf16.mxu0 %v2165
  %2564 = vmatpush1.bf16.msra.mxu0 %v2164
  %2565 = vmatprep.subr.bf16.mxu0 %v2169
  %2566 = vmatpush1.bf16.msra.mxu0 %v2168
  %2567 = vmatprep.subr.bf16.mxu0 %v2173
  %2568 = vmatpush1.bf16.msra.mxu0 %v2172
  %2569 = vmatprep.subr.bf16.mxu0 %v2177
  %2570 = vmatpush1.bf16.msra.mxu0 %v2176
  %2571 = vmatprep.subr.bf16.mxu0 %v2181
  %2572 = vmatpush1.bf16.msra.mxu0 %v2180
  %2573 = vmatprep.subr.bf16.mxu0 %v2185
  %2574 = vmatpush1.bf16.msra.mxu0 %v2184
  %2575 = vmatprep.subr.bf16.mxu0 %v2189
  %2576 = vmatpush1.bf16.msra.mxu0 %v2188
  %2577 = vmatprep.subr.bf16.mxu0 %v2193
  %2578 = vmatpush1.bf16.msra.mxu0 %v2192
  %2579 = vmatprep.mubr.bf16.mxu0 %v1442
  %2580 = vmatmul.mubr.bf16.gmra.mrb[0].mxu0 %v1441
  %v2581 = vpop.f32.mrb[0].mxu0
  %v2582 = vadd.f32 %v2541, %v2581
  %v2583 = vpop.f32.mrb[0].mxu0
  %v2584 = vadd.f32 %v2543, %v2583
  %v2585 = vpop.f32.mrb[0].mxu0
  %v2586 = vpop.f32.mrb[0].mxu0
  %2587 = vdwg.mxu0
  %2588 = vmatprep.subr.bf16.mxu0 %v2197
  %2589 = vmatpush1.bf16.msra.mxu0 %v2196
  %2590 = vmatprep.subr.bf16.mxu0 %v2201
  %2591 = vmatpush1.bf16.msra.mxu0 %v2200
  %2592 = vmatprep.subr.bf16.mxu0 %v2205
  %2593 = vmatpush1.bf16.msra.mxu0 %v2204
  %2594 = vmatprep.subr.bf16.mxu0 %v2209
  %2595 = vmatpush1.bf16.msra.mxu0 %v2208
  %2596 = vmatprep.subr.bf16.mxu0 %v2213
  %2597 = vmatpush1.bf16.msra.mxu0 %v2212
  %2598 = vmatprep.subr.bf16.mxu0 %v2381
  %2599 = vmatpush1.bf16.msra.mxu0 %v2378
  %2600 = vmatprep.subr.bf16.mxu0 0
  %2601 = vmatpush1.bf16.msra.mxu0 0
  %2602 = vmatprep.subr.bf16.mxu0 0
  %2603 = vmatpush1.bf16.msra.mxu0 0
  %2604 = vmatprep.subr.bf16.mxu0 0
  %2605 = vmatpush1.bf16.msra.mxu0 0
  %2606 = vmatprep.subr.bf16.mxu0 0
  %2607 = vmatpush1.bf16.msra.mxu0 0
  %2608 = vmatprep.subr.bf16.mxu0 0
  %2609 = vmatpush1.bf16.msra.mxu0 0
  %2610 = vmatprep.subr.bf16.mxu0 0
  %2611 = vmatpush1.bf16.msra.mxu0 0
  %2612 = vmatprep.subr.bf16.mxu0 0
  %2613 = vmatpush1.bf16.msra.mxu0 0
  %2614 = vmatprep.subr.bf16.mxu0 0
  %2615 = vmatpush1.bf16.msra.mxu0 0
  %2616 = vmatprep.subr.bf16.mxu0 0
  %2617 = vmatpush1.bf16.msra.mxu0 0
  %2618 = vmatprep.subr.bf16.mxu0 0
  %2619 = vmatpush1.bf16.msra.mxu0 0
  %2620 = vmatprep.mubr.bf16.mxu0 0
  %2621 = vmatmul.mubr.bf16.gmra.mrb[0].mxu0 %v2368
  %v2622 = vpop.f32.mrb[0].mxu0
  %v2623 = vadd.f32 %v2582, %v2622
  %v2624 = vpop.f32.mrb[0].mxu0
  %v2625 = vadd.f32 %v2584, %v2624
  %v2626 = vpop.f32.mrb[0].mxu0
  %v2627 = vpop.f32.mrb[0].mxu0
  %2628 = vdwg.mxu0
  %v2629 = vmax.f32 %v2500, 0.0
  %v2630 = vmax.f32 %v2502, 0.0
  %v2631 = vmax.f32 %v2623, 0.0
  %v2632 = vmax.f32 %v2625, 0.0
  %v2633 = vpack.c.bf16 %v2629, %v2629
  %v2634 = vpack.c.bf16 %v2630, %v2630
  %v2635 = vpack.c.bf16 %v2631, %v2631
  %v2636 = vpack.c.bf16 %v2632, %v2632
  %v2637 = vld [vmem:[%s6] sm:$0xf]
  %v2638 = vld [vmem:[%s6 + $0x4] sm:$0xf]
  %v2639 = vld [vmem:[%s6 + $0x8] sm:$0xf]
  %v2640 = vld [vmem:[%s6 + $0xc] sm:$0xf]
  %v2641 = vld [vmem:[%s6 + $0x10] sm:$0xf]
  %v2642 = vld [vmem:[%s6 + $0x14] sm:$0xf]
  %v2643 = vld [vmem:[%s6 + $0x18] sm:$0xf]
  %v2644 = vld [vmem:[%s6 + $0x1c] sm:$0xf]
  %v2645 = vld [vmem:[%s6 + $0x20] sm:$0xf]
  %v2646 = vld [vmem:[%s6 + $0x24] sm:$0xf]
  %v2647 = vld [vmem:[%s6 + $0x28] sm:$0xf]
  %v2648 = vld [vmem:[%s6 + $0x2c] sm:$0xf]
  %v2649 = vld [vmem:[%s6 + $0x30] sm:$0xf]
  %v2650 = vld [vmem:[%s6 + $0x34] sm:$0xf]
  %v2651 = vld [vmem:[%s6 + $0x38] sm:$0xf]
  %v2652 = vld [vmem:[%s6 + $0x3c] sm:$0xf]
  %v2653 = vld [vmem:[%s6 + $0x40] sm:$0xf]
  %v2654 = vld [vmem:[%s6 + $0x44] sm:$0xf]
  %v2655 = vld [vmem:[%s6 + $0x48] sm:$0xf]
  %v2656 = vld [vmem:[%s6 + $0x4c] sm:$0xf]
  %v2657 = vld [vmem:[%s6 + $0x50] sm:$0xf]
  %v2658 = vld [vmem:[%s6 + $0x54] sm:$0xf]
  %v2659 = vld [vmem:[%s6 + $0x58] sm:$0xf]
  %v2660 = vld [vmem:[%s6 + $0x5c] sm:$0xf]
  %v2661 = vld [vmem:[%s6 + $0x60] sm:$0xf]
  %v2662 = vld [vmem:[%s6 + $0x64] sm:$0xf]
  %v2663 = vld [vmem:[%s6 + $0x68] sm:$0xf]
  %v2664 = vld [vmem:[%s6 + $0x6c] sm:$0xf]
  %v2665 = vld [vmem:[%s6 + $0x70] sm:$0xf]
  %v2666 = vld [vmem:[%s6 + $0x74] sm:$0xf]
  %v2667 = vld [vmem:[%s6 + $0x78] sm:$0xf]
  %v2668 = vld [vmem:[%s6 + $0x7c] sm:$0xf]
  %v2669 = vld [vmem:[%s6 + $0x80] sm:$0xf]
  %v2670 = vld [vmem:[%s6 + $0x84] sm:$0xf]
  %v2671 = vld [vmem:[%s6 + $0x88] sm:$0xf]
  %v2672 = vld [vmem:[%s6 + $0x8c] sm:$0xf]
  %v2673 = vld [vmem:[%s6 + $0x90] sm:$0xf]
  %v2674 = vld [vmem:[%s6 + $0x94] sm:$0xf]
  %v2675 = vld [vmem:[%s6 + $0x98] sm:$0xf]
  %v2676 = vld [vmem:[%s6 + $0x9c] sm:$0xf]
  %v2677 = vld [vmem:[%s6 + $0xa0] sm:$0xf]
  %v2678 = vld [vmem:[%s6 + $0xa4] sm:$0xf]
  %v2679 = vld [vmem:[%s6 + $0xa8] sm:$0xf]
  %v2680 = vld [vmem:[%s6 + $0xac] sm:$0xf]
  %v2681 = vld [vmem:[%s6 + $0xb0] sm:$0xf]
  %v2682 = vld [vmem:[%s6 + $0xb4] sm:$0xf]
  %v2683 = vld [vmem:[%s6 + $0xb8] sm:$0xf]
  %v2684 = vld [vmem:[%s6 + $0xbc] sm:$0xf]
  %v2685 = vld [vmem:[%s6 + $0xc0] sm:$0xf]
  %v2686 = vld [vmem:[%s6 + $0xc4] sm:$0xf]
  %v2687 = vld [vmem:[%s6 + $0xc8] sm:$0xf]
  %v2688 = vld [vmem:[%s6 + $0xcc] sm:$0xf]
  %v2689 = vld [vmem:[%s6 + $0xd0] sm:$0x3]
  %v2690 = vld [vmem:[%s7] sm:$0x1]
  %v2692 = vlaneseq
  %v2693 = vshrl.u32 %v2692, 7
  %v2694 = vsub.s32 0, %v2693
  %v2695 = vrot.slane %v2690, %v2694
  %v2750 = vunpack.c.l.b16 %v2637
  %v2751 = vunpack.c.l.b16 %v2638
  %v2752 = vunpack.c.l.b16 %v2639
  %v2753 = vunpack.c.l.b16 %v2640
  %v2754 = vunpack.c.l.b16 %v2641
  %v2755 = vunpack.c.l.b16 %v2642
  %v2756 = vunpack.c.l.b16 %v2643
  %v2757 = vunpack.c.l.b16 %v2644
  %v2758 = vunpack.c.l.b16 %v2645
  %v2759 = vunpack.c.l.b16 %v2646
  %v2760 = vunpack.c.l.b16 %v2647
  %v2761 = vunpack.c.l.b16 %v2648
  %v2762 = vunpack.c.l.b16 %v2649
  %v2763 = vunpack.c.l.b16 %v2650
  %v2764 = vunpack.c.l.b16 %v2651
  %v2765 = vunpack.c.l.b16 %v2652
  %v2766 = vunpack.c.l.b16 %v2653
  %v2767 = vunpack.c.l.b16 %v2654
  %v2768 = vunpack.c.l.b16 %v2655
  %v2769 = vunpack.c.l.b16 %v2656
  %v2770 = vunpack.c.l.b16 %v2657
  %v2771 = vunpack.c.l.b16 %v2658
  %v2772 = vunpack.c.l.b16 %v2659
  %v2773 = vunpack.c.l.b16 %v2660
  %v2774 = vunpack.c.l.b16 %v2661
  %v2775 = vunpack.c.l.b16 %v2662
  %v2776 = vunpack.c.l.b16 %v2663
  %v2777 = vunpack.c.l.b16 %v2664
  %v2778 = vunpack.c.l.b16 %v2665
  %v2779 = vunpack.c.l.b16 %v2666
  %v2780 = vunpack.c.l.b16 %v2667
  %v2781 = vunpack.c.l.b16 %v2668
  %v2782 = vunpack.c.l.b16 %v2669
  %v2783 = vunpack.c.l.b16 %v2670
  %v2784 = vunpack.c.l.b16 %v2671
  %v2785 = vunpack.c.l.b16 %v2672
  %v2786 = vunpack.c.l.b16 %v2673
  %v2787 = vunpack.c.l.b16 %v2674
  %v2788 = vunpack.c.l.b16 %v2675
  %v2789 = vunpack.c.l.b16 %v2676
  %v2790 = vunpack.c.l.b16 %v2677
  %v2791 = vunpack.c.l.b16 %v2678
  %v2792 = vunpack.c.l.b16 %v2679
  %v2793 = vunpack.c.l.b16 %v2680
  %v2794 = vunpack.c.l.b16 %v2681
  %v2795 = vunpack.c.l.b16 %v2682
  %v2796 = vunpack.c.l.b16 %v2683
  %v2797 = vunpack.c.l.b16 %v2684
  %v2798 = vunpack.c.l.b16 %v2685
  %v2799 = vunpack.c.l.b16 %v2686
  %v2800 = vunpack.c.l.b16 %v2687
  %v2801 = vunpack.c.l.b16 %v2688
  %v2802 = vunpack.c.l.b16 %v2689
  %v2803 = vpack.c.b16 %v2751, %v2750
  %v2804 = vpack.c.b16 %v2753, %v2752
  %v2805 = vpack.c.b16 %v2755, %v2754
  %v2806 = vpack.c.b16 %v2757, %v2756
  %v2807 = vpack.c.b16 %v2759, %v2758
  %v2808 = vpack.c.b16 %v2761, %v2760
  %v2809 = vpack.c.b16 %v2763, %v2762
  %v2810 = vpack.c.b16 %v2765, %v2764
  %v2811 = vpack.c.b16 %v2767, %v2766
  %v2812 = vpack.c.b16 %v2769, %v2768
  %v2813 = vpack.c.b16 %v2771, %v2770
  %v2814 = vpack.c.b16 %v2773, %v2772
  %v2815 = vpack.c.b16 %v2775, %v2774
  %v2816 = vpack.c.b16 %v2777, %v2776
  %v2817 = vpack.c.b16 %v2779, %v2778
  %v2818 = vpack.c.b16 %v2781, %v2780
  %v2819 = vpack.c.b16 %v2783, %v2782
  %v2820 = vpack.c.b16 %v2785, %v2784
  %v2821 = vpack.c.b16 %v2787, %v2786
  %v2822 = vpack.c.b16 %v2789, %v2788
  %v2823 = vpack.c.b16 %v2791, %v2790
  %v2824 = vpack.c.b16 %v2793, %v2792
  %v2825 = vpack.c.b16 %v2795, %v2794
  %v2826 = vpack.c.b16 %v2797, %v2796
  %v2827 = vpack.c.b16 %v2799, %v2798
  %v2828 = vpack.c.b16 %v2801, %v2800
  %v2829 = vpack.c.b16 %v2802, %v2802
  %vm2856 = vcmask 293888
  %v2858 = vsel %vm2856, %v2636, 0
  %vm2860 = vcmask 1041408
  %v2862 = vsel %vm2860, %v2829, 0
  %2864 = vmatprep.subr.bf16.mxu0 0
  %2865 = vmatpush1.bf16.msra.mxu0 %v2803
  %2866 = vmatprep.subr.bf16.mxu0 0
  %2867 = vmatpush1.bf16.msra.mxu0 %v2804
  %2868 = vmatprep.subr.bf16.mxu0 0
  %2869 = vmatpush1.bf16.msra.mxu0 %v2805
  %2870 = vmatprep.subr.bf16.mxu0 0
  %2871 = vmatpush1.bf16.msra.mxu0 %v2806
  %2872 = vmatprep.subr.bf16.mxu0 0
  %2873 = vmatpush1.bf16.msra.mxu0 %v2807
  %2874 = vmatprep.subr.bf16.mxu0 0
  %2875 = vmatpush1.bf16.msra.mxu0 %v2808
  %2876 = vmatprep.subr.bf16.mxu0 0
  %2877 = vmatpush1.bf16.msra.mxu0 %v2809
  %2878 = vmatprep.subr.bf16.mxu0 0
  %2879 = vmatpush1.bf16.msra.mxu0 %v2810
  %2880 = vmatprep.subr.bf16.mxu0 0
  %2881 = vmatpush1.bf16.msra.mxu0 %v2811
  %2882 = vmatprep.subr.bf16.mxu0 0
  %2883 = vmatpush1.bf16.msra.mxu0 %v2812
  %2884 = vmatprep.subr.bf16.mxu0 0
  %2885 = vmatpush1.bf16.msra.mxu0 %v2813
  %2886 = vmatprep.subr.bf16.mxu0 0
  %2887 = vmatpush1.bf16.msra.mxu0 %v2814
  %2888 = vmatprep.subr.bf16.mxu0 0
  %2889 = vmatpush1.bf16.msra.mxu0 %v2815
  %2890 = vmatprep.subr.bf16.mxu0 0
  %2891 = vmatpush1.bf16.msra.mxu0 %v2816
  %2892 = vmatprep.subr.bf16.mxu0 0
  %2893 = vmatpush1.bf16.msra.mxu0 %v2817
  %2894 = vmatprep.subr.bf16.mxu0 0
  %2895 = vmatpush1.bf16.msra.mxu0 %v2818
  %2896 = vmatprep.mubr.bf16.mxu0 %v2634
  %2897 = vmatmul.mubr.bf16.gmra.mrb[0].mxu0 %v2633
  %v2898 = vpop.f32.mrb[0].mxu0
  %v2899 = vadd.f32 %v2695, %v2898
  %v2900 = vpop.f32.mrb[0].mxu0
  %v2901 = vpop.f32.mrb[0].mxu0
  %v2902 = vpop.f32.mrb[0].mxu0
  %2903 = vdwg.mxu0
  %2904 = vmatprep.subr.bf16.mxu0 0
  %2905 = vmatpush1.bf16.msra.mxu0 %v2819
  %2906 = vmatprep.subr.bf16.mxu0 0
  %2907 = vmatpush1.bf16.msra.mxu0 %v2820
  %2908 = vmatprep.subr.bf16.mxu0 0
  %2909 = vmatpush1.bf16.msra.mxu0 %v2821
  %2910 = vmatprep.subr.bf16.mxu0 0
  %2911 = vmatpush1.bf16.msra.mxu0 %v2822
  %2912 = vmatprep.subr.bf16.mxu0 0
  %2913 = vmatpush1.bf16.msra.mxu0 %v2823
  %2914 = vmatprep.subr.bf16.mxu0 0
  %2915 = vmatpush1.bf16.msra.mxu0 %v2824
  %2916 = vmatprep.subr.bf16.mxu0 0
  %2917 = vmatpush1.bf16.msra.mxu0 %v2825
  %2918 = vmatprep.subr.bf16.mxu0 0
  %2919 = vmatpush1.bf16.msra.mxu0 %v2826
  %2920 = vmatprep.subr.bf16.mxu0 0
  %2921 = vmatpush1.bf16.msra.mxu0 %v2827
  %2922 = vmatprep.subr.bf16.mxu0 0
  %2923 = vmatpush1.bf16.msra.mxu0 %v2828
  %2924 = vmatprep.subr.bf16.mxu0 0
  %2925 = vmatpush1.bf16.msra.mxu0 %v2862
  %2926 = vmatprep.subr.bf16.mxu0 0
  %2927 = vmatpush1.bf16.msra.mxu0 0
  %2928 = vmatprep.subr.bf16.mxu0 0
  %2929 = vmatpush1.bf16.msra.mxu0 0
  %2930 = vmatprep.subr.bf16.mxu0 0
  %2931 = vmatpush1.bf16.msra.mxu0 0
  %2932 = vmatprep.subr.bf16.mxu0 0
  %2933 = vmatpush1.bf16.msra.mxu0 0
  %2934 = vmatprep.subr.bf16.mxu0 0
  %2935 = vmatpush1.bf16.msra.mxu0 0
  %2936 = vmatprep.mubr.bf16.mxu0 %v2858
  %2937 = vmatmul.mubr.bf16.gmra.mrb[0].mxu0 %v2635
  %v2938 = vpop.f32.mrb[0].mxu0
  %v2939 = vadd.f32 %v2899, %v2938
  %v2940 = vpop.f32.mrb[0].mxu0
  %v2941 = vpop.f32.mrb[0].mxu0
  %v2942 = vpop.f32.mrb[0].mxu0
  %2943 = vdwg.mxu0
  %2944 = vst [vmem:[%s8] sm:$0x3] %v2939
  // Predicated region
  $region34: #{lenet5_ours_forward.3} parent=0 // pred_check
    _
  $region35: #{lenet5_ours_forward.3} parent=0 // pred_check_branch
    %2946 = sbr.rel (0) target = $region37
  $region36: #{lenet5_ours_forward.3} parent=0 // pred_region
    _
  $region37: #{lenet5_ours_forward.3} parent=0 // pred_fallthru
    _
  // Predicated region
  $region38: #{lenet5_ours_forward.3} parent=0 // pred_check
    _
  $region39: #{lenet5_ours_forward.3} parent=0 // pred_check_branch
    %2948 = sbr.rel (0) target = $region41
  $region40: #{lenet5_ours_forward.3} parent=0 // pred_region
    _
  $region41: #{lenet5_ours_forward.3} parent=0 // pred_fallthru
    _

</llo_original>
